<compile_context>
chip_gen: v7x
topology: tpu7x:2x2x1
jax: 0.10.0
libtpu: 0.0.40
codegen_flags: <defaults>
</compile_context>

<pallas_src>
import numpy as np
import jax
import jax.numpy as jnp
from jax.experimental import pallas as pl
from jax.experimental.pallas import tpu as pltpu


# ----------------------------- helpers (host side) -----------------------------

def adaptive_bounds(in_size, out_size, idx):
    """PyTorch AdaptiveMaxPool2d window bounds."""
    start = (idx * in_size) // out_size
    end = ((idx + 1) * in_size + out_size - 1) // out_size  # ceil
    return start, end


def build_interp_matrix(out_size, in_size):
    """1-D bilinear interpolation matrix, align_corners=True (out_size x in_size).
    Rows sum to 1 (required for the bias folding below)."""
    A = np.zeros((out_size, in_size), dtype=np.float64)
    if in_size == 1:
        A[:, 0] = 1.0
        return A
    scale = (in_size - 1) / (out_size - 1)
    for o in range(out_size):
        s = o * scale
        i0 = min(int(np.floor(s)), in_size - 1)
        i1 = min(i0 + 1, in_size - 1)
        w = s - i0
        A[o, i0] += 1.0 - w
        A[o, i1] += w
    return A


def fold_params(params, pool_sizes, H, W):
    """Host-side precompute: fold the final 1x1 conv into the branch convs,
    fold all biases, and build one concatenated transposed interp matrix."""
    n = len(pool_sizes)
    Wf = np.asarray(params["final_w"], np.float64)           # (n*C_out + C_in, C_out)
    C_out = Wf.shape[1]

    # folded branch weights, stacked: (n*C_in, C_out)
    W_big = np.concatenate(
        [np.asarray(params["branch_w"][s], np.float64) @ Wf[s * C_out:(s + 1) * C_out]
         for s in range(n)], axis=0)

    # skip/identity slice of the final conv, transposed: (C_out, C_in)
    Wx_T = Wf[n * C_out:, :].T

    # folded bias (valid because interp rows sum to 1): (C_out,)
    b_total = np.asarray(params["final_b"], np.float64).reshape(-1).copy()
    for s in range(n):
        b_total = b_total + (np.asarray(params["branch_b"][s], np.float64).reshape(-1)
                             @ Wf[s * C_out:(s + 1) * C_out])

    # concatenated transposed interpolation matrix: (P, H*W)
    # local row index inside branch s is j*ps + i (W-cell major), matching the
    # order the kernel builds pooled cells.
    blocks = []
    for ps in pool_sizes:
        A_h = build_interp_matrix(H, ps)                      # (H, ps) indexed [y, i]
        A_w = build_interp_matrix(W, ps)                      # (W, ps) indexed [x, j]
        T = np.einsum('xj,yi->jiyx', A_w, A_h)                # [j, i, y, x]
        blocks.append(T.reshape(ps * ps, H * W))
    M_T = np.concatenate(blocks, axis=0)

    aff = np.stack([b_total,
                    np.asarray(params["gamma"], np.float64).reshape(-1),
                    np.asarray(params["beta"], np.float64).reshape(-1)],
                   axis=1)                                    # (C_out, 3)

    return (jnp.asarray(M_T, jnp.float32),
            jnp.asarray(W_big, jnp.float32),
            jnp.asarray(Wx_T, jnp.float32),
            jnp.asarray(aff, jnp.float32))


# ----------------------------- fused Pallas kernel ------------------------------

def make_fused_ppmhead_kernel(pool_sizes, B, H, W, C_in, C_out):
    P = sum(ps * ps for ps in pool_sizes)

    def kernel(xs_ref, xf_ref, mT_ref, wbig_ref, wxT_ref, aff_ref, out_ref):
        # Invariant loads hoisted out of the (unrolled) batch loop.
        aff = aff_ref[...]                  # (C_out, 3): [folded bias, gamma, beta]
        bias = aff[:, 0:1]                  # (C_out, 1)
        mT = mT_ref[...]                    # (P, H*W)
        wbig = wbig_ref[...]                # (n*C_in, C_out)
        wxT = wxT_ref[...]                  # (C_out, C_in)

        ys = []
        for b in range(B):                  # B is tiny; unrolled batch loop
            x3 = xs_ref[b]                  # (C_in, H, W)  native NCHW view

            # ---- separable adaptive max pooling + folded branch 1x1 convs ----
            c_parts = []
            for s, ps in enumerate(pool_sizes):
                rows = []
                for i in range(ps):
                    h0, h1 = adaptive_bounds(H, ps, i)
                    rows.append(jnp.max(x3[:, h0:h1, :], axis=1))     # (C_in, W)
                R = jnp.stack(rows, axis=0)                            # (ps, C_in, W)
                cols = []
                for j in range(ps):
                    w0, w1 = adaptive_bounds(W, ps, j)
                    cols.append(jnp.max(R[:, :, w0:w1], axis=2))       # (ps, C_in)
                pooled_s = jnp.concatenate(cols, axis=0)                # (ps*ps, C_in)
                # folded (branch conv o final conv) 1x1, per branch
                c_parts.append(
                    jnp.dot(pooled_s, wbig[s * C_in:(s + 1) * C_in, :],
                            preferred_element_type=jnp.float32))       # (ps*ps, C_out)
            c_all = jnp.concatenate(c_parts, axis=0)                    # (P, C_out)

            # ---- all bilinear upsamples in ONE matmul, computed transposed so
            #      the result is lane-dense (C_out, H*W) ----
            u_t = jnp.dot(c_all.T, mT,
                          preferred_element_type=jnp.float32)           # (C_out, H*W)

            # ---- identity/skip slice of the final 1x1 conv ----
            d_t = jnp.dot(wxT, xf_ref[b],
                          preferred_element_type=jnp.float32)           # (C_out, H*W)

            ys.append(u_t + d_t + bias)

        y = jnp.stack(ys, axis=0)                                       # (B, C_out, HW)

        # ---- fused BatchNorm2d (training-mode batch stats, biased var) + ReLU ----
        mean = jnp.mean(y, axis=(0, 2), keepdims=True)                  # (1, C_out, 1)
        var = jnp.mean(y * y, axis=(0, 2), keepdims=True) - mean * mean
        gamma = aff[:, 1:2][None]                                       # (1, C_out, 1)
        beta = aff[:, 2:3][None]
        norm = (y - mean) * jax.lax.rsqrt(var + 1e-5)
        out_ref[...] = jnp.maximum(norm * gamma + beta, 0.0)            # lane-dense store

    return kernel, P


# ----------------------------- wrapper ------------------------------------------

def ppmhead_forward(x_nchw, params, pool_sizes):
    B, C_in, H, W = x_nchw.shape
    C_out = params["final_w"].shape[1]

    M_T, W_big, Wx_T, aff = fold_params(params, pool_sizes, H, W)
    kernel, P = make_fused_ppmhead_kernel(pool_sizes, B, H, W, C_in, C_out)

    x32 = x_nchw.astype(jnp.float32)
    x_spatial = x32                                # (B, C_in, H, W)   native layout
    x_flat = x32.reshape(B, C_in, H * W)           # lane-dense view for the skip matmul

    vmem = pl.BlockSpec(memory_space=pltpu.MemorySpace.VMEM)
    y_flat = pl.pallas_call(
        kernel,
        out_shape=jax.ShapeDtypeStruct((B, C_out, H * W), jnp.float32),
        in_specs=[vmem] * 6,
        out_specs=vmem,
    )(x_spatial, x_flat, M_T, W_big, Wx_T, aff)

    return y_flat.reshape(B, C_out, H, W)          # free reshape back to NCHW


# ----------------------------- parameter init ------------------------------------

def init_params(key, C_in, C_out, pool_sizes):
    n = len(pool_sizes)
    keys = jax.random.split(key, 2 * n + 2)
    branch_w, branch_b = [], []
    for s in range(n):
        branch_w.append(0.2 * jax.random.normal(keys[2 * s], (C_in, C_out), jnp.float32))
        branch_b.append(0.1 * jax.random.normal(keys[2 * s + 1], (1, C_out), jnp.float32))
    C_total = n * C_out + C_in
    final_w = 0.2 * jax.random.normal(keys[2 * n], (C_total, C_out), jnp.float32)
    final_b = 0.1 * jax.random.normal(keys[2 * n + 1], (1, C_out), jnp.float32)
    return {
        "branch_w": branch_w,
        "branch_b": branch_b,
        "final_w": final_w,
        "final_b": final_b,
        "gamma": jnp.ones((1, C_out), jnp.float32),   # BatchNorm default init
        "beta": jnp.zeros((1, C_out), jnp.float32),
    }


# ----------------------------- numpy reference ------------------------------------

def reference_forward(x_nchw, params, pool_sizes):
    x = np.asarray(x_nchw, dtype=np.float64)
    B, C_in, H, W = x.shape
    C_out = params["final_w"].shape[1]

    def bilinear(src, H, W):
        Bc, Cc, ph, pw = src.shape
        out = np.zeros((Bc, Cc, H, W))
        for oy in range(H):
            sy = oy * (ph - 1) / (H - 1) if ph > 1 else 0.0
            y0 = min(int(np.floor(sy)), ph - 1); y1 = min(y0 + 1, ph - 1); wy = sy - y0
            for ox in range(W):
                sx = ox * (pw - 1) / (W - 1) if pw > 1 else 0.0
                x0 = min(int(np.floor(sx)), pw - 1); x1 = min(x0 + 1, pw - 1); wx = sx - x0
                out[:, :, oy, ox] = ((1 - wy) * (1 - wx) * src[:, :, y0, x0]
                                     + (1 - wy) * wx * src[:, :, y0, x1]
                                     + wy * (1 - wx) * src[:, :, y1, x0]
                                     + wy * wx * src[:, :, y1, x1])
        return out

    outs = []
    for s, ps in enumerate(pool_sizes):
        pooled = np.zeros((B, C_in, ps, ps))
        for i in range(ps):
            h0, h1 = adaptive_bounds(H, ps, i)
            for j in range(ps):
                w0, w1 = adaptive_bounds(W, ps, j)
                pooled[:, :, i, j] = x[:, :, h0:h1, w0:w1].max(axis=(2, 3))
        Wpt = np.asarray(params["branch_w"][s]).T          # (C_out, C_in)
        bpt = np.asarray(params["branch_b"][s]).reshape(-1)
        conv = np.einsum("oc,bcij->boij", Wpt, pooled) + bpt[None, :, None, None]
        outs.append(bilinear(conv, H, W))
    outs.append(x)
    cat = np.concatenate(outs, axis=1)
    Wf = np.asarray(params["final_w"]).T                   # (C_out, C_total)
    bf = np.asarray(params["final_b"]).reshape(-1)
    fin = np.einsum("oc,bchw->bohw", Wf, cat) + bf[None, :, None, None]
    mean = fin.mean(axis=(0, 2, 3))
    var = fin.var(axis=(0, 2, 3))                          # biased, like BN forward
    gamma = np.asarray(params["gamma"]).reshape(-1)
    beta = np.asarray(params["beta"]).reshape(-1)
    norm = (fin - mean[None, :, None, None]) / np.sqrt(var[None, :, None, None] + 1e-5)
    return np.maximum(gamma[None, :, None, None] * norm + beta[None, :, None, None], 0.0)


# ----------------------------- main ------------------------------------------------

if __name__ == "__main__":
    B, C_in, C_out, H, W = 2, 8, 8, 16, 16
    pool_sizes = [1, 2, 3, 6]

    key = jax.random.PRNGKey(0)
    k_x, k_p = jax.random.split(key)
    x = jax.random.normal(k_x, (B, C_in, H, W), jnp.float32)
    params = init_params(k_p, C_in, C_out, pool_sizes)

    out = ppmhead_forward(x, params, pool_sizes)
    out = jax.block_until_ready(out)

    ref = reference_forward(np.asarray(x), params, pool_sizes)
    err = float(np.max(np.abs(np.asarray(out) - ref)))
    assert out.shape == (B, C_out, H, W), out.shape
    assert err < 1e-2, f"max abs error {err}"

    print("KERNEL_OK")
</pallas_src>

<mosaic_0001>
module attributes {stable_mosaic.version = 11 : i64} {
  func.func @kernel(%arg0: memref<2x8x16x16xf32, #tpu.memory_space<vmem>>, %arg1: memref<2x8x256xf32, #tpu.memory_space<vmem>>, %arg2: memref<50x256xf32, #tpu.memory_space<vmem>>, %arg3: memref<32x8xf32, #tpu.memory_space<vmem>>, %arg4: memref<8x8xf32, #tpu.memory_space<vmem>>, %arg5: memref<8x3xf32, #tpu.memory_space<vmem>>, %arg6: memref<2x8x256xf32, #tpu.memory_space<vmem>>) attributes {dimension_semantics = [], scalar_prefetch = 0 : i64, scratch_operands = 0 : i64, tpu.core_type = #tpu.core_type<tc>} {
    %c0 = arith.constant 0 : index
    %c0_0 = arith.constant 0 : index
    %0 = vector.load %arg5[%c0, %c0_0] : memref<8x3xf32, #tpu.memory_space<vmem>>, vector<8x3xf32>
    %1 = vector.extract_strided_slice %0 {offsets = [0, 0], sizes = [8, 1], strides = [1, 1]} : vector<8x3xf32> to vector<8x1xf32>
    %c0_1 = arith.constant 0 : index
    %c0_2 = arith.constant 0 : index
    %2 = vector.load %arg2[%c0_1, %c0_2] : memref<50x256xf32, #tpu.memory_space<vmem>>, vector<50x256xf32>
    %c0_3 = arith.constant 0 : index
    %c0_4 = arith.constant 0 : index
    %3 = vector.load %arg3[%c0_3, %c0_4] : memref<32x8xf32, #tpu.memory_space<vmem>>, vector<32x8xf32>
    %c0_5 = arith.constant 0 : index
    %c0_6 = arith.constant 0 : index
    %4 = vector.load %arg4[%c0_5, %c0_6] : memref<8x8xf32, #tpu.memory_space<vmem>>, vector<8x8xf32>
    %c0_7 = arith.constant 0 : index
    %c0_8 = arith.constant 0 : index
    %c0_9 = arith.constant 0 : index
    %c0_10 = arith.constant 0 : index
    %5 = vector.load %arg0[%c0_7, %c0_8, %c0_9, %c0_10] : memref<2x8x16x16xf32, #tpu.memory_space<vmem>>, vector<1x8x16x16xf32>
    %6 = vector.shape_cast %5 : vector<1x8x16x16xf32> to vector<8x16x16xf32>
    %cst = arith.constant dense<0xFF800000> : vector<8x16xf32>
    %7 = vector.multi_reduction <maximumf>, %6, %cst [1] : vector<8x16x16xf32> to vector<8x16xf32>
    %8 = vector.shape_cast %7 : vector<8x16xf32> to vector<1x8x16xf32>
    %cst_11 = arith.constant dense<0xFF800000> : vector<1x8xf32>
    %9 = vector.multi_reduction <maximumf>, %8, %cst_11 [2] : vector<1x8x16xf32> to vector<1x8xf32>
    %10 = vector.extract_strided_slice %3 {offsets = [0, 0], sizes = [8, 8], strides = [1, 1]} : vector<32x8xf32> to vector<8x8xf32>
    %cst_12 = arith.constant dense<0.000000e+00> : vector<1x8xf32>
    %11 = tpu.matmul %9, %10, %cst_12 {dimension_numbers = #tpu.dot_dimension_numbers<[1], [0], [0], [1], [0, 0, 1, 1], [], []>} : vector<1x8xf32>, vector<8x8xf32>, vector<1x8xf32> -> vector<1x8xf32>
    %12 = vector.extract_strided_slice %6 {offsets = [0, 0, 0], sizes = [8, 8, 16], strides = [1, 1, 1]} : vector<8x16x16xf32> to vector<8x8x16xf32>
    %cst_13 = arith.constant dense<0xFF800000> : vector<8x16xf32>
    %13 = vector.multi_reduction <maximumf>, %12, %cst_13 [1] : vector<8x8x16xf32> to vector<8x16xf32>
    %14 = vector.extract_strided_slice %6 {offsets = [0, 8, 0], sizes = [8, 8, 16], strides = [1, 1, 1]} : vector<8x16x16xf32> to vector<8x8x16xf32>
    %cst_14 = arith.constant dense<0xFF800000> : vector<8x16xf32>
    %15 = vector.multi_reduction <maximumf>, %14, %cst_14 [1] : vector<8x8x16xf32> to vector<8x16xf32>
    %16 = vector.shape_cast %13 : vector<8x16xf32> to vector<1x8x16xf32>
    %17 = vector.shape_cast %15 : vector<8x16xf32> to vector<1x8x16xf32>
    %18 = tpu.concatenate %16, %17 in 0 : vector<1x8x16xf32>, vector<1x8x16xf32> -> vector<2x8x16xf32>
    %19 = vector.extract_strided_slice %18 {offsets = [0, 0, 0], sizes = [2, 8, 8], strides = [1, 1, 1]} : vector<2x8x16xf32> to vector<2x8x8xf32>
    %cst_15 = arith.constant dense<0xFF800000> : vector<2x8xf32>
    %20 = vector.multi_reduction <maximumf>, %19, %cst_15 [2] : vector<2x8x8xf32> to vector<2x8xf32>
    %21 = vector.extract_strided_slice %18 {offsets = [0, 0, 8], sizes = [2, 8, 8], strides = [1, 1, 1]} : vector<2x8x16xf32> to vector<2x8x8xf32>
    %cst_16 = arith.constant dense<0xFF800000> : vector<2x8xf32>
    %22 = vector.multi_reduction <maximumf>, %21, %cst_16 [2] : vector<2x8x8xf32> to vector<2x8xf32>
    %23 = tpu.concatenate %20, %22 in 0 : vector<2x8xf32>, vector<2x8xf32> -> vector<4x8xf32>
    %24 = vector.extract_strided_slice %3 {offsets = [8, 0], sizes = [8, 8], strides = [1, 1]} : vector<32x8xf32> to vector<8x8xf32>
    %cst_17 = arith.constant dense<0.000000e+00> : vector<4x8xf32>
    %25 = tpu.matmul %23, %24, %cst_17 {dimension_numbers = #tpu.dot_dimension_numbers<[1], [0], [0], [1], [0, 0, 1, 1], [], []>} : vector<4x8xf32>, vector<8x8xf32>, vector<4x8xf32> -> vector<4x8xf32>
    %26 = vector.extract_strided_slice %6 {offsets = [0, 0, 0], sizes = [8, 6, 16], strides = [1, 1, 1]} : vector<8x16x16xf32> to vector<8x6x16xf32>
    %cst_18 = arith.constant dense<0xFF800000> : vector<8x16xf32>
    %27 = vector.multi_reduction <maximumf>, %26, %cst_18 [1] : vector<8x6x16xf32> to vector<8x16xf32>
    %28 = vector.extract_strided_slice %6 {offsets = [0, 5, 0], sizes = [8, 6, 16], strides = [1, 1, 1]} : vector<8x16x16xf32> to vector<8x6x16xf32>
    %cst_19 = arith.constant dense<0xFF800000> : vector<8x16xf32>
    %29 = vector.multi_reduction <maximumf>, %28, %cst_19 [1] : vector<8x6x16xf32> to vector<8x16xf32>
    %30 = vector.extract_strided_slice %6 {offsets = [0, 10, 0], sizes = [8, 6, 16], strides = [1, 1, 1]} : vector<8x16x16xf32> to vector<8x6x16xf32>
    %cst_20 = arith.constant dense<0xFF800000> : vector<8x16xf32>
    %31 = vector.multi_reduction <maximumf>, %30, %cst_20 [1] : vector<8x6x16xf32> to vector<8x16xf32>
    %32 = vector.shape_cast %27 : vector<8x16xf32> to vector<1x8x16xf32>
    %33 = vector.shape_cast %29 : vector<8x16xf32> to vector<1x8x16xf32>
    %34 = vector.shape_cast %31 : vector<8x16xf32> to vector<1x8x16xf32>
    %35 = tpu.concatenate %32, %33, %34 in 0 : vector<1x8x16xf32>, vector<1x8x16xf32>, vector<1x8x16xf32> -> vector<3x8x16xf32>
    %36 = vector.extract_strided_slice %35 {offsets = [0, 0, 0], sizes = [3, 8, 6], strides = [1, 1, 1]} : vector<3x8x16xf32> to vector<3x8x6xf32>
    %cst_21 = arith.constant dense<0xFF800000> : vector<3x8xf32>
    %37 = vector.multi_reduction <maximumf>, %36, %cst_21 [2] : vector<3x8x6xf32> to vector<3x8xf32>
    %38 = vector.extract_strided_slice %35 {offsets = [0, 0, 5], sizes = [3, 8, 6], strides = [1, 1, 1]} : vector<3x8x16xf32> to vector<3x8x6xf32>
    %cst_22 = arith.constant dense<0xFF800000> : vector<3x8xf32>
    %39 = vector.multi_reduction <maximumf>, %38, %cst_22 [2] : vector<3x8x6xf32> to vector<3x8xf32>
    %40 = vector.extract_strided_slice %35 {offsets = [0, 0, 10], sizes = [3, 8, 6], strides = [1, 1, 1]} : vector<3x8x16xf32> to vector<3x8x6xf32>
    %cst_23 = arith.constant dense<0xFF800000> : vector<3x8xf32>
    %41 = vector.multi_reduction <maximumf>, %40, %cst_23 [2] : vector<3x8x6xf32> to vector<3x8xf32>
    %42 = tpu.concatenate %37, %39, %41 in 0 : vector<3x8xf32>, vector<3x8xf32>, vector<3x8xf32> -> vector<9x8xf32>
    %43 = vector.extract_strided_slice %3 {offsets = [16, 0], sizes = [8, 8], strides = [1, 1]} : vector<32x8xf32> to vector<8x8xf32>
    %cst_24 = arith.constant dense<0.000000e+00> : vector<9x8xf32>
    %44 = tpu.matmul %42, %43, %cst_24 {dimension_numbers = #tpu.dot_dimension_numbers<[1], [0], [0], [1], [0, 0, 1, 1], [], []>} : vector<9x8xf32>, vector<8x8xf32>, vector<9x8xf32> -> vector<9x8xf32>
    %45 = vector.extract_strided_slice %6 {offsets = [0, 0, 0], sizes = [8, 3, 16], strides = [1, 1, 1]} : vector<8x16x16xf32> to vector<8x3x16xf32>
    %cst_25 = arith.constant dense<0xFF800000> : vector<8x16xf32>
    %46 = vector.multi_reduction <maximumf>, %45, %cst_25 [1] : vector<8x3x16xf32> to vector<8x16xf32>
    %47 = vector.extract_strided_slice %6 {offsets = [0, 2, 0], sizes = [8, 4, 16], strides = [1, 1, 1]} : vector<8x16x16xf32> to vector<8x4x16xf32>
    %cst_26 = arith.constant dense<0xFF800000> : vector<8x16xf32>
    %48 = vector.multi_reduction <maximumf>, %47, %cst_26 [1] : vector<8x4x16xf32> to vector<8x16xf32>
    %49 = vector.extract_strided_slice %6 {offsets = [0, 5, 0], sizes = [8, 3, 16], strides = [1, 1, 1]} : vector<8x16x16xf32> to vector<8x3x16xf32>
    %cst_27 = arith.constant dense<0xFF800000> : vector<8x16xf32>
    %50 = vector.multi_reduction <maximumf>, %49, %cst_27 [1] : vector<8x3x16xf32> to vector<8x16xf32>
    %51 = vector.extract_strided_slice %6 {offsets = [0, 8, 0], sizes = [8, 3, 16], strides = [1, 1, 1]} : vector<8x16x16xf32> to vector<8x3x16xf32>
    %cst_28 = arith.constant dense<0xFF800000> : vector<8x16xf32>
    %52 = vector.multi_reduction <maximumf>, %51, %cst_28 [1] : vector<8x3x16xf32> to vector<8x16xf32>
    %53 = vector.extract_strided_slice %6 {offsets = [0, 10, 0], sizes = [8, 4, 16], strides = [1, 1, 1]} : vector<8x16x16xf32> to vector<8x4x16xf32>
    %cst_29 = arith.constant dense<0xFF800000> : vector<8x16xf32>
    %54 = vector.multi_reduction <maximumf>, %53, %cst_29 [1] : vector<8x4x16xf32> to vector<8x16xf32>
    %55 = vector.extract_strided_slice %6 {offsets = [0, 13, 0], sizes = [8, 3, 16], strides = [1, 1, 1]} : vector<8x16x16xf32> to vector<8x3x16xf32>
    %cst_30 = arith.constant dense<0xFF800000> : vector<8x16xf32>
    %56 = vector.multi_reduction <maximumf>, %55, %cst_30 [1] : vector<8x3x16xf32> to vector<8x16xf32>
    %57 = vector.shape_cast %46 : vector<8x16xf32> to vector<1x8x16xf32>
    %58 = vector.shape_cast %48 : vector<8x16xf32> to vector<1x8x16xf32>
    %59 = vector.shape_cast %50 : vector<8x16xf32> to vector<1x8x16xf32>
    %60 = vector.shape_cast %52 : vector<8x16xf32> to vector<1x8x16xf32>
    %61 = vector.shape_cast %54 : vector<8x16xf32> to vector<1x8x16xf32>
    %62 = vector.shape_cast %56 : vector<8x16xf32> to vector<1x8x16xf32>
    %63 = tpu.concatenate %57, %58, %59, %60, %61, %62 in 0 : vector<1x8x16xf32>, vector<1x8x16xf32>, vector<1x8x16xf32>, vector<1x8x16xf32>, vector<1x8x16xf32>, vector<1x8x16xf32> -> vector<6x8x16xf32>
    %64 = vector.extract_strided_slice %63 {offsets = [0, 0, 0], sizes = [6, 8, 3], strides = [1, 1, 1]} : vector<6x8x16xf32> to vector<6x8x3xf32>
    %cst_31 = arith.constant dense<0xFF800000> : vector<6x8xf32>
    %65 = vector.multi_reduction <maximumf>, %64, %cst_31 [2] : vector<6x8x3xf32> to vector<6x8xf32>
    %66 = vector.extract_strided_slice %63 {offsets = [0, 0, 2], sizes = [6, 8, 4], strides = [1, 1, 1]} : vector<6x8x16xf32> to vector<6x8x4xf32>
    %cst_32 = arith.constant dense<0xFF800000> : vector<6x8xf32>
    %67 = vector.multi_reduction <maximumf>, %66, %cst_32 [2] : vector<6x8x4xf32> to vector<6x8xf32>
    %68 = vector.extract_strided_slice %63 {offsets = [0, 0, 5], sizes = [6, 8, 3], strides = [1, 1, 1]} : vector<6x8x16xf32> to vector<6x8x3xf32>
    %cst_33 = arith.constant dense<0xFF800000> : vector<6x8xf32>
    %69 = vector.multi_reduction <maximumf>, %68, %cst_33 [2] : vector<6x8x3xf32> to vector<6x8xf32>
    %70 = vector.extract_strided_slice %63 {offsets = [0, 0, 8], sizes = [6, 8, 3], strides = [1, 1, 1]} : vector<6x8x16xf32> to vector<6x8x3xf32>
    %cst_34 = arith.constant dense<0xFF800000> : vector<6x8xf32>
    %71 = vector.multi_reduction <maximumf>, %70, %cst_34 [2] : vector<6x8x3xf32> to vector<6x8xf32>
    %72 = vector.extract_strided_slice %63 {offsets = [0, 0, 10], sizes = [6, 8, 4], strides = [1, 1, 1]} : vector<6x8x16xf32> to vector<6x8x4xf32>
    %cst_35 = arith.constant dense<0xFF800000> : vector<6x8xf32>
    %73 = vector.multi_reduction <maximumf>, %72, %cst_35 [2] : vector<6x8x4xf32> to vector<6x8xf32>
    %74 = vector.extract_strided_slice %63 {offsets = [0, 0, 13], sizes = [6, 8, 3], strides = [1, 1, 1]} : vector<6x8x16xf32> to vector<6x8x3xf32>
    %cst_36 = arith.constant dense<0xFF800000> : vector<6x8xf32>
    %75 = vector.multi_reduction <maximumf>, %74, %cst_36 [2] : vector<6x8x3xf32> to vector<6x8xf32>
    %76 = tpu.concatenate %65, %67, %69, %71, %73, %75 in 0 : vector<6x8xf32>, vector<6x8xf32>, vector<6x8xf32>, vector<6x8xf32>, vector<6x8xf32>, vector<6x8xf32> -> vector<36x8xf32>
    %77 = vector.extract_strided_slice %3 {offsets = [24, 0], sizes = [8, 8], strides = [1, 1]} : vector<32x8xf32> to vector<8x8xf32>
    %cst_37 = arith.constant dense<0.000000e+00> : vector<36x8xf32>
    %78 = tpu.matmul %76, %77, %cst_37 {dimension_numbers = #tpu.dot_dimension_numbers<[1], [0], [0], [1], [0, 0, 1, 1], [], []>} : vector<36x8xf32>, vector<8x8xf32>, vector<36x8xf32> -> vector<36x8xf32>
    %79 = tpu.concatenate %11, %25, %44, %78 in 0 : vector<1x8xf32>, vector<4x8xf32>, vector<9x8xf32>, vector<36x8xf32> -> vector<50x8xf32>
    %80 = tpu.transpose %79, [1, 0] : vector<50x8xf32> -> vector<8x50xf32>
    %cst_38 = arith.constant dense<0.000000e+00> : vector<8x256xf32>
    %81 = tpu.matmul %80, %2, %cst_38 {dimension_numbers = #tpu.dot_dimension_numbers<[1], [0], [0], [1], [0, 0, 1, 1], [], []>} : vector<8x50xf32>, vector<50x256xf32>, vector<8x256xf32> -> vector<8x256xf32>
    %c0_39 = arith.constant 0 : index
    %c0_40 = arith.constant 0 : index
    %c0_41 = arith.constant 0 : index
    %82 = vector.load %arg1[%c0_39, %c0_40, %c0_41] : memref<2x8x256xf32, #tpu.memory_space<vmem>>, vector<1x8x256xf32>
    %83 = vector.shape_cast %82 : vector<1x8x256xf32> to vector<8x256xf32>
    %cst_42 = arith.constant dense<0.000000e+00> : vector<8x256xf32>
    %84 = tpu.matmul %4, %83, %cst_42 {dimension_numbers = #tpu.dot_dimension_numbers<[1], [0], [0], [1], [0, 0, 1, 1], [], []>} : vector<8x8xf32>, vector<8x256xf32>, vector<8x256xf32> -> vector<8x256xf32>
    %85 = arith.addf %81, %84 : vector<8x256xf32>
    %86 = vector.broadcast %1 : vector<8x1xf32> to vector<8x256xf32>
    %87 = arith.addf %85, %86 : vector<8x256xf32>
    %c1 = arith.constant 1 : index
    %c0_43 = arith.constant 0 : index
    %c0_44 = arith.constant 0 : index
    %c0_45 = arith.constant 0 : index
    %88 = vector.load %arg0[%c1, %c0_43, %c0_44, %c0_45] : memref<2x8x16x16xf32, #tpu.memory_space<vmem>>, vector<1x8x16x16xf32>
    %89 = vector.shape_cast %88 : vector<1x8x16x16xf32> to vector<8x16x16xf32>
    %cst_46 = arith.constant dense<0xFF800000> : vector<8x16xf32>
    %90 = vector.multi_reduction <maximumf>, %89, %cst_46 [1] : vector<8x16x16xf32> to vector<8x16xf32>
    %91 = vector.shape_cast %90 : vector<8x16xf32> to vector<1x8x16xf32>
    %cst_47 = arith.constant dense<0xFF800000> : vector<1x8xf32>
    %92 = vector.multi_reduction <maximumf>, %91, %cst_47 [2] : vector<1x8x16xf32> to vector<1x8xf32>
    %93 = vector.extract_strided_slice %3 {offsets = [0, 0], sizes = [8, 8], strides = [1, 1]} : vector<32x8xf32> to vector<8x8xf32>
    %cst_48 = arith.constant dense<0.000000e+00> : vector<1x8xf32>
    %94 = tpu.matmul %92, %93, %cst_48 {dimension_numbers = #tpu.dot_dimension_numbers<[1], [0], [0], [1], [0, 0, 1, 1], [], []>} : vector<1x8xf32>, vector<8x8xf32>, vector<1x8xf32> -> vector<1x8xf32>
    %95 = vector.extract_strided_slice %89 {offsets = [0, 0, 0], sizes = [8, 8, 16], strides = [1, 1, 1]} : vector<8x16x16xf32> to vector<8x8x16xf32>
    %cst_49 = arith.constant dense<0xFF800000> : vector<8x16xf32>
    %96 = vector.multi_reduction <maximumf>, %95, %cst_49 [1] : vector<8x8x16xf32> to vector<8x16xf32>
    %97 = vector.extract_strided_slice %89 {offsets = [0, 8, 0], sizes = [8, 8, 16], strides = [1, 1, 1]} : vector<8x16x16xf32> to vector<8x8x16xf32>
    %cst_50 = arith.constant dense<0xFF800000> : vector<8x16xf32>
    %98 = vector.multi_reduction <maximumf>, %97, %cst_50 [1] : vector<8x8x16xf32> to vector<8x16xf32>
    %99 = vector.shape_cast %96 : vector<8x16xf32> to vector<1x8x16xf32>
    %100 = vector.shape_cast %98 : vector<8x16xf32> to vector<1x8x16xf32>
    %101 = tpu.concatenate %99, %100 in 0 : vector<1x8x16xf32>, vector<1x8x16xf32> -> vector<2x8x16xf32>
    %102 = vector.extract_strided_slice %101 {offsets = [0, 0, 0], sizes = [2, 8, 8], strides = [1, 1, 1]} : vector<2x8x16xf32> to vector<2x8x8xf32>
    %cst_51 = arith.constant dense<0xFF800000> : vector<2x8xf32>
    %103 = vector.multi_reduction <maximumf>, %102, %cst_51 [2] : vector<2x8x8xf32> to vector<2x8xf32>
    %104 = vector.extract_strided_slice %101 {offsets = [0, 0, 8], sizes = [2, 8, 8], strides = [1, 1, 1]} : vector<2x8x16xf32> to vector<2x8x8xf32>
    %cst_52 = arith.constant dense<0xFF800000> : vector<2x8xf32>
    %105 = vector.multi_reduction <maximumf>, %104, %cst_52 [2] : vector<2x8x8xf32> to vector<2x8xf32>
    %106 = tpu.concatenate %103, %105 in 0 : vector<2x8xf32>, vector<2x8xf32> -> vector<4x8xf32>
    %107 = vector.extract_strided_slice %3 {offsets = [8, 0], sizes = [8, 8], strides = [1, 1]} : vector<32x8xf32> to vector<8x8xf32>
    %cst_53 = arith.constant dense<0.000000e+00> : vector<4x8xf32>
    %108 = tpu.matmul %106, %107, %cst_53 {dimension_numbers = #tpu.dot_dimension_numbers<[1], [0], [0], [1], [0, 0, 1, 1], [], []>} : vector<4x8xf32>, vector<8x8xf32>, vector<4x8xf32> -> vector<4x8xf32>
    %109 = vector.extract_strided_slice %89 {offsets = [0, 0, 0], sizes = [8, 6, 16], strides = [1, 1, 1]} : vector<8x16x16xf32> to vector<8x6x16xf32>
    %cst_54 = arith.constant dense<0xFF800000> : vector<8x16xf32>
    %110 = vector.multi_reduction <maximumf>, %109, %cst_54 [1] : vector<8x6x16xf32> to vector<8x16xf32>
    %111 = vector.extract_strided_slice %89 {offsets = [0, 5, 0], sizes = [8, 6, 16], strides = [1, 1, 1]} : vector<8x16x16xf32> to vector<8x6x16xf32>
    %cst_55 = arith.constant dense<0xFF800000> : vector<8x16xf32>
    %112 = vector.multi_reduction <maximumf>, %111, %cst_55 [1] : vector<8x6x16xf32> to vector<8x16xf32>
    %113 = vector.extract_strided_slice %89 {offsets = [0, 10, 0], sizes = [8, 6, 16], strides = [1, 1, 1]} : vector<8x16x16xf32> to vector<8x6x16xf32>
    %cst_56 = arith.constant dense<0xFF800000> : vector<8x16xf32>
    %114 = vector.multi_reduction <maximumf>, %113, %cst_56 [1] : vector<8x6x16xf32> to vector<8x16xf32>
    %115 = vector.shape_cast %110 : vector<8x16xf32> to vector<1x8x16xf32>
    %116 = vector.shape_cast %112 : vector<8x16xf32> to vector<1x8x16xf32>
    %117 = vector.shape_cast %114 : vector<8x16xf32> to vector<1x8x16xf32>
    %118 = tpu.concatenate %115, %116, %117 in 0 : vector<1x8x16xf32>, vector<1x8x16xf32>, vector<1x8x16xf32> -> vector<3x8x16xf32>
    %119 = vector.extract_strided_slice %118 {offsets = [0, 0, 0], sizes = [3, 8, 6], strides = [1, 1, 1]} : vector<3x8x16xf32> to vector<3x8x6xf32>
    %cst_57 = arith.constant dense<0xFF800000> : vector<3x8xf32>
    %120 = vector.multi_reduction <maximumf>, %119, %cst_57 [2] : vector<3x8x6xf32> to vector<3x8xf32>
    %121 = vector.extract_strided_slice %118 {offsets = [0, 0, 5], sizes = [3, 8, 6], strides = [1, 1, 1]} : vector<3x8x16xf32> to vector<3x8x6xf32>
    %cst_58 = arith.constant dense<0xFF800000> : vector<3x8xf32>
    %122 = vector.multi_reduction <maximumf>, %121, %cst_58 [2] : vector<3x8x6xf32> to vector<3x8xf32>
    %123 = vector.extract_strided_slice %118 {offsets = [0, 0, 10], sizes = [3, 8, 6], strides = [1, 1, 1]} : vector<3x8x16xf32> to vector<3x8x6xf32>
    %cst_59 = arith.constant dense<0xFF800000> : vector<3x8xf32>
    %124 = vector.multi_reduction <maximumf>, %123, %cst_59 [2] : vector<3x8x6xf32> to vector<3x8xf32>
    %125 = tpu.concatenate %120, %122, %124 in 0 : vector<3x8xf32>, vector<3x8xf32>, vector<3x8xf32> -> vector<9x8xf32>
    %126 = vector.extract_strided_slice %3 {offsets = [16, 0], sizes = [8, 8], strides = [1, 1]} : vector<32x8xf32> to vector<8x8xf32>
    %cst_60 = arith.constant dense<0.000000e+00> : vector<9x8xf32>
    %127 = tpu.matmul %125, %126, %cst_60 {dimension_numbers = #tpu.dot_dimension_numbers<[1], [0], [0], [1], [0, 0, 1, 1], [], []>} : vector<9x8xf32>, vector<8x8xf32>, vector<9x8xf32> -> vector<9x8xf32>
    %128 = vector.extract_strided_slice %89 {offsets = [0, 0, 0], sizes = [8, 3, 16], strides = [1, 1, 1]} : vector<8x16x16xf32> to vector<8x3x16xf32>
    %cst_61 = arith.constant dense<0xFF800000> : vector<8x16xf32>
    %129 = vector.multi_reduction <maximumf>, %128, %cst_61 [1] : vector<8x3x16xf32> to vector<8x16xf32>
    %130 = vector.extract_strided_slice %89 {offsets = [0, 2, 0], sizes = [8, 4, 16], strides = [1, 1, 1]} : vector<8x16x16xf32> to vector<8x4x16xf32>
    %cst_62 = arith.constant dense<0xFF800000> : vector<8x16xf32>
    %131 = vector.multi_reduction <maximumf>, %130, %cst_62 [1] : vector<8x4x16xf32> to vector<8x16xf32>
    %132 = vector.extract_strided_slice %89 {offsets = [0, 5, 0], sizes = [8, 3, 16], strides = [1, 1, 1]} : vector<8x16x16xf32> to vector<8x3x16xf32>
    %cst_63 = arith.constant dense<0xFF800000> : vector<8x16xf32>
    %133 = vector.multi_reduction <maximumf>, %132, %cst_63 [1] : vector<8x3x16xf32> to vector<8x16xf32>
    %134 = vector.extract_strided_slice %89 {offsets = [0, 8, 0], sizes = [8, 3, 16], strides = [1, 1, 1]} : vector<8x16x16xf32> to vector<8x3x16xf32>
    %cst_64 = arith.constant dense<0xFF800000> : vector<8x16xf32>
    %135 = vector.multi_reduction <maximumf>, %134, %cst_64 [1] : vector<8x3x16xf32> to vector<8x16xf32>
    %136 = vector.extract_strided_slice %89 {offsets = [0, 10, 0], sizes = [8, 4, 16], strides = [1, 1, 1]} : vector<8x16x16xf32> to vector<8x4x16xf32>
    %cst_65 = arith.constant dense<0xFF800000> : vector<8x16xf32>
    %137 = vector.multi_reduction <maximumf>, %136, %cst_65 [1] : vector<8x4x16xf32> to vector<8x16xf32>
    %138 = vector.extract_strided_slice %89 {offsets = [0, 13, 0], sizes = [8, 3, 16], strides = [1, 1, 1]} : vector<8x16x16xf32> to vector<8x3x16xf32>
    %cst_66 = arith.constant dense<0xFF800000> : vector<8x16xf32>
    %139 = vector.multi_reduction <maximumf>, %138, %cst_66 [1] : vector<8x3x16xf32> to vector<8x16xf32>
    %140 = vector.shape_cast %129 : vector<8x16xf32> to vector<1x8x16xf32>
    %141 = vector.shape_cast %131 : vector<8x16xf32> to vector<1x8x16xf32>
    %142 = vector.shape_cast %133 : vector<8x16xf32> to vector<1x8x16xf32>
    %143 = vector.shape_cast %135 : vector<8x16xf32> to vector<1x8x16xf32>
    %144 = vector.shape_cast %137 : vector<8x16xf32> to vector<1x8x16xf32>
    %145 = vector.shape_cast %139 : vector<8x16xf32> to vector<1x8x16xf32>
    %146 = tpu.concatenate %140, %141, %142, %143, %144, %145 in 0 : vector<1x8x16xf32>, vector<1x8x16xf32>, vector<1x8x16xf32>, vector<1x8x16xf32>, vector<1x8x16xf32>, vector<1x8x16xf32> -> vector<6x8x16xf32>
    %147 = vector.extract_strided_slice %146 {offsets = [0, 0, 0], sizes = [6, 8, 3], strides = [1, 1, 1]} : vector<6x8x16xf32> to vector<6x8x3xf32>
    %cst_67 = arith.constant dense<0xFF800000> : vector<6x8xf32>
    %148 = vector.multi_reduction <maximumf>, %147, %cst_67 [2] : vector<6x8x3xf32> to vector<6x8xf32>
    %149 = vector.extract_strided_slice %146 {offsets = [0, 0, 2], sizes = [6, 8, 4], strides = [1, 1, 1]} : vector<6x8x16xf32> to vector<6x8x4xf32>
    %cst_68 = arith.constant dense<0xFF800000> : vector<6x8xf32>
    %150 = vector.multi_reduction <maximumf>, %149, %cst_68 [2] : vector<6x8x4xf32> to vector<6x8xf32>
    %151 = vector.extract_strided_slice %146 {offsets = [0, 0, 5], sizes = [6, 8, 3], strides = [1, 1, 1]} : vector<6x8x16xf32> to vector<6x8x3xf32>
    %cst_69 = arith.constant dense<0xFF800000> : vector<6x8xf32>
    %152 = vector.multi_reduction <maximumf>, %151, %cst_69 [2] : vector<6x8x3xf32> to vector<6x8xf32>
    %153 = vector.extract_strided_slice %146 {offsets = [0, 0, 8], sizes = [6, 8, 3], strides = [1, 1, 1]} : vector<6x8x16xf32> to vector<6x8x3xf32>
    %cst_70 = arith.constant dense<0xFF800000> : vector<6x8xf32>
    %154 = vector.multi_reduction <maximumf>, %153, %cst_70 [2] : vector<6x8x3xf32> to vector<6x8xf32>
    %155 = vector.extract_strided_slice %146 {offsets = [0, 0, 10], sizes = [6, 8, 4], strides = [1, 1, 1]} : vector<6x8x16xf32> to vector<6x8x4xf32>
    %cst_71 = arith.constant dense<0xFF800000> : vector<6x8xf32>
    %156 = vector.multi_reduction <maximumf>, %155, %cst_71 [2] : vector<6x8x4xf32> to vector<6x8xf32>
    %157 = vector.extract_strided_slice %146 {offsets = [0, 0, 13], sizes = [6, 8, 3], strides = [1, 1, 1]} : vector<6x8x16xf32> to vector<6x8x3xf32>
    %cst_72 = arith.constant dense<0xFF800000> : vector<6x8xf32>
    %158 = vector.multi_reduction <maximumf>, %157, %cst_72 [2] : vector<6x8x3xf32> to vector<6x8xf32>
    %159 = tpu.concatenate %148, %150, %152, %154, %156, %158 in 0 : vector<6x8xf32>, vector<6x8xf32>, vector<6x8xf32>, vector<6x8xf32>, vector<6x8xf32>, vector<6x8xf32> -> vector<36x8xf32>
    %160 = vector.extract_strided_slice %3 {offsets = [24, 0], sizes = [8, 8], strides = [1, 1]} : vector<32x8xf32> to vector<8x8xf32>
    %cst_73 = arith.constant dense<0.000000e+00> : vector<36x8xf32>
    %161 = tpu.matmul %159, %160, %cst_73 {dimension_numbers = #tpu.dot_dimension_numbers<[1], [0], [0], [1], [0, 0, 1, 1], [], []>} : vector<36x8xf32>, vector<8x8xf32>, vector<36x8xf32> -> vector<36x8xf32>
    %162 = tpu.concatenate %94, %108, %127, %161 in 0 : vector<1x8xf32>, vector<4x8xf32>, vector<9x8xf32>, vector<36x8xf32> -> vector<50x8xf32>
    %163 = tpu.transpose %162, [1, 0] : vector<50x8xf32> -> vector<8x50xf32>
    %cst_74 = arith.constant dense<0.000000e+00> : vector<8x256xf32>
    %164 = tpu.matmul %163, %2, %cst_74 {dimension_numbers = #tpu.dot_dimension_numbers<[1], [0], [0], [1], [0, 0, 1, 1], [], []>} : vector<8x50xf32>, vector<50x256xf32>, vector<8x256xf32> -> vector<8x256xf32>
    %c1_75 = arith.constant 1 : index
    %c0_76 = arith.constant 0 : index
    %c0_77 = arith.constant 0 : index
    %165 = vector.load %arg1[%c1_75, %c0_76, %c0_77] : memref<2x8x256xf32, #tpu.memory_space<vmem>>, vector<1x8x256xf32>
    %166 = vector.shape_cast %165 : vector<1x8x256xf32> to vector<8x256xf32>
    %cst_78 = arith.constant dense<0.000000e+00> : vector<8x256xf32>
    %167 = tpu.matmul %4, %166, %cst_78 {dimension_numbers = #tpu.dot_dimension_numbers<[1], [0], [0], [1], [0, 0, 1, 1], [], []>} : vector<8x8xf32>, vector<8x256xf32>, vector<8x256xf32> -> vector<8x256xf32>
    %168 = arith.addf %164, %167 : vector<8x256xf32>
    %169 = vector.broadcast %1 : vector<8x1xf32> to vector<8x256xf32>
    %170 = arith.addf %168, %169 : vector<8x256xf32>
    %171 = vector.shape_cast %87 : vector<8x256xf32> to vector<1x8x256xf32>
    %172 = vector.shape_cast %170 : vector<8x256xf32> to vector<1x8x256xf32>
    %173 = tpu.concatenate %171, %172 in 0 : vector<1x8x256xf32>, vector<1x8x256xf32> -> vector<2x8x256xf32>
    %cst_79 = arith.constant dense<0.000000e+00> : vector<8xf32>
    %174 = vector.multi_reduction <add>, %173, %cst_79 [0, 2] : vector<2x8x256xf32> to vector<8xf32>
    %175 = vector.shape_cast %174 : vector<8xf32> to vector<1x8x1xf32>
    %cst_80 = arith.constant 5.120000e+02 : f32
    %176 = vector.broadcast %cst_80 : f32 to vector<1x8x1xf32>
    %177 = arith.divf %175, %176 : vector<1x8x1xf32>
    %178 = arith.mulf %173, %173 : vector<2x8x256xf32>
    %cst_81 = arith.constant dense<0.000000e+00> : vector<8xf32>
    %179 = vector.multi_reduction <add>, %178, %cst_81 [0, 2] : vector<2x8x256xf32> to vector<8xf32>
    %180 = vector.shape_cast %179 : vector<8xf32> to vector<1x8x1xf32>
    %cst_82 = arith.constant 5.120000e+02 : f32
    %181 = vector.broadcast %cst_82 : f32 to vector<1x8x1xf32>
    %182 = arith.divf %180, %181 : vector<1x8x1xf32>
    %183 = arith.mulf %177, %177 : vector<1x8x1xf32>
    %184 = arith.subf %182, %183 : vector<1x8x1xf32>
    %185 = vector.extract_strided_slice %0 {offsets = [0, 1], sizes = [8, 1], strides = [1, 1]} : vector<8x3xf32> to vector<8x1xf32>
    %186 = vector.shape_cast %185 : vector<8x1xf32> to vector<1x8x1xf32>
    %187 = vector.extract_strided_slice %0 {offsets = [0, 2], sizes = [8, 1], strides = [1, 1]} : vector<8x3xf32> to vector<8x1xf32>
    %188 = vector.shape_cast %187 : vector<8x1xf32> to vector<1x8x1xf32>
    %189 = vector.broadcast %177 : vector<1x8x1xf32> to vector<2x8x256xf32>
    %190 = arith.subf %173, %189 : vector<2x8x256xf32>
    %cst_83 = arith.constant 9.99999974E-6 : f32
    %191 = vector.broadcast %cst_83 : f32 to vector<1x8x1xf32>
    %192 = arith.addf %184, %191 : vector<1x8x1xf32>
    %193 = math.rsqrt %192 : vector<1x8x1xf32>
    %194 = vector.broadcast %193 : vector<1x8x1xf32> to vector<2x8x256xf32>
    %195 = arith.mulf %190, %194 : vector<2x8x256xf32>
    %196 = vector.broadcast %186 : vector<1x8x1xf32> to vector<2x8x256xf32>
    %197 = arith.mulf %195, %196 : vector<2x8x256xf32>
    %198 = vector.broadcast %188 : vector<1x8x1xf32> to vector<2x8x256xf32>
    %199 = arith.addf %197, %198 : vector<2x8x256xf32>
    %cst_84 = arith.constant 0.000000e+00 : f32
    %200 = vector.broadcast %cst_84 : f32 to vector<2x8x256xf32>
    %201 = arith.maximumf %199, %200 : vector<2x8x256xf32>
    %c0_85 = arith.constant 0 : index
    %c0_86 = arith.constant 0 : index
    %c0_87 = arith.constant 0 : index
    %202 = vector.load %arg6[%c0_85, %c0_86, %c0_87] : memref<2x8x256xf32, #tpu.memory_space<vmem>>, vector<2x8x256xf32>
    tpu.vector_store %arg6[%c0_85, %c0_86, %c0_87], %201 {strides = array<i32>} : memref<2x8x256xf32, #tpu.memory_space<vmem>>, vector<2x8x256xf32>,
    return
  }
}

</mosaic_0001>

<llo_original>
// kernel: tpu_custom_call.1
$region0: #{tpu_custom_call.1}
  #allocation0 [shape = 'u32[]', space=smem, size = 0x4, offset = 0x4, fixed_abs, tag = 'smem constant byte address 0x4 - core index']
  #allocation1 [shape = 'u32[144,128]{1,0:T(1,128)}', space=vmem, size = 0x12000, scoped, tag = 'internal scratch']
  %s0 = inlined_call_operand.hbm [shape: f32[2,8,16,16], index: 0, kind: input, shape index: {}]
  %s1 = inlined_call_operand.vmem [shape: f32[2,8,256], index: 1, kind: input, shape index: {}]
  %s2 = inlined_call_operand.hbm [shape: f32[50,256], index: 2, kind: input, shape index: {}]
  %s3 = inlined_call_operand.vmem [shape: f32[32,8], index: 3, kind: input, shape index: {}]
  %s4 = inlined_call_operand.vmem [shape: f32[8,8], index: 4, kind: input, shape index: {}]
  %s5 = inlined_call_operand.vmem [shape: f32[8,3], index: 5, kind: input, shape index: {}]
  %s6 = inlined_call_operand.hbm [shape: f32[2,8,256], index: 6, kind: output, shape index: {}]
  %s7 = sld [smem:[#allocation0]]
  $region42: #{tpu_custom_call.1} parent=0
    _
  %s9 = ssub.s32 1, %s7
  %s10 = scalar_select 0, %s9, %s7
  $region1: #{tpu_custom_call.1} parent=0
    #allocation2 [shape = 'u8[131072]{0}', space=vmem, size = 0x20000, scoped, tag = 'input window, operand 0, single buffered']
    #allocation3 [shape = 's32[1]{0}', space=sflag, size = 0x4, scoped, tag = 'scoped memory for tpu_custom_call.1']
    #allocation4 [shape = 's32[1]{0}', space=sflag, size = 0x4, scoped, tag = 'scoped memory for tpu_custom_call.1']
    #allocation5 [shape = 'u8[57344]{0}', space=vmem, size = 0xe000, scoped, tag = 'input window, operand 2, single buffered']
    #allocation6 [shape = 's32[1]{0}', space=sflag, size = 0x4, scoped, tag = 'scoped memory for tpu_custom_call.1']
    #allocation7 [shape = 'u8[16384]{0}', space=vmem, size = 0x4000, scoped, tag = 'output window, operand 0, single buffered']
    %11 = vsyncpa [#allocation3], 0
    %12 = vsyncpa [#allocation6], 0
    %13 = vsyncpa [#allocation4], 0
    // Predicated region
    $region2: #{tpu_custom_call.1} parent=1 // pred_check
      _
    $region3: #{tpu_custom_call.1} parent=1 // pred_check_branch
      %15 = sbr.rel (0) target = $region5
    $region4: #{tpu_custom_call.1} parent=1 // pred_region
      %s17 = ssub.s32 4096, 4096
      %18 = vsyncadd [#allocation3], %s17
      %s19 = sshll.u32 [#allocation2], 4
      %s20 = int_to_ptr.vmem [resolvable:$true] %s19
      %25 = dma.hbm_to_vmem [thread:$0]  %s0, 4096, %s20, [#allocation3], 128, 128, 8
    $region5: #{tpu_custom_call.1} parent=1 // pred_fallthru
      _
    // Predicated region
    $region6: #{tpu_custom_call.1} parent=1 // pred_check
      _
    $region7: #{tpu_custom_call.1} parent=1 // pred_check_branch
      %27 = sbr.rel (0) target = $region9
    $region8: #{tpu_custom_call.1} parent=1 // pred_region
      _
    $region9: #{tpu_custom_call.1} parent=1 // pred_fallthru
      _
    // Predicated region
    $region10: #{tpu_custom_call.1} parent=1 // pred_check
      _
    $region11: #{tpu_custom_call.1} parent=1 // pred_check_branch
      %29 = sbr.rel (0) target = $region13
    $region12: #{tpu_custom_call.1} parent=1 // pred_region
      %s31 = ssub.s32 1792, 1792
      %32 = vsyncadd [#allocation6], %s31
      %s33 = sshll.u32 [#allocation5], 4
      %s34 = int_to_ptr.vmem [resolvable:$true] %s33
      %39 = dma.hbm_to_vmem [thread:$0]  %s2, 1792, %s34, [#allocation6], 256, 256, 16
    $region13: #{tpu_custom_call.1} parent=1 // pred_fallthru
      _
    // Predicated region
    $region14: #{tpu_custom_call.1} parent=1 // pred_check
      _
    $region15: #{tpu_custom_call.1} parent=1 // pred_check_branch
      %41 = sbr.rel (0) target = $region17
    $region16: #{tpu_custom_call.1} parent=1 // pred_region
      _
    $region17: #{tpu_custom_call.1} parent=1 // pred_fallthru
      _
    // Predicated region
    $region18: #{tpu_custom_call.1} parent=1 // pred_check
      _
    $region19: #{tpu_custom_call.1} parent=1 // pred_check_branch
      %43 = sbr.rel (0) target = $region21
    $region20: #{tpu_custom_call.1} parent=1 // pred_region
      _
    $region21: #{tpu_custom_call.1} parent=1 // pred_fallthru
      _
    // Predicated region
    $region22: #{tpu_custom_call.1} parent=1 // pred_check
      _
    $region23: #{tpu_custom_call.1} parent=1 // pred_check_branch
      %45 = sbr.rel (0) target = $region25
    $region24: #{tpu_custom_call.1} parent=1 // pred_region
      _
    $region25: #{tpu_custom_call.1} parent=1 // pred_fallthru
      _
    // Predicated region
    $region26: #{tpu_custom_call.1} parent=1 // pred_check
      _
    $region27: #{tpu_custom_call.1} parent=1 // pred_check_branch
      %47 = sbr.rel (0) target = $region29
    $region28: #{tpu_custom_call.1} parent=1 // pred_region
      %48 = dma.done [#allocation3], 4096
    $region29: #{tpu_custom_call.1} parent=1 // pred_fallthru
      _
    // Predicated region
    $region30: #{tpu_custom_call.1} parent=1 // pred_check
      _
    $region31: #{tpu_custom_call.1} parent=1 // pred_check_branch
      %50 = sbr.rel (0) target = $region33
    $region32: #{tpu_custom_call.1} parent=1 // pred_region
      %51 = dma.done [#allocation6], 1792
    $region33: #{tpu_custom_call.1} parent=1 // pred_fallthru
      _
    %v52 = vld [vmem:[%s5] sm:$0xff]
    %v53 = vld [vmem:[#allocation5] sm:$0xff]
    %v54 = vld [vmem:[#allocation5 + $0x8] sm:$0xff]
    %v55 = vld [vmem:[#allocation5 + $0x10] sm:$0xff]
    %v56 = vld [vmem:[#allocation5 + $0x18] sm:$0xff]
    %v57 = vld [vmem:[#allocation5 + $0x20] sm:$0xff]
    %v58 = vld [vmem:[#allocation5 + $0x28] sm:$0xff]
    %v59 = vld [vmem:[#allocation5 + $0x30] sm:$0xff]
    %v60 = vld [vmem:[#allocation5 + $0x38] sm:$0xff]
    %v61 = vld [vmem:[#allocation5 + $0x40] sm:$0xff]
    %v62 = vld [vmem:[#allocation5 + $0x48] sm:$0xff]
    %v63 = vld [vmem:[#allocation5 + $0x50] sm:$0xff]
    %v64 = vld [vmem:[#allocation5 + $0x58] sm:$0xff]
    %v65 = vld [vmem:[#allocation5 + $0x60] sm:$0x3]
    %v66 = vld [vmem:[#allocation5 + $0x68] sm:$0x3]
    %v67 = vld [vmem:[%s3] sm:$0xff]
    %v68 = vld [vmem:[%s3 + $0x8] sm:$0xff]
    %v69 = vld [vmem:[%s3 + $0x10] sm:$0xff]
    %v70 = vld [vmem:[%s3 + $0x18] sm:$0xff]
    %v71 = vld [vmem:[%s4] sm:$0xff]
    %v72 = vld [vmem:[#allocation2] sm:$0xff]
    %v73 = vld [vmem:[#allocation2 + $0x8] sm:$0xff]
    %v74 = vld [vmem:[#allocation2 + $0x10] sm:$0xff]
    %v75 = vld [vmem:[#allocation2 + $0x18] sm:$0xff]
    %v76 = vld [vmem:[#allocation2 + $0x20] sm:$0xff]
    %v77 = vld [vmem:[#allocation2 + $0x28] sm:$0xff]
    %v78 = vld [vmem:[#allocation2 + $0x30] sm:$0xff]
    %v79 = vld [vmem:[#allocation2 + $0x38] sm:$0xff]
    %v80 = vld [vmem:[#allocation2 + $0x40] sm:$0xff]
    %v81 = vld [vmem:[#allocation2 + $0x48] sm:$0xff]
    %v82 = vld [vmem:[#allocation2 + $0x50] sm:$0xff]
    %v83 = vld [vmem:[#allocation2 + $0x58] sm:$0xff]
    %v84 = vld [vmem:[#allocation2 + $0x60] sm:$0xff]
    %v85 = vld [vmem:[#allocation2 + $0x68] sm:$0xff]
    %v86 = vld [vmem:[#allocation2 + $0x70] sm:$0xff]
    %v87 = vld [vmem:[#allocation2 + $0x78] sm:$0xff]
    %vm88 = vcmask 130048
    %v89 = vsel %vm88, %v72, -inf
    %v90 = vsel %vm88, %v73, -inf
    %v91 = vmax.f32 %v89, %v90
    %v92 = vrot.slane %v91, 4
    %v93 = vmax.f32 %v91, %v92
    %v94 = vrot.slane %v93, 2
    %v95 = vmax.f32 %v93, %v94
    %v96 = vrot.slane %v95, 1
    %v97 = vmax.f32 %v95, %v96
    %v98 = vsel %vm88, %v74, -inf
    %v99 = vsel %vm88, %v75, -inf
    %v100 = vmax.f32 %v98, %v99
    %v101 = vrot.slane %v100, 4
    %v102 = vmax.f32 %v100, %v101
    %v103 = vrot.slane %v102, 2
    %v104 = vmax.f32 %v102, %v103
    %v105 = vrot.slane %v104, 1
    %v106 = vmax.f32 %v104, %v105
    %v107 = vsel %vm88, %v76, -inf
    %v108 = vsel %vm88, %v77, -inf
    %v109 = vmax.f32 %v107, %v108
    %v110 = vrot.slane %v109, 4
    %v111 = vmax.f32 %v109, %v110
    %v112 = vrot.slane %v111, 2
    %v113 = vmax.f32 %v111, %v112
    %v114 = vrot.slane %v113, 1
    %v115 = vmax.f32 %v113, %v114
    %v116 = vsel %vm88, %v78, -inf
    %v117 = vsel %vm88, %v79, -inf
    %v118 = vmax.f32 %v116, %v117
    %v119 = vrot.slane %v118, 4
    %v120 = vmax.f32 %v118, %v119
    %v121 = vrot.slane %v120, 2
    %v122 = vmax.f32 %v120, %v121
    %v123 = vrot.slane %v122, 1
    %v124 = vmax.f32 %v122, %v123
    %v125 = vsel %vm88, %v80, -inf
    %v126 = vsel %vm88, %v81, -inf
    %v127 = vmax.f32 %v125, %v126
    %v128 = vrot.slane %v127, 4
    %v129 = vmax.f32 %v127, %v128
    %v130 = vrot.slane %v129, 2
    %v131 = vmax.f32 %v129, %v130
    %v132 = vrot.slane %v131, 1
    %v133 = vmax.f32 %v131, %v132
    %v134 = vsel %vm88, %v82, -inf
    %v135 = vsel %vm88, %v83, -inf
    %v136 = vmax.f32 %v134, %v135
    %v137 = vrot.slane %v136, 4
    %v138 = vmax.f32 %v136, %v137
    %v139 = vrot.slane %v138, 2
    %v140 = vmax.f32 %v138, %v139
    %v141 = vrot.slane %v140, 1
    %v142 = vmax.f32 %v140, %v141
    %v143 = vsel %vm88, %v84, -inf
    %v144 = vsel %vm88, %v85, -inf
    %v145 = vmax.f32 %v143, %v144
    %v146 = vrot.slane %v145, 4
    %v147 = vmax.f32 %v145, %v146
    %v148 = vrot.slane %v147, 2
    %v149 = vmax.f32 %v147, %v148
    %v150 = vrot.slane %v149, 1
    %v151 = vmax.f32 %v149, %v150
    %v152 = vsel %vm88, %v86, -inf
    %v153 = vsel %vm88, %v87, -inf
    %v154 = vmax.f32 %v152, %v153
    %v155 = vrot.slane %v154, 4
    %v156 = vmax.f32 %v154, %v155
    %v157 = vrot.slane %v156, 2
    %v158 = vmax.f32 %v156, %v157
    %v159 = vrot.slane %v158, 1
    %v160 = vmax.f32 %v158, %v159
    %vm169 = vcmask 1041409
    %v170 = vsel %vm169, %v106, %v97
    %vm171 = vcmask 1042434
    %v172 = vsel %vm171, %v115, %v170
    %vm173 = vcmask 1043459
    %v174 = vsel %vm173, %v124, %v172
    %vm175 = vcmask 1044484
    %v176 = vsel %vm175, %v133, %v174
    %vm177 = vcmask 1045509
    %v178 = vsel %vm177, %v142, %v176
    %vm179 = vcmask 1046534
    %v180 = vsel %vm179, %v151, %v178
    %vm181 = vcmask 1047559
    %v182 = vsel %vm181, %v160, %v180
    %v184 = vsel %vm88, %v182, -inf
    %185 = vmax.xlane.f32.xlu0 %v184
    %v186 = vpop.xlane.xlu0 %185
    %v188 = vlaneseq
    %v189 = vand.u32 %v188, 127
    %v190 = vlaneseq
    %v191 = vshrl.u32 %v190, 7
    %v192 = vsub.s32 %v189, %v191
    %v193 = vrot.slane %v186, %v192
    %vm194 = vcmask 64512
    %v195 = vsel %vm194, %v193, 0
    %197 = vmatprep.subr.mxu0 0.0
    %198 = vmatpush1.msra.mxu0 %v67
    %199 = vmatprep.subr.mxu0 0.0
    %200 = vmatpush1.msra.mxu0 0.0
    %201 = vmatprep.subr.mxu0 0.0
    %202 = vmatpush1.msra.mxu0 0.0
    %203 = vmatprep.subr.mxu0 0.0
    %204 = vmatpush1.msra.mxu0 0.0
    %205 = vmatprep.subr.mxu0 0.0
    %206 = vmatpush1.msra.mxu0 0.0
    %207 = vmatprep.subr.mxu0 0.0
    %208 = vmatpush1.msra.mxu0 0.0
    %209 = vmatprep.subr.mxu0 0.0
    %210 = vmatpush1.msra.mxu0 0.0
    %211 = vmatprep.subr.mxu0 0.0
    %212 = vmatpush1.msra.mxu0 0.0
    %213 = vmatprep.subr.mxu0 0.0
    %214 = vmatpush1.msra.mxu0 0.0
    %215 = vmatprep.subr.mxu0 0.0
    %216 = vmatpush1.msra.mxu0 0.0
    %217 = vmatprep.subr.mxu0 0.0
    %218 = vmatpush1.msra.mxu0 0.0
    %219 = vmatprep.subr.mxu0 0.0
    %220 = vmatpush1.msra.mxu0 0.0
    %221 = vmatprep.subr.mxu0 0.0
    %222 = vmatpush1.msra.mxu0 0.0
    %223 = vmatprep.subr.mxu0 0.0
    %224 = vmatpush1.msra.mxu0 0.0
    %225 = vmatprep.subr.mxu0 0.0
    %226 = vmatpush1.msra.mxu0 0.0
    %227 = vmatprep.subr.mxu0 0.0
    %228 = vmatpush1.msra.mxu0 0.0
    %229 = vmatprep.subr.mxu0 0.0
    %230 = vmatpush1.msra.mxu0 0.0
    %231 = vmatprep.subr.mxu0 0.0
    %232 = vmatpush1.msra.mxu0 0.0
    %233 = vmatprep.subr.mxu0 0.0
    %234 = vmatpush1.msra.mxu0 0.0
    %235 = vmatprep.subr.mxu0 0.0
    %236 = vmatpush1.msra.mxu0 0.0
    %237 = vmatprep.subr.mxu0 0.0
    %238 = vmatpush1.msra.mxu0 0.0
    %239 = vmatprep.subr.mxu0 0.0
    %240 = vmatpush1.msra.mxu0 0.0
    %241 = vmatprep.subr.mxu0 0.0
    %242 = vmatpush1.msra.mxu0 0.0
    %243 = vmatprep.subr.mxu0 0.0
    %244 = vmatpush1.msra.mxu0 0.0
    %245 = vmatprep.subr.mxu0 0.0
    %246 = vmatpush1.msra.mxu0 0.0
    %247 = vmatprep.subr.mxu0 0.0
    %248 = vmatpush1.msra.mxu0 0.0
    %249 = vmatprep.subr.mxu0 0.0
    %250 = vmatpush1.msra.mxu0 0.0
    %251 = vmatprep.subr.mxu0 0.0
    %252 = vmatpush1.msra.mxu0 0.0
    %253 = vmatprep.subr.mxu0 0.0
    %254 = vmatpush1.msra.mxu0 0.0
    %255 = vmatprep.subr.mxu0 0.0
    %256 = vmatpush1.msra.mxu0 0.0
    %257 = vmatprep.subr.mxu0 0.0
    %258 = vmatpush1.msra.mxu0 0.0
    %259 = vmatprep.subr.mxu0 0.0
    %260 = vmatpush1.msra.mxu0 0.0
    %261 = vmatprep.mubr.f32.mxu0 0.0
    %262 = vmatmul.mubr.f32.gmra.mrb[0].mxu0 %v195
    %v263 = vpop.f32.mrb[0].mxu0
    %v264 = vadd.f32 0.0, %v263
    %v265 = vpop.f32.mrb[0].mxu0
    %266 = vdwg.mxu0
    %v267 = vrot.slane %v89, 4
    %v268 = vmax.f32 %v89, %v267
    %v269 = vrot.slane %v268, 2
    %v270 = vmax.f32 %v268, %v269
    %v271 = vrot.slane %v270, 1
    %v272 = vmax.f32 %v270, %v271
    %v273 = vrot.slane %v98, 4
    %v274 = vmax.f32 %v98, %v273
    %v275 = vrot.slane %v274, 2
    %v276 = vmax.f32 %v274, %v275
    %v277 = vrot.slane %v276, 1
    %v278 = vmax.f32 %v276, %v277
    %v279 = vrot.slane %v107, 4
    %v280 = vmax.f32 %v107, %v279
    %v281 = vrot.slane %v280, 2
    %v282 = vmax.f32 %v280, %v281
    %v283 = vrot.slane %v282, 1
    %v284 = vmax.f32 %v282, %v283
    %v285 = vrot.slane %v116, 4
    %v286 = vmax.f32 %v116, %v285
    %v287 = vrot.slane %v286, 2
    %v288 = vmax.f32 %v286, %v287
    %v289 = vrot.slane %v288, 1
    %v290 = vmax.f32 %v288, %v289
    %v291 = vrot.slane %v125, 4
    %v292 = vmax.f32 %v125, %v291
    %v293 = vrot.slane %v292, 2
    %v294 = vmax.f32 %v292, %v293
    %v295 = vrot.slane %v294, 1
    %v296 = vmax.f32 %v294, %v295
    %v297 = vrot.slane %v134, 4
    %v298 = vmax.f32 %v134, %v297
    %v299 = vrot.slane %v298, 2
    %v300 = vmax.f32 %v298, %v299
    %v301 = vrot.slane %v300, 1
    %v302 = vmax.f32 %v300, %v301
    %v303 = vrot.slane %v143, 4
    %v304 = vmax.f32 %v143, %v303
    %v305 = vrot.slane %v304, 2
    %v306 = vmax.f32 %v304, %v305
    %v307 = vrot.slane %v306, 1
    %v308 = vmax.f32 %v306, %v307
    %v309 = vrot.slane %v152, 4
    %v310 = vmax.f32 %v152, %v309
    %v311 = vrot.slane %v310, 2
    %v312 = vmax.f32 %v310, %v311
    %v313 = vrot.slane %v312, 1
    %v314 = vmax.f32 %v312, %v313
    %v315 = vrot.slane %v90, 4
    %v316 = vmax.f32 %v90, %v315
    %v317 = vrot.slane %v316, 2
    %v318 = vmax.f32 %v316, %v317
    %v319 = vrot.slane %v318, 1
    %v320 = vmax.f32 %v318, %v319
    %v321 = vrot.slane %v99, 4
    %v322 = vmax.f32 %v99, %v321
    %v323 = vrot.slane %v322, 2
    %v324 = vmax.f32 %v322, %v323
    %v325 = vrot.slane %v324, 1
    %v326 = vmax.f32 %v324, %v325
    %v327 = vrot.slane %v108, 4
    %v328 = vmax.f32 %v108, %v327
    %v329 = vrot.slane %v328, 2
    %v330 = vmax.f32 %v328, %v329
    %v331 = vrot.slane %v330, 1
    %v332 = vmax.f32 %v330, %v331
    %v333 = vrot.slane %v117, 4
    %v334 = vmax.f32 %v117, %v333
    %v335 = vrot.slane %v334, 2
    %v336 = vmax.f32 %v334, %v335
    %v337 = vrot.slane %v336, 1
    %v338 = vmax.f32 %v336, %v337
    %v339 = vrot.slane %v126, 4
    %v340 = vmax.f32 %v126, %v339
    %v341 = vrot.slane %v340, 2
    %v342 = vmax.f32 %v340, %v341
    %v343 = vrot.slane %v342, 1
    %v344 = vmax.f32 %v342, %v343
    %v345 = vrot.slane %v135, 4
    %v346 = vmax.f32 %v135, %v345
    %v347 = vrot.slane %v346, 2
    %v348 = vmax.f32 %v346, %v347
    %v349 = vrot.slane %v348, 1
    %v350 = vmax.f32 %v348, %v349
    %v351 = vrot.slane %v144, 4
    %v352 = vmax.f32 %v144, %v351
    %v353 = vrot.slane %v352, 2
    %v354 = vmax.f32 %v352, %v353
    %v355 = vrot.slane %v354, 1
    %v356 = vmax.f32 %v354, %v355
    %v357 = vrot.slane %v153, 4
    %v358 = vmax.f32 %v153, %v357
    %v359 = vrot.slane %v358, 2
    %v360 = vmax.f32 %v358, %v359
    %v361 = vrot.slane %v360, 1
    %v362 = vmax.f32 %v360, %v361
    %v379 = vrot.slane %v278, 7
    %v380 = vsel %vm169, %v379, %v272
    %v381 = vrot.slane %v284, 6
    %v382 = vsel %vm171, %v381, %v380
    %v383 = vrot.slane %v290, 5
    %v384 = vsel %vm173, %v383, %v382
    %v385 = vrot.slane %v296, 4
    %v386 = vsel %vm175, %v385, %v384
    %v387 = vrot.slane %v302, 3
    %v388 = vsel %vm177, %v387, %v386
    %v389 = vrot.slane %v308, 2
    %v390 = vsel %vm179, %v389, %v388
    %v391 = vrot.slane %v314, 1
    %v392 = vsel %vm181, %v391, %v390
    %v393 = vrot.slane %v326, 7
    %v394 = vsel %vm169, %v393, %v320
    %v395 = vrot.slane %v332, 6
    %v396 = vsel %vm171, %v395, %v394
    %v397 = vrot.slane %v338, 5
    %v398 = vsel %vm173, %v397, %v396
    %v399 = vrot.slane %v344, 4
    %v400 = vsel %vm175, %v399, %v398
    %v401 = vrot.slane %v350, 3
    %v402 = vsel %vm177, %v401, %v400
    %v403 = vrot.slane %v356, 2
    %v404 = vsel %vm179, %v403, %v402
    %v405 = vrot.slane %v362, 1
    %v406 = vsel %vm181, %v405, %v404
    %v409 = vsel %vm194, %v392, -inf
    %410 = vmax.xlane.f32.xlu0 %v409
    %v411 = vpop.xlane.xlu0 %410
    %v412 = vsel %vm194, %v406, -inf
    %413 = vmax.xlane.f32.xlu0 %v412
    %v414 = vpop.xlane.xlu0 %413
    %vm415 = vcmask 130112
    %v416 = vsel %vm415, %v392, -inf
    %417 = vmax.xlane.f32.xlu0 %v416
    %v418 = vpop.xlane.xlu0 %417
    %v419 = vsel %vm415, %v406, -inf
    %420 = vmax.xlane.f32.xlu0 %v419
    %v421 = vpop.xlane.xlu0 %420
    %v424 = vlaneseq
    %v425 = vshrl.u32 %v424, 7
    %v426 = vsub.s32 %v189, %v425
    %v427 = vrot.slane %v411, %v426
    %v428 = vlaneseq
    %v429 = vshrl.u32 %v428, 7
    %v430 = vsub.s32 %v189, %v429
    %v431 = vrot.slane %v414, %v430
    %v432 = vsel %vm169, %v431, %v427
    %v436 = vlaneseq
    %v437 = vshrl.u32 %v436, 7
    %v438 = vsub.s32 %v189, %v437
    %v439 = vrot.slane %v418, %v438
    %v440 = vlaneseq
    %v441 = vshrl.u32 %v440, 7
    %v442 = vsub.s32 %v189, %v441
    %v443 = vrot.slane %v421, %v442
    %v444 = vsel %vm173, %v443, %v439
    %vm446 = vcmask 1041408
    %v447 = vsel %vm446, %v432, %v444
    %v449 = vsel %vm194, %v447, 0
    %451 = vmatprep.subr.mxu0 0.0
    %452 = vmatpush1.msra.mxu0 %v68
    %453 = vmatprep.subr.mxu0 0.0
    %454 = vmatpush1.msra.mxu0 0.0
    %455 = vmatprep.subr.mxu0 0.0
    %456 = vmatpush1.msra.mxu0 0.0
    %457 = vmatprep.subr.mxu0 0.0
    %458 = vmatpush1.msra.mxu0 0.0
    %459 = vmatprep.subr.mxu0 0.0
    %460 = vmatpush1.msra.mxu0 0.0
    %461 = vmatprep.subr.mxu0 0.0
    %462 = vmatpush1.msra.mxu0 0.0
    %463 = vmatprep.subr.mxu0 0.0
    %464 = vmatpush1.msra.mxu0 0.0
    %465 = vmatprep.subr.mxu0 0.0
    %466 = vmatpush1.msra.mxu0 0.0
    %467 = vmatprep.subr.mxu0 0.0
    %468 = vmatpush1.msra.mxu0 0.0
    %469 = vmatprep.subr.mxu0 0.0
    %470 = vmatpush1.msra.mxu0 0.0
    %471 = vmatprep.subr.mxu0 0.0
    %472 = vmatpush1.msra.mxu0 0.0
    %473 = vmatprep.subr.mxu0 0.0
    %474 = vmatpush1.msra.mxu0 0.0
    %475 = vmatprep.subr.mxu0 0.0
    %476 = vmatpush1.msra.mxu0 0.0
    %477 = vmatprep.subr.mxu0 0.0
    %478 = vmatpush1.msra.mxu0 0.0
    %479 = vmatprep.subr.mxu0 0.0
    %480 = vmatpush1.msra.mxu0 0.0
    %481 = vmatprep.subr.mxu0 0.0
    %482 = vmatpush1.msra.mxu0 0.0
    %483 = vmatprep.subr.mxu0 0.0
    %484 = vmatpush1.msra.mxu0 0.0
    %485 = vmatprep.subr.mxu0 0.0
    %486 = vmatpush1.msra.mxu0 0.0
    %487 = vmatprep.subr.mxu0 0.0
    %488 = vmatpush1.msra.mxu0 0.0
    %489 = vmatprep.subr.mxu0 0.0
    %490 = vmatpush1.msra.mxu0 0.0
    %491 = vmatprep.subr.mxu0 0.0
    %492 = vmatpush1.msra.mxu0 0.0
    %493 = vmatprep.subr.mxu0 0.0
    %494 = vmatpush1.msra.mxu0 0.0
    %495 = vmatprep.subr.mxu0 0.0
    %496 = vmatpush1.msra.mxu0 0.0
    %497 = vmatprep.subr.mxu0 0.0
    %498 = vmatpush1.msra.mxu0 0.0
    %499 = vmatprep.subr.mxu0 0.0
    %500 = vmatpush1.msra.mxu0 0.0
    %501 = vmatprep.subr.mxu0 0.0
    %502 = vmatpush1.msra.mxu0 0.0
    %503 = vmatprep.subr.mxu0 0.0
    %504 = vmatpush1.msra.mxu0 0.0
    %505 = vmatprep.subr.mxu0 0.0
    %506 = vmatpush1.msra.mxu0 0.0
    %507 = vmatprep.subr.mxu0 0.0
    %508 = vmatpush1.msra.mxu0 0.0
    %509 = vmatprep.subr.mxu0 0.0
    %510 = vmatpush1.msra.mxu0 0.0
    %511 = vmatprep.subr.mxu0 0.0
    %512 = vmatpush1.msra.mxu0 0.0
    %513 = vmatprep.subr.mxu0 0.0
    %514 = vmatpush1.msra.mxu0 0.0
    %515 = vmatprep.mubr.f32.mxu0 0.0
    %516 = vmatmul.mubr.f32.gmra.mrb[0].mxu0 %v449
    %v517 = vpop.f32.mrb[0].mxu0
    %v518 = vadd.f32 0.0, %v517
    %v519 = vpop.f32.mrb[0].mxu0
    %520 = vdwg.mxu0
    %vm521 = vcmask 128000
    %v522 = vsel %vm521, %v72, -inf
    %v523 = vrot.slane %v522, 4
    %v524 = vmax.f32 %v522, %v523
    %v525 = vrot.slane %v524, 2
    %v526 = vmax.f32 %v524, %v525
    %v527 = vrot.slane %v526, 1
    %v528 = vmax.f32 %v526, %v527
    %v529 = vsel %vm521, %v74, -inf
    %v530 = vrot.slane %v529, 4
    %v531 = vmax.f32 %v529, %v530
    %v532 = vrot.slane %v531, 2
    %v533 = vmax.f32 %v531, %v532
    %v534 = vrot.slane %v533, 1
    %v535 = vmax.f32 %v533, %v534
    %v536 = vsel %vm521, %v76, -inf
    %v537 = vrot.slane %v536, 4
    %v538 = vmax.f32 %v536, %v537
    %v539 = vrot.slane %v538, 2
    %v540 = vmax.f32 %v538, %v539
    %v541 = vrot.slane %v540, 1
    %v542 = vmax.f32 %v540, %v541
    %v543 = vsel %vm521, %v78, -inf
    %v544 = vrot.slane %v543, 4
    %v545 = vmax.f32 %v543, %v544
    %v546 = vrot.slane %v545, 2
    %v547 = vmax.f32 %v545, %v546
    %v548 = vrot.slane %v547, 1
    %v549 = vmax.f32 %v547, %v548
    %v550 = vsel %vm521, %v80, -inf
    %v551 = vrot.slane %v550, 4
    %v552 = vmax.f32 %v550, %v551
    %v553 = vrot.slane %v552, 2
    %v554 = vmax.f32 %v552, %v553
    %v555 = vrot.slane %v554, 1
    %v556 = vmax.f32 %v554, %v555
    %v557 = vsel %vm521, %v82, -inf
    %v558 = vrot.slane %v557, 4
    %v559 = vmax.f32 %v557, %v558
    %v560 = vrot.slane %v559, 2
    %v561 = vmax.f32 %v559, %v560
    %v562 = vrot.slane %v561, 1
    %v563 = vmax.f32 %v561, %v562
    %v564 = vsel %vm521, %v84, -inf
    %v565 = vrot.slane %v564, 4
    %v566 = vmax.f32 %v564, %v565
    %v567 = vrot.slane %v566, 2
    %v568 = vmax.f32 %v566, %v567
    %v569 = vrot.slane %v568, 1
    %v570 = vmax.f32 %v568, %v569
    %v571 = vsel %vm521, %v86, -inf
    %v572 = vrot.slane %v571, 4
    %v573 = vmax.f32 %v571, %v572
    %v574 = vrot.slane %v573, 2
    %v575 = vmax.f32 %v573, %v574
    %v576 = vrot.slane %v575, 1
    %v577 = vmax.f32 %v575, %v576
    %vm578 = vcmask 130053
    %v579 = vsel %vm578, %v72, -inf
    %vm580 = vcmask 124928
    %v581 = vsel %vm580, %v73, -inf
    %v582 = vmax.f32 %v579, %v581
    %v583 = vrot.slane %v582, 4
    %v584 = vmax.f32 %v582, %v583
    %v585 = vrot.slane %v584, 2
    %v586 = vmax.f32 %v584, %v585
    %v587 = vrot.slane %v586, 1
    %v588 = vmax.f32 %v586, %v587
    %v589 = vsel %vm578, %v74, -inf
    %v590 = vsel %vm580, %v75, -inf
    %v591 = vmax.f32 %v589, %v590
    %v592 = vrot.slane %v591, 4
    %v593 = vmax.f32 %v591, %v592
    %v594 = vrot.slane %v593, 2
    %v595 = vmax.f32 %v593, %v594
    %v596 = vrot.slane %v595, 1
    %v597 = vmax.f32 %v595, %v596
    %v598 = vsel %vm578, %v76, -inf
    %v599 = vsel %vm580, %v77, -inf
    %v600 = vmax.f32 %v598, %v599
    %v601 = vrot.slane %v600, 4
    %v602 = vmax.f32 %v600, %v601
    %v603 = vrot.slane %v602, 2
    %v604 = vmax.f32 %v602, %v603
    %v605 = vrot.slane %v604, 1
    %v606 = vmax.f32 %v604, %v605
    %v607 = vsel %vm578, %v78, -inf
    %v608 = vsel %vm580, %v79, -inf
    %v609 = vmax.f32 %v607, %v608
    %v610 = vrot.slane %v609, 4
    %v611 = vmax.f32 %v609, %v610
    %v612 = vrot.slane %v611, 2
    %v613 = vmax.f32 %v611, %v612
    %v614 = vrot.slane %v613, 1
    %v615 = vmax.f32 %v613, %v614
    %v616 = vsel %vm578, %v80, -inf
    %v617 = vsel %vm580, %v81, -inf
    %v618 = vmax.f32 %v616, %v617
    %v619 = vrot.slane %v618, 4
    %v620 = vmax.f32 %v618, %v619
    %v621 = vrot.slane %v620, 2
    %v622 = vmax.f32 %v620, %v621
    %v623 = vrot.slane %v622, 1
    %v624 = vmax.f32 %v622, %v623
    %v625 = vsel %vm578, %v82, -inf
    %v626 = vsel %vm580, %v83, -inf
    %v627 = vmax.f32 %v625, %v626
    %v628 = vrot.slane %v627, 4
    %v629 = vmax.f32 %v627, %v628
    %v630 = vrot.slane %v629, 2
    %v631 = vmax.f32 %v629, %v630
    %v632 = vrot.slane %v631, 1
    %v633 = vmax.f32 %v631, %v632
    %v634 = vsel %vm578, %v84, -inf
    %v635 = vsel %vm580, %v85, -inf
    %v636 = vmax.f32 %v634, %v635
    %v637 = vrot.slane %v636, 4
    %v638 = vmax.f32 %v636, %v637
    %v639 = vrot.slane %v638, 2
    %v640 = vmax.f32 %v638, %v639
    %v641 = vrot.slane %v640, 1
    %v642 = vmax.f32 %v640, %v641
    %v643 = vsel %vm578, %v86, -inf
    %v644 = vsel %vm580, %v87, -inf
    %v645 = vmax.f32 %v643, %v644
    %v646 = vrot.slane %v645, 4
    %v647 = vmax.f32 %v645, %v646
    %v648 = vrot.slane %v647, 2
    %v649 = vmax.f32 %v647, %v648
    %v650 = vrot.slane %v649, 1
    %v651 = vmax.f32 %v649, %v650
    %vm652 = vcmask 130050
    %v653 = vsel %vm652, %v73, -inf
    %v654 = vrot.slane %v653, 4
    %v655 = vmax.f32 %v653, %v654
    %v656 = vrot.slane %v655, 2
    %v657 = vmax.f32 %v655, %v656
    %v658 = vrot.slane %v657, 1
    %v659 = vmax.f32 %v657, %v658
    %v660 = vsel %vm652, %v75, -inf
    %v661 = vrot.slane %v660, 4
    %v662 = vmax.f32 %v660, %v661
    %v663 = vrot.slane %v662, 2
    %v664 = vmax.f32 %v662, %v663
    %v665 = vrot.slane %v664, 1
    %v666 = vmax.f32 %v664, %v665
    %v667 = vsel %vm652, %v77, -inf
    %v668 = vrot.slane %v667, 4
    %v669 = vmax.f32 %v667, %v668
    %v670 = vrot.slane %v669, 2
    %v671 = vmax.f32 %v669, %v670
    %v672 = vrot.slane %v671, 1
    %v673 = vmax.f32 %v671, %v672
    %v674 = vsel %vm652, %v79, -inf
    %v675 = vrot.slane %v674, 4
    %v676 = vmax.f32 %v674, %v675
    %v677 = vrot.slane %v676, 2
    %v678 = vmax.f32 %v676, %v677
    %v679 = vrot.slane %v678, 1
    %v680 = vmax.f32 %v678, %v679
    %v681 = vsel %vm652, %v81, -inf
    %v682 = vrot.slane %v681, 4
    %v683 = vmax.f32 %v681, %v682
    %v684 = vrot.slane %v683, 2
    %v685 = vmax.f32 %v683, %v684
    %v686 = vrot.slane %v685, 1
    %v687 = vmax.f32 %v685, %v686
    %v688 = vsel %vm652, %v83, -inf
    %v689 = vrot.slane %v688, 4
    %v690 = vmax.f32 %v688, %v689
    %v691 = vrot.slane %v690, 2
    %v692 = vmax.f32 %v690, %v691
    %v693 = vrot.slane %v692, 1
    %v694 = vmax.f32 %v692, %v693
    %v695 = vsel %vm652, %v85, -inf
    %v696 = vrot.slane %v695, 4
    %v697 = vmax.f32 %v695, %v696
    %v698 = vrot.slane %v697, 2
    %v699 = vmax.f32 %v697, %v698
    %v700 = vrot.slane %v699, 1
    %v701 = vmax.f32 %v699, %v700
    %v702 = vsel %vm652, %v87, -inf
    %v703 = vrot.slane %v702, 4
    %v704 = vmax.f32 %v702, %v703
    %v705 = vrot.slane %v704, 2
    %v706 = vmax.f32 %v704, %v705
    %v707 = vrot.slane %v706, 1
    %v708 = vmax.f32 %v706, %v707
    %v733 = vrot.slane %v535, 7
    %v734 = vsel %vm169, %v733, %v528
    %v735 = vrot.slane %v542, 6
    %v736 = vsel %vm171, %v735, %v734
    %v737 = vrot.slane %v549, 5
    %v738 = vsel %vm173, %v737, %v736
    %v739 = vrot.slane %v556, 4
    %v740 = vsel %vm175, %v739, %v738
    %v741 = vrot.slane %v563, 3
    %v742 = vsel %vm177, %v741, %v740
    %v743 = vrot.slane %v570, 2
    %v744 = vsel %vm179, %v743, %v742
    %v745 = vrot.slane %v577, 1
    %v746 = vsel %vm181, %v745, %v744
    %v747 = vrot.slane %v597, 7
    %v748 = vsel %vm169, %v747, %v588
    %v749 = vrot.slane %v606, 6
    %v750 = vsel %vm171, %v749, %v748
    %v751 = vrot.slane %v615, 5
    %v752 = vsel %vm173, %v751, %v750
    %v753 = vrot.slane %v624, 4
    %v754 = vsel %vm175, %v753, %v752
    %v755 = vrot.slane %v633, 3
    %v756 = vsel %vm177, %v755, %v754
    %v757 = vrot.slane %v642, 2
    %v758 = vsel %vm179, %v757, %v756
    %v759 = vrot.slane %v651, 1
    %v760 = vsel %vm181, %v759, %v758
    %v761 = vrot.slane %v666, 7
    %v762 = vsel %vm169, %v761, %v659
    %v763 = vrot.slane %v673, 6
    %v764 = vsel %vm171, %v763, %v762
    %v765 = vrot.slane %v680, 5
    %v766 = vsel %vm173, %v765, %v764
    %v767 = vrot.slane %v687, 4
    %v768 = vsel %vm175, %v767, %v766
    %v769 = vrot.slane %v694, 3
    %v770 = vsel %vm177, %v769, %v768
    %v771 = vrot.slane %v701, 2
    %v772 = vsel %vm179, %v771, %v770
    %v773 = vrot.slane %v708, 1
    %v774 = vsel %vm181, %v773, %v772
    %vm778 = vcmask 48128
    %v779 = vsel %vm778, %v746, -inf
    %780 = vmax.xlane.f32.xlu0 %v779
    %v781 = vpop.xlane.xlu0 %780
    %v782 = vsel %vm778, %v760, -inf
    %783 = vmax.xlane.f32.xlu0 %v782
    %v784 = vpop.xlane.xlu0 %783
    %v785 = vsel %vm778, %v774, -inf
    %786 = vmax.xlane.f32.xlu0 %v785
    %v787 = vpop.xlane.xlu0 %786
    %vm788 = vcmask 89128
    %v789 = vsel %vm788, %v746, -inf
    %790 = vmax.xlane.f32.xlu0 %v789
    %v791 = vpop.xlane.xlu0 %790
    %v792 = vsel %vm788, %v760, -inf
    %793 = vmax.xlane.f32.xlu0 %v792
    %v794 = vpop.xlane.xlu0 %793
    %v795 = vsel %vm788, %v774, -inf
    %796 = vmax.xlane.f32.xlu0 %v795
    %v797 = vpop.xlane.xlu0 %796
    %vm798 = vcmask 130128
    %v799 = vsel %vm798, %v746, -inf
    %800 = vmax.xlane.f32.xlu0 %v799
    %v801 = vpop.xlane.xlu0 %800
    %v802 = vsel %vm798, %v760, -inf
    %803 = vmax.xlane.f32.xlu0 %v802
    %v804 = vpop.xlane.xlu0 %803
    %v805 = vsel %vm798, %v774, -inf
    %806 = vmax.xlane.f32.xlu0 %v805
    %v807 = vpop.xlane.xlu0 %806
    %v811 = vlaneseq
    %v812 = vshrl.u32 %v811, 7
    %v813 = vsub.s32 %v189, %v812
    %v814 = vrot.slane %v781, %v813
    %v815 = vlaneseq
    %v816 = vshrl.u32 %v815, 7
    %v817 = vsub.s32 %v189, %v816
    %v818 = vrot.slane %v784, %v817
    %v819 = vlaneseq
    %v820 = vshrl.u32 %v819, 7
    %v821 = vsub.s32 %v189, %v820
    %v822 = vrot.slane %v787, %v821
    %v823 = vsel %vm169, %v818, %v814
    %v824 = vsel %vm171, %v822, %v823
    %v829 = vlaneseq
    %v830 = vshrl.u32 %v829, 7
    %v831 = vsub.s32 %v189, %v830
    %v832 = vrot.slane %v791, %v831
    %v833 = vlaneseq
    %v834 = vshrl.u32 %v833, 7
    %v835 = vsub.s32 %v189, %v834
    %v836 = vrot.slane %v794, %v835
    %v837 = vlaneseq
    %v838 = vshrl.u32 %v837, 7
    %v839 = vsub.s32 %v189, %v838
    %v840 = vrot.slane %v797, %v839
    %v841 = vsel %vm175, %v836, %v832
    %v842 = vsel %vm177, %v840, %v841
    %v847 = vlaneseq
    %v848 = vshrl.u32 %v847, 7
    %v849 = vsub.s32 %v189, %v848
    %v850 = vrot.slane %v801, %v849
    %v851 = vlaneseq
    %v852 = vshrl.u32 %v851, 7
    %v853 = vsub.s32 %v189, %v852
    %v854 = vrot.slane %v804, %v853
    %v855 = vlaneseq
    %v856 = vshrl.u32 %v855, 7
    %v857 = vsub.s32 %v189, %v856
    %v858 = vrot.slane %v807, %v857
    %v859 = vsel %vm181, %v854, %v850
    %vm861 = vcmask 1042432
    %v862 = vsel %vm861, %v824, %v842
    %vm863 = vcmask 1045504
    %v864 = vsel %vm863, %v862, %v859
    %v866 = vsel %vm194, %v864, 0
    %v868 = vsel %vm194, %v858, 0
    %870 = vmatprep.subr.mxu0 0.0
    %871 = vmatpush1.msra.mxu0 %v69
    %872 = vmatprep.subr.mxu0 0.0
    %873 = vmatpush1.msra.mxu0 0.0
    %874 = vmatprep.subr.mxu0 0.0
    %875 = vmatpush1.msra.mxu0 0.0
    %876 = vmatprep.subr.mxu0 0.0
    %877 = vmatpush1.msra.mxu0 0.0
    %878 = vmatprep.subr.mxu0 0.0
    %879 = vmatpush1.msra.mxu0 0.0
    %880 = vmatprep.subr.mxu0 0.0
    %881 = vmatpush1.msra.mxu0 0.0
    %882 = vmatprep.subr.mxu0 0.0
    %883 = vmatpush1.msra.mxu0 0.0
    %884 = vmatprep.subr.mxu0 0.0
    %885 = vmatpush1.msra.mxu0 0.0
    %886 = vmatprep.subr.mxu0 0.0
    %887 = vmatpush1.msra.mxu0 0.0
    %888 = vmatprep.subr.mxu0 0.0
    %889 = vmatpush1.msra.mxu0 0.0
    %890 = vmatprep.subr.mxu0 0.0
    %891 = vmatpush1.msra.mxu0 0.0
    %892 = vmatprep.subr.mxu0 0.0
    %893 = vmatpush1.msra.mxu0 0.0
    %894 = vmatprep.subr.mxu0 0.0
    %895 = vmatpush1.msra.mxu0 0.0
    %896 = vmatprep.subr.mxu0 0.0
    %897 = vmatpush1.msra.mxu0 0.0
    %898 = vmatprep.subr.mxu0 0.0
    %899 = vmatpush1.msra.mxu0 0.0
    %900 = vmatprep.subr.mxu0 0.0
    %901 = vmatpush1.msra.mxu0 0.0
    %902 = vmatprep.subr.mxu0 0.0
    %903 = vmatpush1.msra.mxu0 0.0
    %904 = vmatprep.subr.mxu0 0.0
    %905 = vmatpush1.msra.mxu0 0.0
    %906 = vmatprep.subr.mxu0 0.0
    %907 = vmatpush1.msra.mxu0 0.0
    %908 = vmatprep.subr.mxu0 0.0
    %909 = vmatpush1.msra.mxu0 0.0
    %910 = vmatprep.subr.mxu0 0.0
    %911 = vmatpush1.msra.mxu0 0.0
    %912 = vmatprep.subr.mxu0 0.0
    %913 = vmatpush1.msra.mxu0 0.0
    %914 = vmatprep.subr.mxu0 0.0
    %915 = vmatpush1.msra.mxu0 0.0
    %916 = vmatprep.subr.mxu0 0.0
    %917 = vmatpush1.msra.mxu0 0.0
    %918 = vmatprep.subr.mxu0 0.0
    %919 = vmatpush1.msra.mxu0 0.0
    %920 = vmatprep.subr.mxu0 0.0
    %921 = vmatpush1.msra.mxu0 0.0
    %922 = vmatprep.subr.mxu0 0.0
    %923 = vmatpush1.msra.mxu0 0.0
    %924 = vmatprep.subr.mxu0 0.0
    %925 = vmatpush1.msra.mxu0 0.0
    %926 = vmatprep.subr.mxu0 0.0
    %927 = vmatpush1.msra.mxu0 0.0
    %928 = vmatprep.subr.mxu0 0.0
    %929 = vmatpush1.msra.mxu0 0.0
    %930 = vmatprep.subr.mxu0 0.0
    %931 = vmatpush1.msra.mxu0 0.0
    %932 = vmatprep.subr.mxu0 0.0
    %933 = vmatpush1.msra.mxu0 0.0
    %934 = vmatprep.mubr.f32.mxu0 0.0
    %935 = vmatmul.mubr.f32.gmra.mrb[0].mxu0 %v866
    %v936 = vpop.f32.mrb[0].mxu0
    %v937 = vadd.f32 0.0, %v936
    %v938 = vpop.f32.mrb[0].mxu0
    %939 = vmatprep.mubr.f32.mxu0 0.0
    %940 = vmatmul.mubr.f32.gmra.mrb[0].mxu0 %v868
    %v941 = vpop.f32.mrb[0].mxu0
    %v942 = vadd.f32 0.0, %v941
    %v943 = vpop.f32.mrb[0].mxu0
    %944 = vdwg.mxu0
    %v945 = vsel %vm580, %v72, -inf
    %v946 = vrot.slane %v945, 4
    %v947 = vmax.f32 %v945, %v946
    %v948 = vrot.slane %v947, 2
    %v949 = vmax.f32 %v947, %v948
    %v950 = vrot.slane %v949, 1
    %v951 = vmax.f32 %v949, %v950
    %v952 = vsel %vm580, %v74, -inf
    %v953 = vrot.slane %v952, 4
    %v954 = vmax.f32 %v952, %v953
    %v955 = vrot.slane %v954, 2
    %v956 = vmax.f32 %v954, %v955
    %v957 = vrot.slane %v956, 1
    %v958 = vmax.f32 %v956, %v957
    %v959 = vsel %vm580, %v76, -inf
    %v960 = vrot.slane %v959, 4
    %v961 = vmax.f32 %v959, %v960
    %v962 = vrot.slane %v961, 2
    %v963 = vmax.f32 %v961, %v962
    %v964 = vrot.slane %v963, 1
    %v965 = vmax.f32 %v963, %v964
    %v966 = vsel %vm580, %v78, -inf
    %v967 = vrot.slane %v966, 4
    %v968 = vmax.f32 %v966, %v967
    %v969 = vrot.slane %v968, 2
    %v970 = vmax.f32 %v968, %v969
    %v971 = vrot.slane %v970, 1
    %v972 = vmax.f32 %v970, %v971
    %v973 = vsel %vm580, %v80, -inf
    %v974 = vrot.slane %v973, 4
    %v975 = vmax.f32 %v973, %v974
    %v976 = vrot.slane %v975, 2
    %v977 = vmax.f32 %v975, %v976
    %v978 = vrot.slane %v977, 1
    %v979 = vmax.f32 %v977, %v978
    %v980 = vsel %vm580, %v82, -inf
    %v981 = vrot.slane %v980, 4
    %v982 = vmax.f32 %v980, %v981
    %v983 = vrot.slane %v982, 2
    %v984 = vmax.f32 %v982, %v983
    %v985 = vrot.slane %v984, 1
    %v986 = vmax.f32 %v984, %v985
    %v987 = vsel %vm580, %v84, -inf
    %v988 = vrot.slane %v987, 4
    %v989 = vmax.f32 %v987, %v988
    %v990 = vrot.slane %v989, 2
    %v991 = vmax.f32 %v989, %v990
    %v992 = vrot.slane %v991, 1
    %v993 = vmax.f32 %v991, %v992
    %v994 = vsel %vm580, %v86, -inf
    %v995 = vrot.slane %v994, 4
    %v996 = vmax.f32 %v994, %v995
    %v997 = vrot.slane %v996, 2
    %v998 = vmax.f32 %v996, %v997
    %v999 = vrot.slane %v998, 1
    %v1000 = vmax.f32 %v998, %v999
    %vm1001 = vcmask 128002
    %v1002 = vsel %vm1001, %v72, -inf
    %v1003 = vrot.slane %v1002, 4
    %v1004 = vmax.f32 %v1002, %v1003
    %v1005 = vrot.slane %v1004, 2
    %v1006 = vmax.f32 %v1004, %v1005
    %v1007 = vrot.slane %v1006, 1
    %v1008 = vmax.f32 %v1006, %v1007
    %v1009 = vsel %vm1001, %v74, -inf
    %v1010 = vrot.slane %v1009, 4
    %v1011 = vmax.f32 %v1009, %v1010
    %v1012 = vrot.slane %v1011, 2
    %v1013 = vmax.f32 %v1011, %v1012
    %v1014 = vrot.slane %v1013, 1
    %v1015 = vmax.f32 %v1013, %v1014
    %v1016 = vsel %vm1001, %v76, -inf
    %v1017 = vrot.slane %v1016, 4
    %v1018 = vmax.f32 %v1016, %v1017
    %v1019 = vrot.slane %v1018, 2
    %v1020 = vmax.f32 %v1018, %v1019
    %v1021 = vrot.slane %v1020, 1
    %v1022 = vmax.f32 %v1020, %v1021
    %v1023 = vsel %vm1001, %v78, -inf
    %v1024 = vrot.slane %v1023, 4
    %v1025 = vmax.f32 %v1023, %v1024
    %v1026 = vrot.slane %v1025, 2
    %v1027 = vmax.f32 %v1025, %v1026
    %v1028 = vrot.slane %v1027, 1
    %v1029 = vmax.f32 %v1027, %v1028
    %v1030 = vsel %vm1001, %v80, -inf
    %v1031 = vrot.slane %v1030, 4
    %v1032 = vmax.f32 %v1030, %v1031
    %v1033 = vrot.slane %v1032, 2
    %v1034 = vmax.f32 %v1032, %v1033
    %v1035 = vrot.slane %v1034, 1
    %v1036 = vmax.f32 %v1034, %v1035
    %v1037 = vsel %vm1001, %v82, -inf
    %v1038 = vrot.slane %v1037, 4
    %v1039 = vmax.f32 %v1037, %v1038
    %v1040 = vrot.slane %v1039, 2
    %v1041 = vmax.f32 %v1039, %v1040
    %v1042 = vrot.slane %v1041, 1
    %v1043 = vmax.f32 %v1041, %v1042
    %v1044 = vsel %vm1001, %v84, -inf
    %v1045 = vrot.slane %v1044, 4
    %v1046 = vmax.f32 %v1044, %v1045
    %v1047 = vrot.slane %v1046, 2
    %v1048 = vmax.f32 %v1046, %v1047
    %v1049 = vrot.slane %v1048, 1
    %v1050 = vmax.f32 %v1048, %v1049
    %v1051 = vsel %vm1001, %v86, -inf
    %v1052 = vrot.slane %v1051, 4
    %v1053 = vmax.f32 %v1051, %v1052
    %v1054 = vrot.slane %v1053, 2
    %v1055 = vmax.f32 %v1053, %v1054
    %v1056 = vrot.slane %v1055, 1
    %v1057 = vmax.f32 %v1055, %v1056
    %v1058 = vrot.slane %v579, 4
    %v1059 = vmax.f32 %v579, %v1058
    %v1060 = vrot.slane %v1059, 2
    %v1061 = vmax.f32 %v1059, %v1060
    %v1062 = vrot.slane %v1061, 1
    %v1063 = vmax.f32 %v1061, %v1062
    %v1064 = vrot.slane %v589, 4
    %v1065 = vmax.f32 %v589, %v1064
    %v1066 = vrot.slane %v1065, 2
    %v1067 = vmax.f32 %v1065, %v1066
    %v1068 = vrot.slane %v1067, 1
    %v1069 = vmax.f32 %v1067, %v1068
    %v1070 = vrot.slane %v598, 4
    %v1071 = vmax.f32 %v598, %v1070
    %v1072 = vrot.slane %v1071, 2
    %v1073 = vmax.f32 %v1071, %v1072
    %v1074 = vrot.slane %v1073, 1
    %v1075 = vmax.f32 %v1073, %v1074
    %v1076 = vrot.slane %v607, 4
    %v1077 = vmax.f32 %v607, %v1076
    %v1078 = vrot.slane %v1077, 2
    %v1079 = vmax.f32 %v1077, %v1078
    %v1080 = vrot.slane %v1079, 1
    %v1081 = vmax.f32 %v1079, %v1080
    %v1082 = vrot.slane %v616, 4
    %v1083 = vmax.f32 %v616, %v1082
    %v1084 = vrot.slane %v1083, 2
    %v1085 = vmax.f32 %v1083, %v1084
    %v1086 = vrot.slane %v1085, 1
    %v1087 = vmax.f32 %v1085, %v1086
    %v1088 = vrot.slane %v625, 4
    %v1089 = vmax.f32 %v625, %v1088
    %v1090 = vrot.slane %v1089, 2
    %v1091 = vmax.f32 %v1089, %v1090
    %v1092 = vrot.slane %v1091, 1
    %v1093 = vmax.f32 %v1091, %v1092
    %v1094 = vrot.slane %v634, 4
    %v1095 = vmax.f32 %v634, %v1094
    %v1096 = vrot.slane %v1095, 2
    %v1097 = vmax.f32 %v1095, %v1096
    %v1098 = vrot.slane %v1097, 1
    %v1099 = vmax.f32 %v1097, %v1098
    %v1100 = vrot.slane %v643, 4
    %v1101 = vmax.f32 %v643, %v1100
    %v1102 = vrot.slane %v1101, 2
    %v1103 = vmax.f32 %v1101, %v1102
    %v1104 = vrot.slane %v1103, 1
    %v1105 = vmax.f32 %v1103, %v1104
    %v1106 = vrot.slane %v581, 4
    %v1107 = vmax.f32 %v581, %v1106
    %v1108 = vrot.slane %v1107, 2
    %v1109 = vmax.f32 %v1107, %v1108
    %v1110 = vrot.slane %v1109, 1
    %v1111 = vmax.f32 %v1109, %v1110
    %v1112 = vrot.slane %v590, 4
    %v1113 = vmax.f32 %v590, %v1112
    %v1114 = vrot.slane %v1113, 2
    %v1115 = vmax.f32 %v1113, %v1114
    %v1116 = vrot.slane %v1115, 1
    %v1117 = vmax.f32 %v1115, %v1116
    %v1118 = vrot.slane %v599, 4
    %v1119 = vmax.f32 %v599, %v1118
    %v1120 = vrot.slane %v1119, 2
    %v1121 = vmax.f32 %v1119, %v1120
    %v1122 = vrot.slane %v1121, 1
    %v1123 = vmax.f32 %v1121, %v1122
    %v1124 = vrot.slane %v608, 4
    %v1125 = vmax.f32 %v608, %v1124
    %v1126 = vrot.slane %v1125, 2
    %v1127 = vmax.f32 %v1125, %v1126
    %v1128 = vrot.slane %v1127, 1
    %v1129 = vmax.f32 %v1127, %v1128
    %v1130 = vrot.slane %v617, 4
    %v1131 = vmax.f32 %v617, %v1130
    %v1132 = vrot.slane %v1131, 2
    %v1133 = vmax.f32 %v1131, %v1132
    %v1134 = vrot.slane %v1133, 1
    %v1135 = vmax.f32 %v1133, %v1134
    %v1136 = vrot.slane %v626, 4
    %v1137 = vmax.f32 %v626, %v1136
    %v1138 = vrot.slane %v1137, 2
    %v1139 = vmax.f32 %v1137, %v1138
    %v1140 = vrot.slane %v1139, 1
    %v1141 = vmax.f32 %v1139, %v1140
    %v1142 = vrot.slane %v635, 4
    %v1143 = vmax.f32 %v635, %v1142
    %v1144 = vrot.slane %v1143, 2
    %v1145 = vmax.f32 %v1143, %v1144
    %v1146 = vrot.slane %v1145, 1
    %v1147 = vmax.f32 %v1145, %v1146
    %v1148 = vrot.slane %v644, 4
    %v1149 = vmax.f32 %v644, %v1148
    %v1150 = vrot.slane %v1149, 2
    %v1151 = vmax.f32 %v1149, %v1150
    %v1152 = vrot.slane %v1151, 1
    %v1153 = vmax.f32 %v1151, %v1152
    %v1154 = vsel %vm1001, %v73, -inf
    %v1155 = vrot.slane %v1154, 4
    %v1156 = vmax.f32 %v1154, %v1155
    %v1157 = vrot.slane %v1156, 2
    %v1158 = vmax.f32 %v1156, %v1157
    %v1159 = vrot.slane %v1158, 1
    %v1160 = vmax.f32 %v1158, %v1159
    %v1161 = vsel %vm1001, %v75, -inf
    %v1162 = vrot.slane %v1161, 4
    %v1163 = vmax.f32 %v1161, %v1162
    %v1164 = vrot.slane %v1163, 2
    %v1165 = vmax.f32 %v1163, %v1164
    %v1166 = vrot.slane %v1165, 1
    %v1167 = vmax.f32 %v1165, %v1166
    %v1168 = vsel %vm1001, %v77, -inf
    %v1169 = vrot.slane %v1168, 4
    %v1170 = vmax.f32 %v1168, %v1169
    %v1171 = vrot.slane %v1170, 2
    %v1172 = vmax.f32 %v1170, %v1171
    %v1173 = vrot.slane %v1172, 1
    %v1174 = vmax.f32 %v1172, %v1173
    %v1175 = vsel %vm1001, %v79, -inf
    %v1176 = vrot.slane %v1175, 4
    %v1177 = vmax.f32 %v1175, %v1176
    %v1178 = vrot.slane %v1177, 2
    %v1179 = vmax.f32 %v1177, %v1178
    %v1180 = vrot.slane %v1179, 1
    %v1181 = vmax.f32 %v1179, %v1180
    %v1182 = vsel %vm1001, %v81, -inf
    %v1183 = vrot.slane %v1182, 4
    %v1184 = vmax.f32 %v1182, %v1183
    %v1185 = vrot.slane %v1184, 2
    %v1186 = vmax.f32 %v1184, %v1185
    %v1187 = vrot.slane %v1186, 1
    %v1188 = vmax.f32 %v1186, %v1187
    %v1189 = vsel %vm1001, %v83, -inf
    %v1190 = vrot.slane %v1189, 4
    %v1191 = vmax.f32 %v1189, %v1190
    %v1192 = vrot.slane %v1191, 2
    %v1193 = vmax.f32 %v1191, %v1192
    %v1194 = vrot.slane %v1193, 1
    %v1195 = vmax.f32 %v1193, %v1194
    %v1196 = vsel %vm1001, %v85, -inf
    %v1197 = vrot.slane %v1196, 4
    %v1198 = vmax.f32 %v1196, %v1197
    %v1199 = vrot.slane %v1198, 2
    %v1200 = vmax.f32 %v1198, %v1199
    %v1201 = vrot.slane %v1200, 1
    %v1202 = vmax.f32 %v1200, %v1201
    %v1203 = vsel %vm1001, %v87, -inf
    %v1204 = vrot.slane %v1203, 4
    %v1205 = vmax.f32 %v1203, %v1204
    %v1206 = vrot.slane %v1205, 2
    %v1207 = vmax.f32 %v1205, %v1206
    %v1208 = vrot.slane %v1207, 1
    %v1209 = vmax.f32 %v1207, %v1208
    %v1210 = vsel %vm578, %v73, -inf
    %v1211 = vrot.slane %v1210, 4
    %v1212 = vmax.f32 %v1210, %v1211
    %v1213 = vrot.slane %v1212, 2
    %v1214 = vmax.f32 %v1212, %v1213
    %v1215 = vrot.slane %v1214, 1
    %v1216 = vmax.f32 %v1214, %v1215
    %v1217 = vsel %vm578, %v75, -inf
    %v1218 = vrot.slane %v1217, 4
    %v1219 = vmax.f32 %v1217, %v1218
    %v1220 = vrot.slane %v1219, 2
    %v1221 = vmax.f32 %v1219, %v1220
    %v1222 = vrot.slane %v1221, 1
    %v1223 = vmax.f32 %v1221, %v1222
    %v1224 = vsel %vm578, %v77, -inf
    %v1225 = vrot.slane %v1224, 4
    %v1226 = vmax.f32 %v1224, %v1225
    %v1227 = vrot.slane %v1226, 2
    %v1228 = vmax.f32 %v1226, %v1227
    %v1229 = vrot.slane %v1228, 1
    %v1230 = vmax.f32 %v1228, %v1229
    %v1231 = vsel %vm578, %v79, -inf
    %v1232 = vrot.slane %v1231, 4
    %v1233 = vmax.f32 %v1231, %v1232
    %v1234 = vrot.slane %v1233, 2
    %v1235 = vmax.f32 %v1233, %v1234
    %v1236 = vrot.slane %v1235, 1
    %v1237 = vmax.f32 %v1235, %v1236
    %v1238 = vsel %vm578, %v81, -inf
    %v1239 = vrot.slane %v1238, 4
    %v1240 = vmax.f32 %v1238, %v1239
    %v1241 = vrot.slane %v1240, 2
    %v1242 = vmax.f32 %v1240, %v1241
    %v1243 = vrot.slane %v1242, 1
    %v1244 = vmax.f32 %v1242, %v1243
    %v1245 = vsel %vm578, %v83, -inf
    %v1246 = vrot.slane %v1245, 4
    %v1247 = vmax.f32 %v1245, %v1246
    %v1248 = vrot.slane %v1247, 2
    %v1249 = vmax.f32 %v1247, %v1248
    %v1250 = vrot.slane %v1249, 1
    %v1251 = vmax.f32 %v1249, %v1250
    %v1252 = vsel %vm578, %v85, -inf
    %v1253 = vrot.slane %v1252, 4
    %v1254 = vmax.f32 %v1252, %v1253
    %v1255 = vrot.slane %v1254, 2
    %v1256 = vmax.f32 %v1254, %v1255
    %v1257 = vrot.slane %v1256, 1
    %v1258 = vmax.f32 %v1256, %v1257
    %v1259 = vsel %vm578, %v87, -inf
    %v1260 = vrot.slane %v1259, 4
    %v1261 = vmax.f32 %v1259, %v1260
    %v1262 = vrot.slane %v1261, 2
    %v1263 = vmax.f32 %v1261, %v1262
    %v1264 = vrot.slane %v1263, 1
    %v1265 = vmax.f32 %v1263, %v1264
    %v1314 = vrot.slane %v958, 7
    %v1315 = vsel %vm169, %v1314, %v951
    %v1316 = vrot.slane %v965, 6
    %v1317 = vsel %vm171, %v1316, %v1315
    %v1318 = vrot.slane %v972, 5
    %v1319 = vsel %vm173, %v1318, %v1317
    %v1320 = vrot.slane %v979, 4
    %v1321 = vsel %vm175, %v1320, %v1319
    %v1322 = vrot.slane %v986, 3
    %v1323 = vsel %vm177, %v1322, %v1321
    %v1324 = vrot.slane %v993, 2
    %v1325 = vsel %vm179, %v1324, %v1323
    %v1326 = vrot.slane %v1000, 1
    %v1327 = vsel %vm181, %v1326, %v1325
    %v1328 = vrot.slane %v1015, 7
    %v1329 = vsel %vm169, %v1328, %v1008
    %v1330 = vrot.slane %v1022, 6
    %v1331 = vsel %vm171, %v1330, %v1329
    %v1332 = vrot.slane %v1029, 5
    %v1333 = vsel %vm173, %v1332, %v1331
    %v1334 = vrot.slane %v1036, 4
    %v1335 = vsel %vm175, %v1334, %v1333
    %v1336 = vrot.slane %v1043, 3
    %v1337 = vsel %vm177, %v1336, %v1335
    %v1338 = vrot.slane %v1050, 2
    %v1339 = vsel %vm179, %v1338, %v1337
    %v1340 = vrot.slane %v1057, 1
    %v1341 = vsel %vm181, %v1340, %v1339
    %v1342 = vrot.slane %v1069, 7
    %v1343 = vsel %vm169, %v1342, %v1063
    %v1344 = vrot.slane %v1075, 6
    %v1345 = vsel %vm171, %v1344, %v1343
    %v1346 = vrot.slane %v1081, 5
    %v1347 = vsel %vm173, %v1346, %v1345
    %v1348 = vrot.slane %v1087, 4
    %v1349 = vsel %vm175, %v1348, %v1347
    %v1350 = vrot.slane %v1093, 3
    %v1351 = vsel %vm177, %v1350, %v1349
    %v1352 = vrot.slane %v1099, 2
    %v1353 = vsel %vm179, %v1352, %v1351
    %v1354 = vrot.slane %v1105, 1
    %v1355 = vsel %vm181, %v1354, %v1353
    %v1356 = vrot.slane %v1117, 7
    %v1357 = vsel %vm169, %v1356, %v1111
    %v1358 = vrot.slane %v1123, 6
    %v1359 = vsel %vm171, %v1358, %v1357
    %v1360 = vrot.slane %v1129, 5
    %v1361 = vsel %vm173, %v1360, %v1359
    %v1362 = vrot.slane %v1135, 4
    %v1363 = vsel %vm175, %v1362, %v1361
    %v1364 = vrot.slane %v1141, 3
    %v1365 = vsel %vm177, %v1364, %v1363
    %v1366 = vrot.slane %v1147, 2
    %v1367 = vsel %vm179, %v1366, %v1365
    %v1368 = vrot.slane %v1153, 1
    %v1369 = vsel %vm181, %v1368, %v1367
    %v1370 = vrot.slane %v1167, 7
    %v1371 = vsel %vm169, %v1370, %v1160
    %v1372 = vrot.slane %v1174, 6
    %v1373 = vsel %vm171, %v1372, %v1371
    %v1374 = vrot.slane %v1181, 5
    %v1375 = vsel %vm173, %v1374, %v1373
    %v1376 = vrot.slane %v1188, 4
    %v1377 = vsel %vm175, %v1376, %v1375
    %v1378 = vrot.slane %v1195, 3
    %v1379 = vsel %vm177, %v1378, %v1377
    %v1380 = vrot.slane %v1202, 2
    %v1381 = vsel %vm179, %v1380, %v1379
    %v1382 = vrot.slane %v1209, 1
    %v1383 = vsel %vm181, %v1382, %v1381
    %v1384 = vrot.slane %v1223, 7
    %v1385 = vsel %vm169, %v1384, %v1216
    %v1386 = vrot.slane %v1230, 6
    %v1387 = vsel %vm171, %v1386, %v1385
    %v1388 = vrot.slane %v1237, 5
    %v1389 = vsel %vm173, %v1388, %v1387
    %v1390 = vrot.slane %v1244, 4
    %v1391 = vsel %vm175, %v1390, %v1389
    %v1392 = vrot.slane %v1251, 3
    %v1393 = vsel %vm177, %v1392, %v1391
    %v1394 = vrot.slane %v1258, 2
    %v1395 = vsel %vm179, %v1394, %v1393
    %v1396 = vrot.slane %v1265, 1
    %v1397 = vsel %vm181, %v1396, %v1395
    %vm1404 = vcmask 23552
    %v1405 = vsel %vm1404, %v1327, -inf
    %1406 = vmax.xlane.f32.xlu0 %v1405
    %v1407 = vpop.xlane.xlu0 %1406
    %v1408 = vsel %vm1404, %v1341, -inf
    %1409 = vmax.xlane.f32.xlu0 %v1408
    %v1410 = vpop.xlane.xlu0 %1409
    %v1411 = vsel %vm1404, %v1355, -inf
    %1412 = vmax.xlane.f32.xlu0 %v1411
    %v1413 = vpop.xlane.xlu0 %1412
    %v1414 = vsel %vm1404, %v1369, -inf
    %1415 = vmax.xlane.f32.xlu0 %v1414
    %v1416 = vpop.xlane.xlu0 %1415
    %v1417 = vsel %vm1404, %v1383, -inf
    %1418 = vmax.xlane.f32.xlu0 %v1417
    %v1419 = vpop.xlane.xlu0 %1418
    %v1420 = vsel %vm1404, %v1397, -inf
    %1421 = vmax.xlane.f32.xlu0 %v1420
    %v1422 = vpop.xlane.xlu0 %1421
    %vm1423 = vcmask 48144
    %v1424 = vsel %vm1423, %v1327, -inf
    %1425 = vmax.xlane.f32.xlu0 %v1424
    %v1426 = vpop.xlane.xlu0 %1425
    %v1427 = vsel %vm1423, %v1341, -inf
    %1428 = vmax.xlane.f32.xlu0 %v1427
    %v1429 = vpop.xlane.xlu0 %1428
    %v1430 = vsel %vm1423, %v1355, -inf
    %1431 = vmax.xlane.f32.xlu0 %v1430
    %v1432 = vpop.xlane.xlu0 %1431
    %v1433 = vsel %vm1423, %v1369, -inf
    %1434 = vmax.xlane.f32.xlu0 %v1433
    %v1435 = vpop.xlane.xlu0 %1434
    %v1436 = vsel %vm1423, %v1383, -inf
    %1437 = vmax.xlane.f32.xlu0 %v1436
    %v1438 = vpop.xlane.xlu0 %1437
    %v1439 = vsel %vm1423, %v1397, -inf
    %1440 = vmax.xlane.f32.xlu0 %v1439
    %v1441 = vpop.xlane.xlu0 %1440
    %vm1442 = vcmask 64552
    %v1443 = vsel %vm1442, %v1327, -inf
    %1444 = vmax.xlane.f32.xlu0 %v1443
    %v1445 = vpop.xlane.xlu0 %1444
    %v1446 = vsel %vm1442, %v1341, -inf
    %1447 = vmax.xlane.f32.xlu0 %v1446
    %v1448 = vpop.xlane.xlu0 %1447
    %v1449 = vsel %vm1442, %v1355, -inf
    %1450 = vmax.xlane.f32.xlu0 %v1449
    %v1451 = vpop.xlane.xlu0 %1450
    %v1452 = vsel %vm1442, %v1369, -inf
    %1453 = vmax.xlane.f32.xlu0 %v1452
    %v1454 = vpop.xlane.xlu0 %1453
    %v1455 = vsel %vm1442, %v1383, -inf
    %1456 = vmax.xlane.f32.xlu0 %v1455
    %v1457 = vpop.xlane.xlu0 %1456
    %v1458 = vsel %vm1442, %v1397, -inf
    %1459 = vmax.xlane.f32.xlu0 %v1458
    %v1460 = vpop.xlane.xlu0 %1459
    %vm1461 = vcmask 89152
    %v1462 = vsel %vm1461, %v1327, -inf
    %1463 = vmax.xlane.f32.xlu0 %v1462
    %v1464 = vpop.xlane.xlu0 %1463
    %v1465 = vsel %vm1461, %v1341, -inf
    %1466 = vmax.xlane.f32.xlu0 %v1465
    %v1467 = vpop.xlane.xlu0 %1466
    %v1468 = vsel %vm1461, %v1355, -inf
    %1469 = vmax.xlane.f32.xlu0 %v1468
    %v1470 = vpop.xlane.xlu0 %1469
    %v1471 = vsel %vm1461, %v1369, -inf
    %1472 = vmax.xlane.f32.xlu0 %v1471
    %v1473 = vpop.xlane.xlu0 %1472
    %v1474 = vsel %vm1461, %v1383, -inf
    %1475 = vmax.xlane.f32.xlu0 %v1474
    %v1476 = vpop.xlane.xlu0 %1475
    %v1477 = vsel %vm1461, %v1397, -inf
    %1478 = vmax.xlane.f32.xlu0 %v1477
    %v1479 = vpop.xlane.xlu0 %1478
    %vm1480 = vcmask 113744
    %v1481 = vsel %vm1480, %v1327, -inf
    %1482 = vmax.xlane.f32.xlu0 %v1481
    %v1483 = vpop.xlane.xlu0 %1482
    %v1484 = vsel %vm1480, %v1341, -inf
    %1485 = vmax.xlane.f32.xlu0 %v1484
    %v1486 = vpop.xlane.xlu0 %1485
    %v1487 = vsel %vm1480, %v1355, -inf
    %1488 = vmax.xlane.f32.xlu0 %v1487
    %v1489 = vpop.xlane.xlu0 %1488
    %v1490 = vsel %vm1480, %v1369, -inf
    %1491 = vmax.xlane.f32.xlu0 %v1490
    %v1492 = vpop.xlane.xlu0 %1491
    %v1493 = vsel %vm1480, %v1383, -inf
    %1494 = vmax.xlane.f32.xlu0 %v1493
    %v1495 = vpop.xlane.xlu0 %1494
    %v1496 = vsel %vm1480, %v1397, -inf
    %1497 = vmax.xlane.f32.xlu0 %v1496
    %v1498 = vpop.xlane.xlu0 %1497
    %vm1499 = vcmask 130152
    %v1500 = vsel %vm1499, %v1327, -inf
    %1501 = vmax.xlane.f32.xlu0 %v1500
    %v1502 = vpop.xlane.xlu0 %1501
    %v1503 = vsel %vm1499, %v1341, -inf
    %1504 = vmax.xlane.f32.xlu0 %v1503
    %v1505 = vpop.xlane.xlu0 %1504
    %v1506 = vsel %vm1499, %v1355, -inf
    %1507 = vmax.xlane.f32.xlu0 %v1506
    %v1508 = vpop.xlane.xlu0 %1507
    %v1509 = vsel %vm1499, %v1369, -inf
    %1510 = vmax.xlane.f32.xlu0 %v1509
    %v1511 = vpop.xlane.xlu0 %1510
    %v1512 = vsel %vm1499, %v1383, -inf
    %1513 = vmax.xlane.f32.xlu0 %v1512
    %v1514 = vpop.xlane.xlu0 %1513
    %v1515 = vsel %vm1499, %v1397, -inf
    %1516 = vmax.xlane.f32.xlu0 %v1515
    %v1517 = vpop.xlane.xlu0 %1516
    %v1524 = vlaneseq
    %v1525 = vshrl.u32 %v1524, 7
    %v1526 = vsub.s32 %v189, %v1525
    %v1527 = vrot.slane %v1407, %v1526
    %v1528 = vlaneseq
    %v1529 = vshrl.u32 %v1528, 7
    %v1530 = vsub.s32 %v189, %v1529
    %v1531 = vrot.slane %v1410, %v1530
    %v1532 = vlaneseq
    %v1533 = vshrl.u32 %v1532, 7
    %v1534 = vsub.s32 %v189, %v1533
    %v1535 = vrot.slane %v1413, %v1534
    %v1536 = vlaneseq
    %v1537 = vshrl.u32 %v1536, 7
    %v1538 = vsub.s32 %v189, %v1537
    %v1539 = vrot.slane %v1416, %v1538
    %v1540 = vlaneseq
    %v1541 = vshrl.u32 %v1540, 7
    %v1542 = vsub.s32 %v189, %v1541
    %v1543 = vrot.slane %v1419, %v1542
    %v1544 = vlaneseq
    %v1545 = vshrl.u32 %v1544, 7
    %v1546 = vsub.s32 %v189, %v1545
    %v1547 = vrot.slane %v1422, %v1546
    %v1548 = vsel %vm169, %v1531, %v1527
    %v1549 = vsel %vm171, %v1535, %v1548
    %v1550 = vsel %vm173, %v1539, %v1549
    %v1551 = vsel %vm175, %v1543, %v1550
    %v1552 = vsel %vm177, %v1547, %v1551
    %v1560 = vlaneseq
    %v1561 = vshrl.u32 %v1560, 7
    %v1562 = vsub.s32 %v189, %v1561
    %v1563 = vrot.slane %v1426, %v1562
    %v1564 = vlaneseq
    %v1565 = vshrl.u32 %v1564, 7
    %v1566 = vsub.s32 %v189, %v1565
    %v1567 = vrot.slane %v1429, %v1566
    %v1568 = vlaneseq
    %v1569 = vshrl.u32 %v1568, 7
    %v1570 = vsub.s32 %v189, %v1569
    %v1571 = vrot.slane %v1432, %v1570
    %v1572 = vlaneseq
    %v1573 = vshrl.u32 %v1572, 7
    %v1574 = vsub.s32 %v189, %v1573
    %v1575 = vrot.slane %v1435, %v1574
    %v1576 = vlaneseq
    %v1577 = vshrl.u32 %v1576, 7
    %v1578 = vsub.s32 %v189, %v1577
    %v1579 = vrot.slane %v1438, %v1578
    %v1580 = vlaneseq
    %v1581 = vshrl.u32 %v1580, 7
    %v1582 = vsub.s32 %v189, %v1581
    %v1583 = vrot.slane %v1441, %v1582
    %v1584 = vsel %vm181, %v1567, %v1563
    %v1585 = vsel %vm169, %v1575, %v1571
    %v1586 = vsel %vm171, %v1579, %v1585
    %v1587 = vsel %vm173, %v1583, %v1586
    %v1596 = vlaneseq
    %v1597 = vshrl.u32 %v1596, 7
    %v1598 = vsub.s32 %v189, %v1597
    %v1599 = vrot.slane %v1445, %v1598
    %v1600 = vlaneseq
    %v1601 = vshrl.u32 %v1600, 7
    %v1602 = vsub.s32 %v189, %v1601
    %v1603 = vrot.slane %v1448, %v1602
    %v1604 = vlaneseq
    %v1605 = vshrl.u32 %v1604, 7
    %v1606 = vsub.s32 %v189, %v1605
    %v1607 = vrot.slane %v1451, %v1606
    %v1608 = vlaneseq
    %v1609 = vshrl.u32 %v1608, 7
    %v1610 = vsub.s32 %v189, %v1609
    %v1611 = vrot.slane %v1454, %v1610
    %v1612 = vlaneseq
    %v1613 = vshrl.u32 %v1612, 7
    %v1614 = vsub.s32 %v189, %v1613
    %v1615 = vrot.slane %v1457, %v1614
    %v1616 = vlaneseq
    %v1617 = vshrl.u32 %v1616, 7
    %v1618 = vsub.s32 %v189, %v1617
    %v1619 = vrot.slane %v1460, %v1618
    %v1620 = vsel %vm177, %v1603, %v1599
    %v1621 = vsel %vm179, %v1607, %v1620
    %v1622 = vsel %vm181, %v1611, %v1621
    %v1623 = vsel %vm169, %v1619, %v1615
    %v1632 = vlaneseq
    %v1633 = vshrl.u32 %v1632, 7
    %v1634 = vsub.s32 %v189, %v1633
    %v1635 = vrot.slane %v1464, %v1634
    %v1636 = vlaneseq
    %v1637 = vshrl.u32 %v1636, 7
    %v1638 = vsub.s32 %v189, %v1637
    %v1639 = vrot.slane %v1467, %v1638
    %v1640 = vlaneseq
    %v1641 = vshrl.u32 %v1640, 7
    %v1642 = vsub.s32 %v189, %v1641
    %v1643 = vrot.slane %v1470, %v1642
    %v1644 = vlaneseq
    %v1645 = vshrl.u32 %v1644, 7
    %v1646 = vsub.s32 %v189, %v1645
    %v1647 = vrot.slane %v1473, %v1646
    %v1648 = vlaneseq
    %v1649 = vshrl.u32 %v1648, 7
    %v1650 = vsub.s32 %v189, %v1649
    %v1651 = vrot.slane %v1476, %v1650
    %v1652 = vlaneseq
    %v1653 = vshrl.u32 %v1652, 7
    %v1654 = vsub.s32 %v189, %v1653
    %v1655 = vrot.slane %v1479, %v1654
    %v1656 = vsel %vm173, %v1639, %v1635
    %v1657 = vsel %vm175, %v1643, %v1656
    %v1658 = vsel %vm177, %v1647, %v1657
    %v1659 = vsel %vm179, %v1651, %v1658
    %v1660 = vsel %vm181, %v1655, %v1659
    %v1668 = vlaneseq
    %v1669 = vshrl.u32 %v1668, 7
    %v1670 = vsub.s32 %v189, %v1669
    %v1671 = vrot.slane %v1483, %v1670
    %v1672 = vlaneseq
    %v1673 = vshrl.u32 %v1672, 7
    %v1674 = vsub.s32 %v189, %v1673
    %v1675 = vrot.slane %v1486, %v1674
    %v1676 = vlaneseq
    %v1677 = vshrl.u32 %v1676, 7
    %v1678 = vsub.s32 %v189, %v1677
    %v1679 = vrot.slane %v1489, %v1678
    %v1680 = vlaneseq
    %v1681 = vshrl.u32 %v1680, 7
    %v1682 = vsub.s32 %v189, %v1681
    %v1683 = vrot.slane %v1492, %v1682
    %v1684 = vlaneseq
    %v1685 = vshrl.u32 %v1684, 7
    %v1686 = vsub.s32 %v189, %v1685
    %v1687 = vrot.slane %v1495, %v1686
    %v1688 = vlaneseq
    %v1689 = vshrl.u32 %v1688, 7
    %v1690 = vsub.s32 %v189, %v1689
    %v1691 = vrot.slane %v1498, %v1690
    %v1692 = vsel %vm169, %v1675, %v1671
    %v1693 = vsel %vm171, %v1679, %v1692
    %v1694 = vsel %vm173, %v1683, %v1693
    %v1695 = vsel %vm175, %v1687, %v1694
    %v1696 = vsel %vm177, %v1691, %v1695
    %v1704 = vlaneseq
    %v1705 = vshrl.u32 %v1704, 7
    %v1706 = vsub.s32 %v189, %v1705
    %v1707 = vrot.slane %v1502, %v1706
    %v1708 = vlaneseq
    %v1709 = vshrl.u32 %v1708, 7
    %v1710 = vsub.s32 %v189, %v1709
    %v1711 = vrot.slane %v1505, %v1710
    %v1712 = vlaneseq
    %v1713 = vshrl.u32 %v1712, 7
    %v1714 = vsub.s32 %v189, %v1713
    %v1715 = vrot.slane %v1508, %v1714
    %v1716 = vlaneseq
    %v1717 = vshrl.u32 %v1716, 7
    %v1718 = vsub.s32 %v189, %v1717
    %v1719 = vrot.slane %v1511, %v1718
    %v1720 = vlaneseq
    %v1721 = vshrl.u32 %v1720, 7
    %v1722 = vsub.s32 %v189, %v1721
    %v1723 = vrot.slane %v1514, %v1722
    %v1724 = vlaneseq
    %v1725 = vshrl.u32 %v1724, 7
    %v1726 = vsub.s32 %v189, %v1725
    %v1727 = vrot.slane %v1517, %v1726
    %v1728 = vsel %vm181, %v1711, %v1707
    %v1729 = vsel %vm169, %v1719, %v1715
    %v1730 = vsel %vm171, %v1723, %v1729
    %v1731 = vsel %vm173, %v1727, %v1730
    %v1733 = vsel %vm863, %v1552, %v1584
    %vm1734 = vcmask 1043456
    %v1735 = vsel %vm1734, %v1587, %v1622
    %v1736 = vsel %vm446, %v1623, %v1660
    %v1737 = vsel %vm863, %v1696, %v1728
    %v1739 = vsel %vm194, %v1733, 0
    %v1742 = vsel %vm194, %v1735, 0
    %v1745 = vsel %vm194, %v1736, 0
    %v1748 = vsel %vm194, %v1737, 0
    %v1750 = vsel %vm194, %v1731, 0
    %1752 = vmatprep.subr.mxu0 0.0
    %1753 = vmatpush1.msra.mxu0 %v70
    %1754 = vmatprep.subr.mxu0 0.0
    %1755 = vmatpush1.msra.mxu0 0.0
    %1756 = vmatprep.subr.mxu0 0.0
    %1757 = vmatpush1.msra.mxu0 0.0
    %1758 = vmatprep.subr.mxu0 0.0
    %1759 = vmatpush1.msra.mxu0 0.0
    %1760 = vmatprep.subr.mxu0 0.0
    %1761 = vmatpush1.msra.mxu0 0.0
    %1762 = vmatprep.subr.mxu0 0.0
    %1763 = vmatpush1.msra.mxu0 0.0
    %1764 = vmatprep.subr.mxu0 0.0
    %1765 = vmatpush1.msra.mxu0 0.0
    %1766 = vmatprep.subr.mxu0 0.0
    %1767 = vmatpush1.msra.mxu0 0.0
    %1768 = vmatprep.subr.mxu0 0.0
    %1769 = vmatpush1.msra.mxu0 0.0
    %1770 = vmatprep.subr.mxu0 0.0
    %1771 = vmatpush1.msra.mxu0 0.0
    %1772 = vmatprep.subr.mxu0 0.0
    %1773 = vmatpush1.msra.mxu0 0.0
    %1774 = vmatprep.subr.mxu0 0.0
    %1775 = vmatpush1.msra.mxu0 0.0
    %1776 = vmatprep.subr.mxu0 0.0
    %1777 = vmatpush1.msra.mxu0 0.0
    %1778 = vmatprep.subr.mxu0 0.0
    %1779 = vmatpush1.msra.mxu0 0.0
    %1780 = vmatprep.subr.mxu0 0.0
    %1781 = vmatpush1.msra.mxu0 0.0
    %1782 = vmatprep.subr.mxu0 0.0
    %1783 = vmatpush1.msra.mxu0 0.0
    %1784 = vmatprep.subr.mxu0 0.0
    %1785 = vmatpush1.msra.mxu0 0.0
    %1786 = vmatprep.subr.mxu0 0.0
    %1787 = vmatpush1.msra.mxu0 0.0
    %1788 = vmatprep.subr.mxu0 0.0
    %1789 = vmatpush1.msra.mxu0 0.0
    %1790 = vmatprep.subr.mxu0 0.0
    %1791 = vmatpush1.msra.mxu0 0.0
    %1792 = vmatprep.subr.mxu0 0.0
    %1793 = vmatpush1.msra.mxu0 0.0
    %1794 = vmatprep.subr.mxu0 0.0
    %1795 = vmatpush1.msra.mxu0 0.0
    %1796 = vmatprep.subr.mxu0 0.0
    %1797 = vmatpush1.msra.mxu0 0.0
    %1798 = vmatprep.subr.mxu0 0.0
    %1799 = vmatpush1.msra.mxu0 0.0
    %1800 = vmatprep.subr.mxu0 0.0
    %1801 = vmatpush1.msra.mxu0 0.0
    %1802 = vmatprep.subr.mxu0 0.0
    %1803 = vmatpush1.msra.mxu0 0.0
    %1804 = vmatprep.subr.mxu0 0.0
    %1805 = vmatpush1.msra.mxu0 0.0
    %1806 = vmatprep.subr.mxu0 0.0
    %1807 = vmatpush1.msra.mxu0 0.0
    %1808 = vmatprep.subr.mxu0 0.0
    %1809 = vmatpush1.msra.mxu0 0.0
    %1810 = vmatprep.subr.mxu0 0.0
    %1811 = vmatpush1.msra.mxu0 0.0
    %1812 = vmatprep.subr.mxu0 0.0
    %1813 = vmatpush1.msra.mxu0 0.0
    %1814 = vmatprep.subr.mxu0 0.0
    %1815 = vmatpush1.msra.mxu0 0.0
    %1816 = vmatprep.mubr.f32.mxu0 0.0
    %1817 = vmatmul.mubr.f32.gmra.mrb[0].mxu0 %v1739
    %v1818 = vpop.f32.mrb[0].mxu0
    %v1819 = vadd.f32 0.0, %v1818
    %v1820 = vpop.f32.mrb[0].mxu0
    %1821 = vmatprep.mubr.f32.mxu0 0.0
    %1822 = vmatmul.mubr.f32.gmra.mrb[0].mxu0 %v1742
    %v1823 = vpop.f32.mrb[0].mxu0
    %v1824 = vadd.f32 0.0, %v1823
    %v1825 = vpop.f32.mrb[0].mxu0
    %1826 = vmatprep.mubr.f32.mxu0 0.0
    %1827 = vmatmul.mubr.f32.gmra.mrb[0].mxu0 %v1745
    %v1828 = vpop.f32.mrb[0].mxu0
    %v1829 = vadd.f32 0.0, %v1828
    %v1830 = vpop.f32.mrb[0].mxu0
    %1831 = vmatprep.mubr.f32.mxu0 0.0
    %1832 = vmatmul.mubr.f32.gmra.mrb[0].mxu0 %v1748
    %v1833 = vpop.f32.mrb[0].mxu0
    %v1834 = vadd.f32 0.0, %v1833
    %v1835 = vpop.f32.mrb[0].mxu0
    %1836 = vmatprep.mubr.f32.mxu0 0.0
    %1837 = vmatmul.mubr.f32.gmra.mrb[0].mxu0 %v1750
    %v1838 = vpop.f32.mrb[0].mxu0
    %v1839 = vadd.f32 0.0, %v1838
    %v1840 = vpop.f32.mrb[0].mxu0
    %1841 = vdwg.mxu0
    %v1843 = vrot.slane %v518, 7
    %vm1847 = vcmask 1044480
    %v1848 = vrot.slane %v937, 3
    %v1849 = vrot.slane %v942, 3
    %v1850 = vsel %vm1847, %v1848, %v1849
    %v1858 = vrot.slane %v1819, 2
    %v1859 = vrot.slane %v1824, 2
    %v1860 = vsel %vm863, %v1858, %v1859
    %v1861 = vrot.slane %v1829, 2
    %v1862 = vsel %vm863, %v1859, %v1861
    %v1863 = vrot.slane %v1834, 2
    %v1864 = vsel %vm863, %v1861, %v1863
    %v1865 = vrot.slane %v1839, 2
    %v1866 = vsel %vm863, %v1863, %v1865
    %vm1873 = vcmask 1040384
    %v1874 = vsel %vm1873, %v264, %v1843
    %v1875 = vsel %vm1847, %v1874, %v1848
    %v1876 = vsel %vm863, %v1850, %v1858
    %1877 = vxpose.xlu0.b32.start [1/16] %v1875, 128
    %1878 = vxpose.xlu0.b32.cont [2/16] %v1876, 128
    %1879 = vxpose.xlu0.b32.cont [3/16] %v1860, 128
    %1880 = vxpose.xlu0.b32.cont [4/16] %v1862, 128
    %1881 = vxpose.xlu0.b32.cont [5/16] %v1864, 128
    %1882 = vxpose.xlu0.b32.cont [6/16] %v1866, 128
    %1883 = vxpose.xlu0.b32.cont [7/16] %v1865, 128
    %1884 = vxpose.xlu0.b32.cont [8/16] 0.0, 128
    %1885 = vxpose.xlu0.b32.cont [9/16] 0.0, 128
    %1886 = vxpose.xlu0.b32.cont [10/16] 0.0, 128
    %1887 = vxpose.xlu0.b32.cont [11/16] 0.0, 128
    %1888 = vxpose.xlu0.b32.cont [12/16] 0.0, 128
    %1889 = vxpose.xlu0.b32.cont [13/16] 0.0, 128
    %1890 = vxpose.xlu0.b32.cont [14/16] 0.0, 128
    %1891 = vxpose.xlu0.b32.cont [15/16] 0.0, 128
    %1892 = vxpose.xlu0.b32.end [16/16] 0.0, 128
    %v1893 = vpop.trf.xlu0
    %v1894 = vpop.trf.xlu0
    %v1895 = vpop.trf.xlu0
    %v1896 = vpop.trf.xlu0
    %v1897 = vpop.trf.xlu0
    %v1898 = vpop.trf.xlu0
    %v1899 = vpop.trf.xlu0
    %v1900 = vpop.trf.xlu0
    %v1901 = vpop.trf.xlu0
    %v1902 = vpop.trf.xlu0
    %v1903 = vpop.trf.xlu0
    %v1904 = vpop.trf.xlu0
    %v1905 = vpop.trf.xlu0
    %v1906 = vpop.trf.xlu0
    %v1907 = vpop.trf.xlu0
    %v1908 = vpop.trf.xlu0
    %v1909 = vld [vmem:[%s1] sm:$0xff]
    %v1910 = vld [vmem:[%s1 + $0x8] sm:$0xff]
    %v1912 = vsel %vm194, %v71, 0
    %1914 = vmatprep.subr.mxu0 %v1910
    %1915 = vmatpush1.msra.mxu0 %v1909
    %1916 = vmatprep.subr.mxu0 0.0
    %1917 = vmatpush1.msra.mxu0 0.0
    %1918 = vmatprep.subr.mxu0 0.0
    %1919 = vmatpush1.msra.mxu0 0.0
    %1920 = vmatprep.subr.mxu0 0.0
    %1921 = vmatpush1.msra.mxu0 0.0
    %1922 = vmatprep.subr.mxu0 0.0
    %1923 = vmatpush1.msra.mxu0 0.0
    %1924 = vmatprep.subr.mxu0 0.0
    %1925 = vmatpush1.msra.mxu0 0.0
    %1926 = vmatprep.subr.mxu0 0.0
    %1927 = vmatpush1.msra.mxu0 0.0
    %1928 = vmatprep.subr.mxu0 0.0
    %1929 = vmatpush1.msra.mxu0 0.0
    %1930 = vmatprep.subr.mxu0 0.0
    %1931 = vmatpush1.msra.mxu0 0.0
    %1932 = vmatprep.subr.mxu0 0.0
    %1933 = vmatpush1.msra.mxu0 0.0
    %1934 = vmatprep.subr.mxu0 0.0
    %1935 = vmatpush1.msra.mxu0 0.0
    %1936 = vmatprep.subr.mxu0 0.0
    %1937 = vmatpush1.msra.mxu0 0.0
    %1938 = vmatprep.subr.mxu0 0.0
    %1939 = vmatpush1.msra.mxu0 0.0
    %1940 = vmatprep.subr.mxu0 0.0
    %1941 = vmatpush1.msra.mxu0 0.0
    %1942 = vmatprep.subr.mxu0 0.0
    %1943 = vmatpush1.msra.mxu0 0.0
    %1944 = vmatprep.subr.mxu0 0.0
    %1945 = vmatpush1.msra.mxu0 0.0
    %1946 = vmatprep.subr.mxu0 0.0
    %1947 = vmatpush1.msra.mxu0 0.0
    %1948 = vmatprep.subr.mxu0 0.0
    %1949 = vmatpush1.msra.mxu0 0.0
    %1950 = vmatprep.subr.mxu0 0.0
    %1951 = vmatpush1.msra.mxu0 0.0
    %1952 = vmatprep.subr.mxu0 0.0
    %1953 = vmatpush1.msra.mxu0 0.0
    %1954 = vmatprep.subr.mxu0 0.0
    %1955 = vmatpush1.msra.mxu0 0.0
    %1956 = vmatprep.subr.mxu0 0.0
    %1957 = vmatpush1.msra.mxu0 0.0
    %1958 = vmatprep.subr.mxu0 0.0
    %1959 = vmatpush1.msra.mxu0 0.0
    %1960 = vmatprep.subr.mxu0 0.0
    %1961 = vmatpush1.msra.mxu0 0.0
    %1962 = vmatprep.subr.mxu0 0.0
    %1963 = vmatpush1.msra.mxu0 0.0
    %1964 = vmatprep.subr.mxu0 0.0
    %1965 = vmatpush1.msra.mxu0 0.0
    %1966 = vmatprep.subr.mxu0 0.0
    %1967 = vmatpush1.msra.mxu0 0.0
    %1968 = vmatprep.subr.mxu0 0.0
    %1969 = vmatpush1.msra.mxu0 0.0
    %1970 = vmatprep.subr.mxu0 0.0
    %1971 = vmatpush1.msra.mxu0 0.0
    %1972 = vmatprep.subr.mxu0 0.0
    %1973 = vmatpush1.msra.mxu0 0.0
    %1974 = vmatprep.subr.mxu0 0.0
    %1975 = vmatpush1.msra.mxu0 0.0
    %1976 = vmatprep.subr.mxu0 0.0
    %1977 = vmatpush1.msra.mxu0 0.0
    %1978 = vmatprep.mubr.f32.mxu0 0.0
    %1979 = vmatmul.mubr.f32.gmra.mrb[0].mxu0 %v1912
    %v1980 = vpop.f32.mrb[0].mxu0
    %v1981 = vadd.f32 0.0, %v1980
    %v1982 = vpop.f32.mrb[0].mxu0
    %v1983 = vadd.f32 0.0, %v1982
    %1984 = vdwg.mxu0
    %vm1985 = vcmask 408576
    %v1987 = vsel %vm1985, %v1893, 0
    %v1990 = vsel %vm446, %v65, 0
    %v1993 = vsel %vm446, %v66, 0
    %1995 = vmatprep.subr.mxu0 %v54
    %1996 = vmatpush1.msra.mxu0 %v53
    %1997 = vmatprep.subr.mxu0 %v56
    %1998 = vmatpush1.msra.mxu0 %v55
    %1999 = vmatprep.subr.mxu0 %v58
    %2000 = vmatpush1.msra.mxu0 %v57
    %2001 = vmatprep.subr.mxu0 %v60
    %2002 = vmatpush1.msra.mxu0 %v59
    %2003 = vmatprep.subr.mxu0 %v62
    %2004 = vmatpush1.msra.mxu0 %v61
    %2005 = vmatprep.subr.mxu0 %v64
    %2006 = vmatpush1.msra.mxu0 %v63
    %2007 = vmatprep.subr.mxu0 %v1993
    %2008 = vmatpush1.msra.mxu0 %v1990
    %2009 = vmatprep.subr.mxu0 0.0
    %2010 = vmatpush1.msra.mxu0 0.0
    %2011 = vmatprep.subr.mxu0 0.0
    %2012 = vmatpush1.msra.mxu0 0.0
    %2013 = vmatprep.subr.mxu0 0.0
    %2014 = vmatpush1.msra.mxu0 0.0
    %2015 = vmatprep.subr.mxu0 0.0
    %2016 = vmatpush1.msra.mxu0 0.0
    %2017 = vmatprep.subr.mxu0 0.0
    %2018 = vmatpush1.msra.mxu0 0.0
    %2019 = vmatprep.subr.mxu0 0.0
    %2020 = vmatpush1.msra.mxu0 0.0
    %2021 = vmatprep.subr.mxu0 0.0
    %2022 = vmatpush1.msra.mxu0 0.0
    %2023 = vmatprep.subr.mxu0 0.0
    %2024 = vmatpush1.msra.mxu0 0.0
    %2025 = vmatprep.subr.mxu0 0.0
    %2026 = vmatpush1.msra.mxu0 0.0
    %2027 = vmatprep.subr.mxu0 0.0
    %2028 = vmatpush1.msra.mxu0 0.0
    %2029 = vmatprep.subr.mxu0 0.0
    %2030 = vmatpush1.msra.mxu0 0.0
    %2031 = vmatprep.subr.mxu0 0.0
    %2032 = vmatpush1.msra.mxu0 0.0
    %2033 = vmatprep.subr.mxu0 0.0
    %2034 = vmatpush1.msra.mxu0 0.0
    %2035 = vmatprep.subr.mxu0 0.0
    %2036 = vmatpush1.msra.mxu0 0.0
    %2037 = vmatprep.subr.mxu0 0.0
    %2038 = vmatpush1.msra.mxu0 0.0
    %2039 = vmatprep.subr.mxu0 0.0
    %2040 = vmatpush1.msra.mxu0 0.0
    %2041 = vmatprep.subr.mxu0 0.0
    %2042 = vmatpush1.msra.mxu0 0.0
    %2043 = vmatprep.subr.mxu0 0.0
    %2044 = vmatpush1.msra.mxu0 0.0
    %2045 = vmatprep.subr.mxu0 0.0
    %2046 = vmatpush1.msra.mxu0 0.0
    %2047 = vmatprep.subr.mxu0 0.0
    %2048 = vmatpush1.msra.mxu0 0.0
    %2049 = vmatprep.subr.mxu0 0.0
    %2050 = vmatpush1.msra.mxu0 0.0
    %2051 = vmatprep.subr.mxu0 0.0
    %2052 = vmatpush1.msra.mxu0 0.0
    %2053 = vmatprep.subr.mxu0 0.0
    %2054 = vmatpush1.msra.mxu0 0.0
    %2055 = vmatprep.subr.mxu0 0.0
    %2056 = vmatpush1.msra.mxu0 0.0
    %2057 = vmatprep.subr.mxu0 0.0
    %2058 = vmatpush1.msra.mxu0 0.0
    %2059 = vmatprep.mubr.f32.mxu0 0.0
    %2060 = vmatmul.mubr.f32.gmra.mrb[0].mxu0 %v1987
    %v2061 = vpop.f32.mrb[0].mxu0
    %v2062 = vadd.f32 %v1981, %v2061
    %v2063 = vpop.f32.mrb[0].mxu0
    %v2064 = vadd.f32 %v1983, %v2063
    %2065 = vdwg.mxu0
    %2067 = vset.pattern.permute.xlu0 0
    %2068 = vperm.xlu0 %2067, %v52
    %v2069 = vpop.permute.xlu0 %2068
    %v2071 = vadd.f32 %v2062, %v2069
    %v2072 = vadd.f32 %v2064, %v2069
    %s2073 = scalar_lea.vmem [#allocation2], 128
    %v2074 = vld [vmem:[%s2073] sm:$0xff]
    %v2075 = vld [vmem:[%s2073 + $0x8] sm:$0xff]
    %v2076 = vld [vmem:[%s2073 + $0x10] sm:$0xff]
    %v2077 = vld [vmem:[%s2073 + $0x18] sm:$0xff]
    %v2078 = vld [vmem:[%s2073 + $0x20] sm:$0xff]
    %v2079 = vld [vmem:[%s2073 + $0x28] sm:$0xff]
    %v2080 = vld [vmem:[%s2073 + $0x30] sm:$0xff]
    %v2081 = vld [vmem:[%s2073 + $0x38] sm:$0xff]
    %v2082 = vld [vmem:[%s2073 + $0x40] sm:$0xff]
    %v2083 = vld [vmem:[%s2073 + $0x48] sm:$0xff]
    %v2084 = vld [vmem:[%s2073 + $0x50] sm:$0xff]
    %v2085 = vld [vmem:[%s2073 + $0x58] sm:$0xff]
    %v2086 = vld [vmem:[%s2073 + $0x60] sm:$0xff]
    %v2087 = vld [vmem:[%s2073 + $0x68] sm:$0xff]
    %v2088 = vld [vmem:[%s2073 + $0x70] sm:$0xff]
    %v2089 = vld [vmem:[%s2073 + $0x78] sm:$0xff]
    %v2090 = vsel %vm88, %v2074, -inf
    %v2091 = vsel %vm88, %v2075, -inf
    %v2092 = vmax.f32 %v2090, %v2091
    %v2093 = vrot.slane %v2092, 4
    %v2094 = vmax.f32 %v2092, %v2093
    %v2095 = vrot.slane %v2094, 2
    %v2096 = vmax.f32 %v2094, %v2095
    %v2097 = vrot.slane %v2096, 1
    %v2098 = vmax.f32 %v2096, %v2097
    %v2099 = vsel %vm88, %v2076, -inf
    %v2100 = vsel %vm88, %v2077, -inf
    %v2101 = vmax.f32 %v2099, %v2100
    %v2102 = vrot.slane %v2101, 4
    %v2103 = vmax.f32 %v2101, %v2102
    %v2104 = vrot.slane %v2103, 2
    %v2105 = vmax.f32 %v2103, %v2104
    %v2106 = vrot.slane %v2105, 1
    %v2107 = vmax.f32 %v2105, %v2106
    %v2108 = vsel %vm88, %v2078, -inf
    %v2109 = vsel %vm88, %v2079, -inf
    %v2110 = vmax.f32 %v2108, %v2109
    %v2111 = vrot.slane %v2110, 4
    %v2112 = vmax.f32 %v2110, %v2111
    %v2113 = vrot.slane %v2112, 2
    %v2114 = vmax.f32 %v2112, %v2113
    %v2115 = vrot.slane %v2114, 1
    %v2116 = vmax.f32 %v2114, %v2115
    %v2117 = vsel %vm88, %v2080, -inf
    %v2118 = vsel %vm88, %v2081, -inf
    %v2119 = vmax.f32 %v2117, %v2118
    %v2120 = vrot.slane %v2119, 4
    %v2121 = vmax.f32 %v2119, %v2120
    %v2122 = vrot.slane %v2121, 2
    %v2123 = vmax.f32 %v2121, %v2122
    %v2124 = vrot.slane %v2123, 1
    %v2125 = vmax.f32 %v2123, %v2124
    %v2126 = vsel %vm88, %v2082, -inf
    %v2127 = vsel %vm88, %v2083, -inf
    %v2128 = vmax.f32 %v2126, %v2127
    %v2129 = vrot.slane %v2128, 4
    %v2130 = vmax.f32 %v2128, %v2129
    %v2131 = vrot.slane %v2130, 2
    %v2132 = vmax.f32 %v2130, %v2131
    %v2133 = vrot.slane %v2132, 1
    %v2134 = vmax.f32 %v2132, %v2133
    %v2135 = vsel %vm88, %v2084, -inf
    %v2136 = vsel %vm88, %v2085, -inf
    %v2137 = vmax.f32 %v2135, %v2136
    %v2138 = vrot.slane %v2137, 4
    %v2139 = vmax.f32 %v2137, %v2138
    %v2140 = vrot.slane %v2139, 2
    %v2141 = vmax.f32 %v2139, %v2140
    %v2142 = vrot.slane %v2141, 1
    %v2143 = vmax.f32 %v2141, %v2142
    %v2144 = vsel %vm88, %v2086, -inf
    %v2145 = vsel %vm88, %v2087, -inf
    %v2146 = vmax.f32 %v2144, %v2145
    %v2147 = vrot.slane %v2146, 4
    %v2148 = vmax.f32 %v2146, %v2147
    %v2149 = vrot.slane %v2148, 2
    %v2150 = vmax.f32 %v2148, %v2149
    %v2151 = vrot.slane %v2150, 1
    %v2152 = vmax.f32 %v2150, %v2151
    %v2153 = vsel %vm88, %v2088, -inf
    %v2154 = vsel %vm88, %v2089, -inf
    %v2155 = vmax.f32 %v2153, %v2154
    %v2156 = vrot.slane %v2155, 4
    %v2157 = vmax.f32 %v2155, %v2156
    %v2158 = vrot.slane %v2157, 2
    %v2159 = vmax.f32 %v2157, %v2158
    %v2160 = vrot.slane %v2159, 1
    %v2161 = vmax.f32 %v2159, %v2160
    %v2170 = vsel %vm169, %v2107, %v2098
    %v2171 = vsel %vm171, %v2116, %v2170
    %v2172 = vsel %vm173, %v2125, %v2171
    %v2173 = vsel %vm175, %v2134, %v2172
    %v2174 = vsel %vm177, %v2143, %v2173
    %v2175 = vsel %vm179, %v2152, %v2174
    %v2176 = vsel %vm181, %v2161, %v2175
    %v2178 = vsel %vm88, %v2176, -inf
    %2179 = vmax.xlane.f32.xlu0 %v2178
    %v2180 = vpop.xlane.xlu0 %2179
    %v2182 = vlaneseq
    %v2183 = vshrl.u32 %v2182, 7
    %v2184 = vsub.s32 %v189, %v2183
    %v2185 = vrot.slane %v2180, %v2184
    %v2186 = vsel %vm194, %v2185, 0
    %2188 = vmatprep.subr.mxu0 0.0
    %2189 = vmatpush1.msra.mxu0 %v67
    %2190 = vmatprep.subr.mxu0 0.0
    %2191 = vmatpush1.msra.mxu0 0.0
    %2192 = vmatprep.subr.mxu0 0.0
    %2193 = vmatpush1.msra.mxu0 0.0
    %2194 = vmatprep.subr.mxu0 0.0
    %2195 = vmatpush1.msra.mxu0 0.0
    %2196 = vmatprep.subr.mxu0 0.0
    %2197 = vmatpush1.msra.mxu0 0.0
    %2198 = vmatprep.subr.mxu0 0.0
    %2199 = vmatpush1.msra.mxu0 0.0
    %2200 = vmatprep.subr.mxu0 0.0
    %2201 = vmatpush1.msra.mxu0 0.0
    %2202 = vmatprep.subr.mxu0 0.0
    %2203 = vmatpush1.msra.mxu0 0.0
    %2204 = vmatprep.subr.mxu0 0.0
    %2205 = vmatpush1.msra.mxu0 0.0
    %2206 = vmatprep.subr.mxu0 0.0
    %2207 = vmatpush1.msra.mxu0 0.0
    %2208 = vmatprep.subr.mxu0 0.0
    %2209 = vmatpush1.msra.mxu0 0.0
    %2210 = vmatprep.subr.mxu0 0.0
    %2211 = vmatpush1.msra.mxu0 0.0
    %2212 = vmatprep.subr.mxu0 0.0
    %2213 = vmatpush1.msra.mxu0 0.0
    %2214 = vmatprep.subr.mxu0 0.0
    %2215 = vmatpush1.msra.mxu0 0.0
    %2216 = vmatprep.subr.mxu0 0.0
    %2217 = vmatpush1.msra.mxu0 0.0
    %2218 = vmatprep.subr.mxu0 0.0
    %2219 = vmatpush1.msra.mxu0 0.0
    %2220 = vmatprep.subr.mxu0 0.0
    %2221 = vmatpush1.msra.mxu0 0.0
    %2222 = vmatprep.subr.mxu0 0.0
    %2223 = vmatpush1.msra.mxu0 0.0
    %2224 = vmatprep.subr.mxu0 0.0
    %2225 = vmatpush1.msra.mxu0 0.0
    %2226 = vmatprep.subr.mxu0 0.0
    %2227 = vmatpush1.msra.mxu0 0.0
    %2228 = vmatprep.subr.mxu0 0.0
    %2229 = vmatpush1.msra.mxu0 0.0
    %2230 = vmatprep.subr.mxu0 0.0
    %2231 = vmatpush1.msra.mxu0 0.0
    %2232 = vmatprep.subr.mxu0 0.0
    %2233 = vmatpush1.msra.mxu0 0.0
    %2234 = vmatprep.subr.mxu0 0.0
    %2235 = vmatpush1.msra.mxu0 0.0
    %2236 = vmatprep.subr.mxu0 0.0
    %2237 = vmatpush1.msra.mxu0 0.0
    %2238 = vmatprep.subr.mxu0 0.0
    %2239 = vmatpush1.msra.mxu0 0.0
    %2240 = vmatprep.subr.mxu0 0.0
    %2241 = vmatpush1.msra.mxu0 0.0
    %2242 = vmatprep.subr.mxu0 0.0
    %2243 = vmatpush1.msra.mxu0 0.0
    %2244 = vmatprep.subr.mxu0 0.0
    %2245 = vmatpush1.msra.mxu0 0.0
    %2246 = vmatprep.subr.mxu0 0.0
    %2247 = vmatpush1.msra.mxu0 0.0
    %2248 = vmatprep.subr.mxu0 0.0
    %2249 = vmatpush1.msra.mxu0 0.0
    %2250 = vmatprep.subr.mxu0 0.0
    %2251 = vmatpush1.msra.mxu0 0.0
    %2252 = vmatprep.mubr.f32.mxu0 0.0
    %2253 = vmatmul.mubr.f32.gmra.mrb[0].mxu0 %v2186
    %v2254 = vpop.f32.mrb[0].mxu0
    %v2255 = vadd.f32 0.0, %v2254
    %v2256 = vpop.f32.mrb[0].mxu0
    %2257 = vdwg.mxu0
    %v2258 = vrot.slane %v2090, 4
    %v2259 = vmax.f32 %v2090, %v2258
    %v2260 = vrot.slane %v2259, 2
    %v2261 = vmax.f32 %v2259, %v2260
    %v2262 = vrot.slane %v2261, 1
    %v2263 = vmax.f32 %v2261, %v2262
    %v2264 = vrot.slane %v2099, 4
    %v2265 = vmax.f32 %v2099, %v2264
    %v2266 = vrot.slane %v2265, 2
    %v2267 = vmax.f32 %v2265, %v2266
    %v2268 = vrot.slane %v2267, 1
    %v2269 = vmax.f32 %v2267, %v2268
    %v2270 = vrot.slane %v2108, 4
    %v2271 = vmax.f32 %v2108, %v2270
    %v2272 = vrot.slane %v2271, 2
    %v2273 = vmax.f32 %v2271, %v2272
    %v2274 = vrot.slane %v2273, 1
    %v2275 = vmax.f32 %v2273, %v2274
    %v2276 = vrot.slane %v2117, 4
    %v2277 = vmax.f32 %v2117, %v2276
    %v2278 = vrot.slane %v2277, 2
    %v2279 = vmax.f32 %v2277, %v2278
    %v2280 = vrot.slane %v2279, 1
    %v2281 = vmax.f32 %v2279, %v2280
    %v2282 = vrot.slane %v2126, 4
    %v2283 = vmax.f32 %v2126, %v2282
    %v2284 = vrot.slane %v2283, 2
    %v2285 = vmax.f32 %v2283, %v2284
    %v2286 = vrot.slane %v2285, 1
    %v2287 = vmax.f32 %v2285, %v2286
    %v2288 = vrot.slane %v2135, 4
    %v2289 = vmax.f32 %v2135, %v2288
    %v2290 = vrot.slane %v2289, 2
    %v2291 = vmax.f32 %v2289, %v2290
    %v2292 = vrot.slane %v2291, 1
    %v2293 = vmax.f32 %v2291, %v2292
    %v2294 = vrot.slane %v2144, 4
    %v2295 = vmax.f32 %v2144, %v2294
    %v2296 = vrot.slane %v2295, 2
    %v2297 = vmax.f32 %v2295, %v2296
    %v2298 = vrot.slane %v2297, 1
    %v2299 = vmax.f32 %v2297, %v2298
    %v2300 = vrot.slane %v2153, 4
    %v2301 = vmax.f32 %v2153, %v2300
    %v2302 = vrot.slane %v2301, 2
    %v2303 = vmax.f32 %v2301, %v2302
    %v2304 = vrot.slane %v2303, 1
    %v2305 = vmax.f32 %v2303, %v2304
    %v2306 = vrot.slane %v2091, 4
    %v2307 = vmax.f32 %v2091, %v2306
    %v2308 = vrot.slane %v2307, 2
    %v2309 = vmax.f32 %v2307, %v2308
    %v2310 = vrot.slane %v2309, 1
    %v2311 = vmax.f32 %v2309, %v2310
    %v2312 = vrot.slane %v2100, 4
    %v2313 = vmax.f32 %v2100, %v2312
    %v2314 = vrot.slane %v2313, 2
    %v2315 = vmax.f32 %v2313, %v2314
    %v2316 = vrot.slane %v2315, 1
    %v2317 = vmax.f32 %v2315, %v2316
    %v2318 = vrot.slane %v2109, 4
    %v2319 = vmax.f32 %v2109, %v2318
    %v2320 = vrot.slane %v2319, 2
    %v2321 = vmax.f32 %v2319, %v2320
    %v2322 = vrot.slane %v2321, 1
    %v2323 = vmax.f32 %v2321, %v2322
    %v2324 = vrot.slane %v2118, 4
    %v2325 = vmax.f32 %v2118, %v2324
    %v2326 = vrot.slane %v2325, 2
    %v2327 = vmax.f32 %v2325, %v2326
    %v2328 = vrot.slane %v2327, 1
    %v2329 = vmax.f32 %v2327, %v2328
    %v2330 = vrot.slane %v2127, 4
    %v2331 = vmax.f32 %v2127, %v2330
    %v2332 = vrot.slane %v2331, 2
    %v2333 = vmax.f32 %v2331, %v2332
    %v2334 = vrot.slane %v2333, 1
    %v2335 = vmax.f32 %v2333, %v2334
    %v2336 = vrot.slane %v2136, 4
    %v2337 = vmax.f32 %v2136, %v2336
    %v2338 = vrot.slane %v2337, 2
    %v2339 = vmax.f32 %v2337, %v2338
    %v2340 = vrot.slane %v2339, 1
    %v2341 = vmax.f32 %v2339, %v2340
    %v2342 = vrot.slane %v2145, 4
    %v2343 = vmax.f32 %v2145, %v2342
    %v2344 = vrot.slane %v2343, 2
    %v2345 = vmax.f32 %v2343, %v2344
    %v2346 = vrot.slane %v2345, 1
    %v2347 = vmax.f32 %v2345, %v2346
    %v2348 = vrot.slane %v2154, 4
    %v2349 = vmax.f32 %v2154, %v2348
    %v2350 = vrot.slane %v2349, 2
    %v2351 = vmax.f32 %v2349, %v2350
    %v2352 = vrot.slane %v2351, 1
    %v2353 = vmax.f32 %v2351, %v2352
    %v2370 = vrot.slane %v2269, 7
    %v2371 = vsel %vm169, %v2370, %v2263
    %v2372 = vrot.slane %v2275, 6
    %v2373 = vsel %vm171, %v2372, %v2371
    %v2374 = vrot.slane %v2281, 5
    %v2375 = vsel %vm173, %v2374, %v2373
    %v2376 = vrot.slane %v2287, 4
    %v2377 = vsel %vm175, %v2376, %v2375
    %v2378 = vrot.slane %v2293, 3
    %v2379 = vsel %vm177, %v2378, %v2377
    %v2380 = vrot.slane %v2299, 2
    %v2381 = vsel %vm179, %v2380, %v2379
    %v2382 = vrot.slane %v2305, 1
    %v2383 = vsel %vm181, %v2382, %v2381
    %v2384 = vrot.slane %v2317, 7
    %v2385 = vsel %vm169, %v2384, %v2311
    %v2386 = vrot.slane %v2323, 6
    %v2387 = vsel %vm171, %v2386, %v2385
    %v2388 = vrot.slane %v2329, 5
    %v2389 = vsel %vm173, %v2388, %v2387
    %v2390 = vrot.slane %v2335, 4
    %v2391 = vsel %vm175, %v2390, %v2389
    %v2392 = vrot.slane %v2341, 3
    %v2393 = vsel %vm177, %v2392, %v2391
    %v2394 = vrot.slane %v2347, 2
    %v2395 = vsel %vm179, %v2394, %v2393
    %v2396 = vrot.slane %v2353, 1
    %v2397 = vsel %vm181, %v2396, %v2395
    %v2400 = vsel %vm194, %v2383, -inf
    %2401 = vmax.xlane.f32.xlu0 %v2400
    %v2402 = vpop.xlane.xlu0 %2401
    %v2403 = vsel %vm194, %v2397, -inf
    %2404 = vmax.xlane.f32.xlu0 %v2403
    %v2405 = vpop.xlane.xlu0 %2404
    %v2406 = vsel %vm415, %v2383, -inf
    %2407 = vmax.xlane.f32.xlu0 %v2406
    %v2408 = vpop.xlane.xlu0 %2407
    %v2409 = vsel %vm415, %v2397, -inf
    %2410 = vmax.xlane.f32.xlu0 %v2409
    %v2411 = vpop.xlane.xlu0 %2410
    %v2414 = vlaneseq
    %v2415 = vshrl.u32 %v2414, 7
    %v2416 = vsub.s32 %v189, %v2415
    %v2417 = vrot.slane %v2402, %v2416
    %v2418 = vlaneseq
    %v2419 = vshrl.u32 %v2418, 7
    %v2420 = vsub.s32 %v189, %v2419
    %v2421 = vrot.slane %v2405, %v2420
    %v2422 = vsel %vm169, %v2421, %v2417
    %v2426 = vlaneseq
    %v2427 = vshrl.u32 %v2426, 7
    %v2428 = vsub.s32 %v189, %v2427
    %v2429 = vrot.slane %v2408, %v2428
    %v2430 = vlaneseq
    %v2431 = vshrl.u32 %v2430, 7
    %v2432 = vsub.s32 %v189, %v2431
    %v2433 = vrot.slane %v2411, %v2432
    %v2434 = vsel %vm173, %v2433, %v2429
    %v2436 = vsel %vm446, %v2422, %v2434
    %v2438 = vsel %vm194, %v2436, 0
    %2440 = vmatprep.subr.mxu0 0.0
    %2441 = vmatpush1.msra.mxu0 %v68
    %2442 = vmatprep.subr.mxu0 0.0
    %2443 = vmatpush1.msra.mxu0 0.0
    %2444 = vmatprep.subr.mxu0 0.0
    %2445 = vmatpush1.msra.mxu0 0.0
    %2446 = vmatprep.subr.mxu0 0.0
    %2447 = vmatpush1.msra.mxu0 0.0
    %2448 = vmatprep.subr.mxu0 0.0
    %2449 = vmatpush1.msra.mxu0 0.0
    %2450 = vmatprep.subr.mxu0 0.0
    %2451 = vmatpush1.msra.mxu0 0.0
    %2452 = vmatprep.subr.mxu0 0.0
    %2453 = vmatpush1.msra.mxu0 0.0
    %2454 = vmatprep.subr.mxu0 0.0
    %2455 = vmatpush1.msra.mxu0 0.0
    %2456 = vmatprep.subr.mxu0 0.0
    %2457 = vmatpush1.msra.mxu0 0.0
    %2458 = vmatprep.subr.mxu0 0.0
    %2459 = vmatpush1.msra.mxu0 0.0
    %2460 = vmatprep.subr.mxu0 0.0
    %2461 = vmatpush1.msra.mxu0 0.0
    %2462 = vmatprep.subr.mxu0 0.0
    %2463 = vmatpush1.msra.mxu0 0.0
    %2464 = vmatprep.subr.mxu0 0.0
    %2465 = vmatpush1.msra.mxu0 0.0
    %2466 = vmatprep.subr.mxu0 0.0
    %2467 = vmatpush1.msra.mxu0 0.0
    %2468 = vmatprep.subr.mxu0 0.0
    %2469 = vmatpush1.msra.mxu0 0.0
    %2470 = vmatprep.subr.mxu0 0.0
    %2471 = vmatpush1.msra.mxu0 0.0
    %2472 = vmatprep.subr.mxu0 0.0
    %2473 = vmatpush1.msra.mxu0 0.0
    %2474 = vmatprep.subr.mxu0 0.0
    %2475 = vmatpush1.msra.mxu0 0.0
    %2476 = vmatprep.subr.mxu0 0.0
    %2477 = vmatpush1.msra.mxu0 0.0
    %2478 = vmatprep.subr.mxu0 0.0
    %2479 = vmatpush1.msra.mxu0 0.0
    %2480 = vmatprep.subr.mxu0 0.0
    %2481 = vmatpush1.msra.mxu0 0.0
    %2482 = vmatprep.subr.mxu0 0.0
    %2483 = vmatpush1.msra.mxu0 0.0
    %2484 = vmatprep.subr.mxu0 0.0
    %2485 = vmatpush1.msra.mxu0 0.0
    %2486 = vmatprep.subr.mxu0 0.0
    %2487 = vmatpush1.msra.mxu0 0.0
    %2488 = vmatprep.subr.mxu0 0.0
    %2489 = vmatpush1.msra.mxu0 0.0
    %2490 = vmatprep.subr.mxu0 0.0
    %2491 = vmatpush1.msra.mxu0 0.0
    %2492 = vmatprep.subr.mxu0 0.0
    %2493 = vmatpush1.msra.mxu0 0.0
    %2494 = vmatprep.subr.mxu0 0.0
    %2495 = vmatpush1.msra.mxu0 0.0
    %2496 = vmatprep.subr.mxu0 0.0
    %2497 = vmatpush1.msra.mxu0 0.0
    %2498 = vmatprep.subr.mxu0 0.0
    %2499 = vmatpush1.msra.mxu0 0.0
    %2500 = vmatprep.subr.mxu0 0.0
    %2501 = vmatpush1.msra.mxu0 0.0
    %2502 = vmatprep.subr.mxu0 0.0
    %2503 = vmatpush1.msra.mxu0 0.0
    %2504 = vmatprep.mubr.f32.mxu0 0.0
    %2505 = vmatmul.mubr.f32.gmra.mrb[0].mxu0 %v2438
    %v2506 = vpop.f32.mrb[0].mxu0
    %v2507 = vadd.f32 0.0, %v2506
    %v2508 = vpop.f32.mrb[0].mxu0
    %2509 = vdwg.mxu0
    %v2510 = vsel %vm521, %v2074, -inf
    %v2511 = vrot.slane %v2510, 4
    %v2512 = vmax.f32 %v2510, %v2511
    %v2513 = vrot.slane %v2512, 2
    %v2514 = vmax.f32 %v2512, %v2513
    %v2515 = vrot.slane %v2514, 1
    %v2516 = vmax.f32 %v2514, %v2515
    %v2517 = vsel %vm521, %v2076, -inf
    %v2518 = vrot.slane %v2517, 4
    %v2519 = vmax.f32 %v2517, %v2518
    %v2520 = vrot.slane %v2519, 2
    %v2521 = vmax.f32 %v2519, %v2520
    %v2522 = vrot.slane %v2521, 1
    %v2523 = vmax.f32 %v2521, %v2522
    %v2524 = vsel %vm521, %v2078, -inf
    %v2525 = vrot.slane %v2524, 4
    %v2526 = vmax.f32 %v2524, %v2525
    %v2527 = vrot.slane %v2526, 2
    %v2528 = vmax.f32 %v2526, %v2527
    %v2529 = vrot.slane %v2528, 1
    %v2530 = vmax.f32 %v2528, %v2529
    %v2531 = vsel %vm521, %v2080, -inf
    %v2532 = vrot.slane %v2531, 4
    %v2533 = vmax.f32 %v2531, %v2532
    %v2534 = vrot.slane %v2533, 2
    %v2535 = vmax.f32 %v2533, %v2534
    %v2536 = vrot.slane %v2535, 1
    %v2537 = vmax.f32 %v2535, %v2536
    %v2538 = vsel %vm521, %v2082, -inf
    %v2539 = vrot.slane %v2538, 4
    %v2540 = vmax.f32 %v2538, %v2539
    %v2541 = vrot.slane %v2540, 2
    %v2542 = vmax.f32 %v2540, %v2541
    %v2543 = vrot.slane %v2542, 1
    %v2544 = vmax.f32 %v2542, %v2543
    %v2545 = vsel %vm521, %v2084, -inf
    %v2546 = vrot.slane %v2545, 4
    %v2547 = vmax.f32 %v2545, %v2546
    %v2548 = vrot.slane %v2547, 2
    %v2549 = vmax.f32 %v2547, %v2548
    %v2550 = vrot.slane %v2549, 1
    %v2551 = vmax.f32 %v2549, %v2550
    %v2552 = vsel %vm521, %v2086, -inf
    %v2553 = vrot.slane %v2552, 4
    %v2554 = vmax.f32 %v2552, %v2553
    %v2555 = vrot.slane %v2554, 2
    %v2556 = vmax.f32 %v2554, %v2555
    %v2557 = vrot.slane %v2556, 1
    %v2558 = vmax.f32 %v2556, %v2557
    %v2559 = vsel %vm521, %v2088, -inf
    %v2560 = vrot.slane %v2559, 4
    %v2561 = vmax.f32 %v2559, %v2560
    %v2562 = vrot.slane %v2561, 2
    %v2563 = vmax.f32 %v2561, %v2562
    %v2564 = vrot.slane %v2563, 1
    %v2565 = vmax.f32 %v2563, %v2564
    %v2566 = vsel %vm578, %v2074, -inf
    %v2567 = vsel %vm580, %v2075, -inf
    %v2568 = vmax.f32 %v2566, %v2567
    %v2569 = vrot.slane %v2568, 4
    %v2570 = vmax.f32 %v2568, %v2569
    %v2571 = vrot.slane %v2570, 2
    %v2572 = vmax.f32 %v2570, %v2571
    %v2573 = vrot.slane %v2572, 1
    %v2574 = vmax.f32 %v2572, %v2573
    %v2575 = vsel %vm578, %v2076, -inf
    %v2576 = vsel %vm580, %v2077, -inf
    %v2577 = vmax.f32 %v2575, %v2576
    %v2578 = vrot.slane %v2577, 4
    %v2579 = vmax.f32 %v2577, %v2578
    %v2580 = vrot.slane %v2579, 2
    %v2581 = vmax.f32 %v2579, %v2580
    %v2582 = vrot.slane %v2581, 1
    %v2583 = vmax.f32 %v2581, %v2582
    %v2584 = vsel %vm578, %v2078, -inf
    %v2585 = vsel %vm580, %v2079, -inf
    %v2586 = vmax.f32 %v2584, %v2585
    %v2587 = vrot.slane %v2586, 4
    %v2588 = vmax.f32 %v2586, %v2587
    %v2589 = vrot.slane %v2588, 2
    %v2590 = vmax.f32 %v2588, %v2589
    %v2591 = vrot.slane %v2590, 1
    %v2592 = vmax.f32 %v2590, %v2591
    %v2593 = vsel %vm578, %v2080, -inf
    %v2594 = vsel %vm580, %v2081, -inf
    %v2595 = vmax.f32 %v2593, %v2594
    %v2596 = vrot.slane %v2595, 4
    %v2597 = vmax.f32 %v2595, %v2596
    %v2598 = vrot.slane %v2597, 2
    %v2599 = vmax.f32 %v2597, %v2598
    %v2600 = vrot.slane %v2599, 1
    %v2601 = vmax.f32 %v2599, %v2600
    %v2602 = vsel %vm578, %v2082, -inf
    %v2603 = vsel %vm580, %v2083, -inf
    %v2604 = vmax.f32 %v2602, %v2603
    %v2605 = vrot.slane %v2604, 4
    %v2606 = vmax.f32 %v2604, %v2605
    %v2607 = vrot.slane %v2606, 2
    %v2608 = vmax.f32 %v2606, %v2607
    %v2609 = vrot.slane %v2608, 1
    %v2610 = vmax.f32 %v2608, %v2609
    %v2611 = vsel %vm578, %v2084, -inf
    %v2612 = vsel %vm580, %v2085, -inf
    %v2613 = vmax.f32 %v2611, %v2612
    %v2614 = vrot.slane %v2613, 4
    %v2615 = vmax.f32 %v2613, %v2614
    %v2616 = vrot.slane %v2615, 2
    %v2617 = vmax.f32 %v2615, %v2616
    %v2618 = vrot.slane %v2617, 1
    %v2619 = vmax.f32 %v2617, %v2618
    %v2620 = vsel %vm578, %v2086, -inf
    %v2621 = vsel %vm580, %v2087, -inf
    %v2622 = vmax.f32 %v2620, %v2621
    %v2623 = vrot.slane %v2622, 4
    %v2624 = vmax.f32 %v2622, %v2623
    %v2625 = vrot.slane %v2624, 2
    %v2626 = vmax.f32 %v2624, %v2625
    %v2627 = vrot.slane %v2626, 1
    %v2628 = vmax.f32 %v2626, %v2627
    %v2629 = vsel %vm578, %v2088, -inf
    %v2630 = vsel %vm580, %v2089, -inf
    %v2631 = vmax.f32 %v2629, %v2630
    %v2632 = vrot.slane %v2631, 4
    %v2633 = vmax.f32 %v2631, %v2632
    %v2634 = vrot.slane %v2633, 2
    %v2635 = vmax.f32 %v2633, %v2634
    %v2636 = vrot.slane %v2635, 1
    %v2637 = vmax.f32 %v2635, %v2636
    %v2638 = vsel %vm652, %v2075, -inf
    %v2639 = vrot.slane %v2638, 4
    %v2640 = vmax.f32 %v2638, %v2639
    %v2641 = vrot.slane %v2640, 2
    %v2642 = vmax.f32 %v2640, %v2641
    %v2643 = vrot.slane %v2642, 1
    %v2644 = vmax.f32 %v2642, %v2643
    %v2645 = vsel %vm652, %v2077, -inf
    %v2646 = vrot.slane %v2645, 4
    %v2647 = vmax.f32 %v2645, %v2646
    %v2648 = vrot.slane %v2647, 2
    %v2649 = vmax.f32 %v2647, %v2648
    %v2650 = vrot.slane %v2649, 1
    %v2651 = vmax.f32 %v2649, %v2650
    %v2652 = vsel %vm652, %v2079, -inf
    %v2653 = vrot.slane %v2652, 4
    %v2654 = vmax.f32 %v2652, %v2653
    %v2655 = vrot.slane %v2654, 2
    %v2656 = vmax.f32 %v2654, %v2655
    %v2657 = vrot.slane %v2656, 1
    %v2658 = vmax.f32 %v2656, %v2657
    %v2659 = vsel %vm652, %v2081, -inf
    %v2660 = vrot.slane %v2659, 4
    %v2661 = vmax.f32 %v2659, %v2660
    %v2662 = vrot.slane %v2661, 2
    %v2663 = vmax.f32 %v2661, %v2662
    %v2664 = vrot.slane %v2663, 1
    %v2665 = vmax.f32 %v2663, %v2664
    %v2666 = vsel %vm652, %v2083, -inf
    %v2667 = vrot.slane %v2666, 4
    %v2668 = vmax.f32 %v2666, %v2667
    %v2669 = vrot.slane %v2668, 2
    %v2670 = vmax.f32 %v2668, %v2669
    %v2671 = vrot.slane %v2670, 1
    %v2672 = vmax.f32 %v2670, %v2671
    %v2673 = vsel %vm652, %v2085, -inf
    %v2674 = vrot.slane %v2673, 4
    %v2675 = vmax.f32 %v2673, %v2674
    %v2676 = vrot.slane %v2675, 2
    %v2677 = vmax.f32 %v2675, %v2676
    %v2678 = vrot.slane %v2677, 1
    %v2679 = vmax.f32 %v2677, %v2678
    %v2680 = vsel %vm652, %v2087, -inf
    %v2681 = vrot.slane %v2680, 4
    %v2682 = vmax.f32 %v2680, %v2681
    %v2683 = vrot.slane %v2682, 2
    %v2684 = vmax.f32 %v2682, %v2683
    %v2685 = vrot.slane %v2684, 1
    %v2686 = vmax.f32 %v2684, %v2685
    %v2687 = vsel %vm652, %v2089, -inf
    %v2688 = vrot.slane %v2687, 4
    %v2689 = vmax.f32 %v2687, %v2688
    %v2690 = vrot.slane %v2689, 2
    %v2691 = vmax.f32 %v2689, %v2690
    %v2692 = vrot.slane %v2691, 1
    %v2693 = vmax.f32 %v2691, %v2692
    %v2718 = vrot.slane %v2523, 7
    %v2719 = vsel %vm169, %v2718, %v2516
    %v2720 = vrot.slane %v2530, 6
    %v2721 = vsel %vm171, %v2720, %v2719
    %v2722 = vrot.slane %v2537, 5
    %v2723 = vsel %vm173, %v2722, %v2721
    %v2724 = vrot.slane %v2544, 4
    %v2725 = vsel %vm175, %v2724, %v2723
    %v2726 = vrot.slane %v2551, 3
    %v2727 = vsel %vm177, %v2726, %v2725
    %v2728 = vrot.slane %v2558, 2
    %v2729 = vsel %vm179, %v2728, %v2727
    %v2730 = vrot.slane %v2565, 1
    %v2731 = vsel %vm181, %v2730, %v2729
    %v2732 = vrot.slane %v2583, 7
    %v2733 = vsel %vm169, %v2732, %v2574
    %v2734 = vrot.slane %v2592, 6
    %v2735 = vsel %vm171, %v2734, %v2733
    %v2736 = vrot.slane %v2601, 5
    %v2737 = vsel %vm173, %v2736, %v2735
    %v2738 = vrot.slane %v2610, 4
    %v2739 = vsel %vm175, %v2738, %v2737
    %v2740 = vrot.slane %v2619, 3
    %v2741 = vsel %vm177, %v2740, %v2739
    %v2742 = vrot.slane %v2628, 2
    %v2743 = vsel %vm179, %v2742, %v2741
    %v2744 = vrot.slane %v2637, 1
    %v2745 = vsel %vm181, %v2744, %v2743
    %v2746 = vrot.slane %v2651, 7
    %v2747 = vsel %vm169, %v2746, %v2644
    %v2748 = vrot.slane %v2658, 6
    %v2749 = vsel %vm171, %v2748, %v2747
    %v2750 = vrot.slane %v2665, 5
    %v2751 = vsel %vm173, %v2750, %v2749
    %v2752 = vrot.slane %v2672, 4
    %v2753 = vsel %vm175, %v2752, %v2751
    %v2754 = vrot.slane %v2679, 3
    %v2755 = vsel %vm177, %v2754, %v2753
    %v2756 = vrot.slane %v2686, 2
    %v2757 = vsel %vm179, %v2756, %v2755
    %v2758 = vrot.slane %v2693, 1
    %v2759 = vsel %vm181, %v2758, %v2757
    %v2763 = vsel %vm778, %v2731, -inf
    %2764 = vmax.xlane.f32.xlu0 %v2763
    %v2765 = vpop.xlane.xlu0 %2764
    %v2766 = vsel %vm778, %v2745, -inf
    %2767 = vmax.xlane.f32.xlu0 %v2766
    %v2768 = vpop.xlane.xlu0 %2767
    %v2769 = vsel %vm778, %v2759, -inf
    %2770 = vmax.xlane.f32.xlu0 %v2769
    %v2771 = vpop.xlane.xlu0 %2770
    %v2772 = vsel %vm788, %v2731, -inf
    %2773 = vmax.xlane.f32.xlu0 %v2772
    %v2774 = vpop.xlane.xlu0 %2773
    %v2775 = vsel %vm788, %v2745, -inf
    %2776 = vmax.xlane.f32.xlu0 %v2775
    %v2777 = vpop.xlane.xlu0 %2776
    %v2778 = vsel %vm788, %v2759, -inf
    %2779 = vmax.xlane.f32.xlu0 %v2778
    %v2780 = vpop.xlane.xlu0 %2779
    %v2781 = vsel %vm798, %v2731, -inf
    %2782 = vmax.xlane.f32.xlu0 %v2781
    %v2783 = vpop.xlane.xlu0 %2782
    %v2784 = vsel %vm798, %v2745, -inf
    %2785 = vmax.xlane.f32.xlu0 %v2784
    %v2786 = vpop.xlane.xlu0 %2785
    %v2787 = vsel %vm798, %v2759, -inf
    %2788 = vmax.xlane.f32.xlu0 %v2787
    %v2789 = vpop.xlane.xlu0 %2788
    %v2793 = vlaneseq
    %v2794 = vshrl.u32 %v2793, 7
    %v2795 = vsub.s32 %v189, %v2794
    %v2796 = vrot.slane %v2765, %v2795
    %v2797 = vlaneseq
    %v2798 = vshrl.u32 %v2797, 7
    %v2799 = vsub.s32 %v189, %v2798
    %v2800 = vrot.slane %v2768, %v2799
    %v2801 = vlaneseq
    %v2802 = vshrl.u32 %v2801, 7
    %v2803 = vsub.s32 %v189, %v2802
    %v2804 = vrot.slane %v2771, %v2803
    %v2805 = vsel %vm169, %v2800, %v2796
    %v2806 = vsel %vm171, %v2804, %v2805
    %v2811 = vlaneseq
    %v2812 = vshrl.u32 %v2811, 7
    %v2813 = vsub.s32 %v189, %v2812
    %v2814 = vrot.slane %v2774, %v2813
    %v2815 = vlaneseq
    %v2816 = vshrl.u32 %v2815, 7
    %v2817 = vsub.s32 %v189, %v2816
    %v2818 = vrot.slane %v2777, %v2817
    %v2819 = vlaneseq
    %v2820 = vshrl.u32 %v2819, 7
    %v2821 = vsub.s32 %v189, %v2820
    %v2822 = vrot.slane %v2780, %v2821
    %v2823 = vsel %vm175, %v2818, %v2814
    %v2824 = vsel %vm177, %v2822, %v2823
    %v2829 = vlaneseq
    %v2830 = vshrl.u32 %v2829, 7
    %v2831 = vsub.s32 %v189, %v2830
    %v2832 = vrot.slane %v2783, %v2831
    %v2833 = vlaneseq
    %v2834 = vshrl.u32 %v2833, 7
    %v2835 = vsub.s32 %v189, %v2834
    %v2836 = vrot.slane %v2786, %v2835
    %v2837 = vlaneseq
    %v2838 = vshrl.u32 %v2837, 7
    %v2839 = vsub.s32 %v189, %v2838
    %v2840 = vrot.slane %v2789, %v2839
    %v2841 = vsel %vm181, %v2836, %v2832
    %v2843 = vsel %vm861, %v2806, %v2824
    %v2844 = vsel %vm863, %v2843, %v2841
    %v2846 = vsel %vm194, %v2844, 0
    %v2848 = vsel %vm194, %v2840, 0
    %2850 = vmatprep.subr.mxu0 0.0
    %2851 = vmatpush1.msra.mxu0 %v69
    %2852 = vmatprep.subr.mxu0 0.0
    %2853 = vmatpush1.msra.mxu0 0.0
    %2854 = vmatprep.subr.mxu0 0.0
    %2855 = vmatpush1.msra.mxu0 0.0
    %2856 = vmatprep.subr.mxu0 0.0
    %2857 = vmatpush1.msra.mxu0 0.0
    %2858 = vmatprep.subr.mxu0 0.0
    %2859 = vmatpush1.msra.mxu0 0.0
    %2860 = vmatprep.subr.mxu0 0.0
    %2861 = vmatpush1.msra.mxu0 0.0
    %2862 = vmatprep.subr.mxu0 0.0
    %2863 = vmatpush1.msra.mxu0 0.0
    %2864 = vmatprep.subr.mxu0 0.0
    %2865 = vmatpush1.msra.mxu0 0.0
    %2866 = vmatprep.subr.mxu0 0.0
    %2867 = vmatpush1.msra.mxu0 0.0
    %2868 = vmatprep.subr.mxu0 0.0
    %2869 = vmatpush1.msra.mxu0 0.0
    %2870 = vmatprep.subr.mxu0 0.0
    %2871 = vmatpush1.msra.mxu0 0.0
    %2872 = vmatprep.subr.mxu0 0.0
    %2873 = vmatpush1.msra.mxu0 0.0
    %2874 = vmatprep.subr.mxu0 0.0
    %2875 = vmatpush1.msra.mxu0 0.0
    %2876 = vmatprep.subr.mxu0 0.0
    %2877 = vmatpush1.msra.mxu0 0.0
    %2878 = vmatprep.subr.mxu0 0.0
    %2879 = vmatpush1.msra.mxu0 0.0
    %2880 = vmatprep.subr.mxu0 0.0
    %2881 = vmatpush1.msra.mxu0 0.0
    %2882 = vmatprep.subr.mxu0 0.0
    %2883 = vmatpush1.msra.mxu0 0.0
    %2884 = vmatprep.subr.mxu0 0.0
    %2885 = vmatpush1.msra.mxu0 0.0
    %2886 = vmatprep.subr.mxu0 0.0
    %2887 = vmatpush1.msra.mxu0 0.0
    %2888 = vmatprep.subr.mxu0 0.0
    %2889 = vmatpush1.msra.mxu0 0.0
    %2890 = vmatprep.subr.mxu0 0.0
    %2891 = vmatpush1.msra.mxu0 0.0
    %2892 = vmatprep.subr.mxu0 0.0
    %2893 = vmatpush1.msra.mxu0 0.0
    %2894 = vmatprep.subr.mxu0 0.0
    %2895 = vmatpush1.msra.mxu0 0.0
    %2896 = vmatprep.subr.mxu0 0.0
    %2897 = vmatpush1.msra.mxu0 0.0
    %2898 = vmatprep.subr.mxu0 0.0
    %2899 = vmatpush1.msra.mxu0 0.0
    %2900 = vmatprep.subr.mxu0 0.0
    %2901 = vmatpush1.msra.mxu0 0.0
    %2902 = vmatprep.subr.mxu0 0.0
    %2903 = vmatpush1.msra.mxu0 0.0
    %2904 = vmatprep.subr.mxu0 0.0
    %2905 = vmatpush1.msra.mxu0 0.0
    %2906 = vmatprep.subr.mxu0 0.0
    %2907 = vmatpush1.msra.mxu0 0.0
    %2908 = vmatprep.subr.mxu0 0.0
    %2909 = vmatpush1.msra.mxu0 0.0
    %2910 = vmatprep.subr.mxu0 0.0
    %2911 = vmatpush1.msra.mxu0 0.0
    %2912 = vmatprep.subr.mxu0 0.0
    %2913 = vmatpush1.msra.mxu0 0.0
    %2914 = vmatprep.mubr.f32.mxu0 0.0
    %2915 = vmatmul.mubr.f32.gmra.mrb[0].mxu0 %v2846
    %v2916 = vpop.f32.mrb[0].mxu0
    %v2917 = vadd.f32 0.0, %v2916
    %v2918 = vpop.f32.mrb[0].mxu0
    %2919 = vmatprep.mubr.f32.mxu0 0.0
    %2920 = vmatmul.mubr.f32.gmra.mrb[0].mxu0 %v2848
    %v2921 = vpop.f32.mrb[0].mxu0
    %v2922 = vadd.f32 0.0, %v2921
    %v2923 = vpop.f32.mrb[0].mxu0
    %2924 = vdwg.mxu0
    %v2925 = vsel %vm580, %v2074, -inf
    %v2926 = vrot.slane %v2925, 4
    %v2927 = vmax.f32 %v2925, %v2926
    %v2928 = vrot.slane %v2927, 2
    %v2929 = vmax.f32 %v2927, %v2928
    %v2930 = vrot.slane %v2929, 1
    %v2931 = vmax.f32 %v2929, %v2930
    %v2932 = vsel %vm580, %v2076, -inf
    %v2933 = vrot.slane %v2932, 4
    %v2934 = vmax.f32 %v2932, %v2933
    %v2935 = vrot.slane %v2934, 2
    %v2936 = vmax.f32 %v2934, %v2935
    %v2937 = vrot.slane %v2936, 1
    %v2938 = vmax.f32 %v2936, %v2937
    %v2939 = vsel %vm580, %v2078, -inf
    %v2940 = vrot.slane %v2939, 4
    %v2941 = vmax.f32 %v2939, %v2940
    %v2942 = vrot.slane %v2941, 2
    %v2943 = vmax.f32 %v2941, %v2942
    %v2944 = vrot.slane %v2943, 1
    %v2945 = vmax.f32 %v2943, %v2944
    %v2946 = vsel %vm580, %v2080, -inf
    %v2947 = vrot.slane %v2946, 4
    %v2948 = vmax.f32 %v2946, %v2947
    %v2949 = vrot.slane %v2948, 2
    %v2950 = vmax.f32 %v2948, %v2949
    %v2951 = vrot.slane %v2950, 1
    %v2952 = vmax.f32 %v2950, %v2951
    %v2953 = vsel %vm580, %v2082, -inf
    %v2954 = vrot.slane %v2953, 4
    %v2955 = vmax.f32 %v2953, %v2954
    %v2956 = vrot.slane %v2955, 2
    %v2957 = vmax.f32 %v2955, %v2956
    %v2958 = vrot.slane %v2957, 1
    %v2959 = vmax.f32 %v2957, %v2958
    %v2960 = vsel %vm580, %v2084, -inf
    %v2961 = vrot.slane %v2960, 4
    %v2962 = vmax.f32 %v2960, %v2961
    %v2963 = vrot.slane %v2962, 2
    %v2964 = vmax.f32 %v2962, %v2963
    %v2965 = vrot.slane %v2964, 1
    %v2966 = vmax.f32 %v2964, %v2965
    %v2967 = vsel %vm580, %v2086, -inf
    %v2968 = vrot.slane %v2967, 4
    %v2969 = vmax.f32 %v2967, %v2968
    %v2970 = vrot.slane %v2969, 2
    %v2971 = vmax.f32 %v2969, %v2970
    %v2972 = vrot.slane %v2971, 1
    %v2973 = vmax.f32 %v2971, %v2972
    %v2974 = vsel %vm580, %v2088, -inf
    %v2975 = vrot.slane %v2974, 4
    %v2976 = vmax.f32 %v2974, %v2975
    %v2977 = vrot.slane %v2976, 2
    %v2978 = vmax.f32 %v2976, %v2977
    %v2979 = vrot.slane %v2978, 1
    %v2980 = vmax.f32 %v2978, %v2979
    %v2981 = vsel %vm1001, %v2074, -inf
    %v2982 = vrot.slane %v2981, 4
    %v2983 = vmax.f32 %v2981, %v2982
    %v2984 = vrot.slane %v2983, 2
    %v2985 = vmax.f32 %v2983, %v2984
    %v2986 = vrot.slane %v2985, 1
    %v2987 = vmax.f32 %v2985, %v2986
    %v2988 = vsel %vm1001, %v2076, -inf
    %v2989 = vrot.slane %v2988, 4
    %v2990 = vmax.f32 %v2988, %v2989
    %v2991 = vrot.slane %v2990, 2
    %v2992 = vmax.f32 %v2990, %v2991
    %v2993 = vrot.slane %v2992, 1
    %v2994 = vmax.f32 %v2992, %v2993
    %v2995 = vsel %vm1001, %v2078, -inf
    %v2996 = vrot.slane %v2995, 4
    %v2997 = vmax.f32 %v2995, %v2996
    %v2998 = vrot.slane %v2997, 2
    %v2999 = vmax.f32 %v2997, %v2998
    %v3000 = vrot.slane %v2999, 1
    %v3001 = vmax.f32 %v2999, %v3000
    %v3002 = vsel %vm1001, %v2080, -inf
    %v3003 = vrot.slane %v3002, 4
    %v3004 = vmax.f32 %v3002, %v3003
    %v3005 = vrot.slane %v3004, 2
    %v3006 = vmax.f32 %v3004, %v3005
    %v3007 = vrot.slane %v3006, 1
    %v3008 = vmax.f32 %v3006, %v3007
    %v3009 = vsel %vm1001, %v2082, -inf
    %v3010 = vrot.slane %v3009, 4
    %v3011 = vmax.f32 %v3009, %v3010
    %v3012 = vrot.slane %v3011, 2
    %v3013 = vmax.f32 %v3011, %v3012
    %v3014 = vrot.slane %v3013, 1
    %v3015 = vmax.f32 %v3013, %v3014
    %v3016 = vsel %vm1001, %v2084, -inf
    %v3017 = vrot.slane %v3016, 4
    %v3018 = vmax.f32 %v3016, %v3017
    %v3019 = vrot.slane %v3018, 2
    %v3020 = vmax.f32 %v3018, %v3019
    %v3021 = vrot.slane %v3020, 1
    %v3022 = vmax.f32 %v3020, %v3021
    %v3023 = vsel %vm1001, %v2086, -inf
    %v3024 = vrot.slane %v3023, 4
    %v3025 = vmax.f32 %v3023, %v3024
    %v3026 = vrot.slane %v3025, 2
    %v3027 = vmax.f32 %v3025, %v3026
    %v3028 = vrot.slane %v3027, 1
    %v3029 = vmax.f32 %v3027, %v3028
    %v3030 = vsel %vm1001, %v2088, -inf
    %v3031 = vrot.slane %v3030, 4
    %v3032 = vmax.f32 %v3030, %v3031
    %v3033 = vrot.slane %v3032, 2
    %v3034 = vmax.f32 %v3032, %v3033
    %v3035 = vrot.slane %v3034, 1
    %v3036 = vmax.f32 %v3034, %v3035
    %v3037 = vrot.slane %v2566, 4
    %v3038 = vmax.f32 %v2566, %v3037
    %v3039 = vrot.slane %v3038, 2
    %v3040 = vmax.f32 %v3038, %v3039
    %v3041 = vrot.slane %v3040, 1
    %v3042 = vmax.f32 %v3040, %v3041
    %v3043 = vrot.slane %v2575, 4
    %v3044 = vmax.f32 %v2575, %v3043
    %v3045 = vrot.slane %v3044, 2
    %v3046 = vmax.f32 %v3044, %v3045
    %v3047 = vrot.slane %v3046, 1
    %v3048 = vmax.f32 %v3046, %v3047
    %v3049 = vrot.slane %v2584, 4
    %v3050 = vmax.f32 %v2584, %v3049
    %v3051 = vrot.slane %v3050, 2
    %v3052 = vmax.f32 %v3050, %v3051
    %v3053 = vrot.slane %v3052, 1
    %v3054 = vmax.f32 %v3052, %v3053
    %v3055 = vrot.slane %v2593, 4
    %v3056 = vmax.f32 %v2593, %v3055
    %v3057 = vrot.slane %v3056, 2
    %v3058 = vmax.f32 %v3056, %v3057
    %v3059 = vrot.slane %v3058, 1
    %v3060 = vmax.f32 %v3058, %v3059
    %v3061 = vrot.slane %v2602, 4
    %v3062 = vmax.f32 %v2602, %v3061
    %v3063 = vrot.slane %v3062, 2
    %v3064 = vmax.f32 %v3062, %v3063
    %v3065 = vrot.slane %v3064, 1
    %v3066 = vmax.f32 %v3064, %v3065
    %v3067 = vrot.slane %v2611, 4
    %v3068 = vmax.f32 %v2611, %v3067
    %v3069 = vrot.slane %v3068, 2
    %v3070 = vmax.f32 %v3068, %v3069
    %v3071 = vrot.slane %v3070, 1
    %v3072 = vmax.f32 %v3070, %v3071
    %v3073 = vrot.slane %v2620, 4
    %v3074 = vmax.f32 %v2620, %v3073
    %v3075 = vrot.slane %v3074, 2
    %v3076 = vmax.f32 %v3074, %v3075
    %v3077 = vrot.slane %v3076, 1
    %v3078 = vmax.f32 %v3076, %v3077
    %v3079 = vrot.slane %v2629, 4
    %v3080 = vmax.f32 %v2629, %v3079
    %v3081 = vrot.slane %v3080, 2
    %v3082 = vmax.f32 %v3080, %v3081
    %v3083 = vrot.slane %v3082, 1
    %v3084 = vmax.f32 %v3082, %v3083
    %v3085 = vrot.slane %v2567, 4
    %v3086 = vmax.f32 %v2567, %v3085
    %v3087 = vrot.slane %v3086, 2
    %v3088 = vmax.f32 %v3086, %v3087
    %v3089 = vrot.slane %v3088, 1
    %v3090 = vmax.f32 %v3088, %v3089
    %v3091 = vrot.slane %v2576, 4
    %v3092 = vmax.f32 %v2576, %v3091
    %v3093 = vrot.slane %v3092, 2
    %v3094 = vmax.f32 %v3092, %v3093
    %v3095 = vrot.slane %v3094, 1
    %v3096 = vmax.f32 %v3094, %v3095
    %v3097 = vrot.slane %v2585, 4
    %v3098 = vmax.f32 %v2585, %v3097
    %v3099 = vrot.slane %v3098, 2
    %v3100 = vmax.f32 %v3098, %v3099
    %v3101 = vrot.slane %v3100, 1
    %v3102 = vmax.f32 %v3100, %v3101
    %v3103 = vrot.slane %v2594, 4
    %v3104 = vmax.f32 %v2594, %v3103
    %v3105 = vrot.slane %v3104, 2
    %v3106 = vmax.f32 %v3104, %v3105
    %v3107 = vrot.slane %v3106, 1
    %v3108 = vmax.f32 %v3106, %v3107
    %v3109 = vrot.slane %v2603, 4
    %v3110 = vmax.f32 %v2603, %v3109
    %v3111 = vrot.slane %v3110, 2
    %v3112 = vmax.f32 %v3110, %v3111
    %v3113 = vrot.slane %v3112, 1
    %v3114 = vmax.f32 %v3112, %v3113
    %v3115 = vrot.slane %v2612, 4
    %v3116 = vmax.f32 %v2612, %v3115
    %v3117 = vrot.slane %v3116, 2
    %v3118 = vmax.f32 %v3116, %v3117
    %v3119 = vrot.slane %v3118, 1
    %v3120 = vmax.f32 %v3118, %v3119
    %v3121 = vrot.slane %v2621, 4
    %v3122 = vmax.f32 %v2621, %v3121
    %v3123 = vrot.slane %v3122, 2
    %v3124 = vmax.f32 %v3122, %v3123
    %v3125 = vrot.slane %v3124, 1
    %v3126 = vmax.f32 %v3124, %v3125
    %v3127 = vrot.slane %v2630, 4
    %v3128 = vmax.f32 %v2630, %v3127
    %v3129 = vrot.slane %v3128, 2
    %v3130 = vmax.f32 %v3128, %v3129
    %v3131 = vrot.slane %v3130, 1
    %v3132 = vmax.f32 %v3130, %v3131
    %v3133 = vsel %vm1001, %v2075, -inf
    %v3134 = vrot.slane %v3133, 4
    %v3135 = vmax.f32 %v3133, %v3134
    %v3136 = vrot.slane %v3135, 2
    %v3137 = vmax.f32 %v3135, %v3136
    %v3138 = vrot.slane %v3137, 1
    %v3139 = vmax.f32 %v3137, %v3138
    %v3140 = vsel %vm1001, %v2077, -inf
    %v3141 = vrot.slane %v3140, 4
    %v3142 = vmax.f32 %v3140, %v3141
    %v3143 = vrot.slane %v3142, 2
    %v3144 = vmax.f32 %v3142, %v3143
    %v3145 = vrot.slane %v3144, 1
    %v3146 = vmax.f32 %v3144, %v3145
    %v3147 = vsel %vm1001, %v2079, -inf
    %v3148 = vrot.slane %v3147, 4
    %v3149 = vmax.f32 %v3147, %v3148
    %v3150 = vrot.slane %v3149, 2
    %v3151 = vmax.f32 %v3149, %v3150
    %v3152 = vrot.slane %v3151, 1
    %v3153 = vmax.f32 %v3151, %v3152
    %v3154 = vsel %vm1001, %v2081, -inf
    %v3155 = vrot.slane %v3154, 4
    %v3156 = vmax.f32 %v3154, %v3155
    %v3157 = vrot.slane %v3156, 2
    %v3158 = vmax.f32 %v3156, %v3157
    %v3159 = vrot.slane %v3158, 1
    %v3160 = vmax.f32 %v3158, %v3159
    %v3161 = vsel %vm1001, %v2083, -inf
    %v3162 = vrot.slane %v3161, 4
    %v3163 = vmax.f32 %v3161, %v3162
    %v3164 = vrot.slane %v3163, 2
    %v3165 = vmax.f32 %v3163, %v3164
    %v3166 = vrot.slane %v3165, 1
    %v3167 = vmax.f32 %v3165, %v3166
    %v3168 = vsel %vm1001, %v2085, -inf
    %v3169 = vrot.slane %v3168, 4
    %v3170 = vmax.f32 %v3168, %v3169
    %v3171 = vrot.slane %v3170, 2
    %v3172 = vmax.f32 %v3170, %v3171
    %v3173 = vrot.slane %v3172, 1
    %v3174 = vmax.f32 %v3172, %v3173
    %v3175 = vsel %vm1001, %v2087, -inf
    %v3176 = vrot.slane %v3175, 4
    %v3177 = vmax.f32 %v3175, %v3176
    %v3178 = vrot.slane %v3177, 2
    %v3179 = vmax.f32 %v3177, %v3178
    %v3180 = vrot.slane %v3179, 1
    %v3181 = vmax.f32 %v3179, %v3180
    %v3182 = vsel %vm1001, %v2089, -inf
    %v3183 = vrot.slane %v3182, 4
    %v3184 = vmax.f32 %v3182, %v3183
    %v3185 = vrot.slane %v3184, 2
    %v3186 = vmax.f32 %v3184, %v3185
    %v3187 = vrot.slane %v3186, 1
    %v3188 = vmax.f32 %v3186, %v3187
    %v3189 = vsel %vm578, %v2075, -inf
    %v3190 = vrot.slane %v3189, 4
    %v3191 = vmax.f32 %v3189, %v3190
    %v3192 = vrot.slane %v3191, 2
    %v3193 = vmax.f32 %v3191, %v3192
    %v3194 = vrot.slane %v3193, 1
    %v3195 = vmax.f32 %v3193, %v3194
    %v3196 = vsel %vm578, %v2077, -inf
    %v3197 = vrot.slane %v3196, 4
    %v3198 = vmax.f32 %v3196, %v3197
    %v3199 = vrot.slane %v3198, 2
    %v3200 = vmax.f32 %v3198, %v3199
    %v3201 = vrot.slane %v3200, 1
    %v3202 = vmax.f32 %v3200, %v3201
    %v3203 = vsel %vm578, %v2079, -inf
    %v3204 = vrot.slane %v3203, 4
    %v3205 = vmax.f32 %v3203, %v3204
    %v3206 = vrot.slane %v3205, 2
    %v3207 = vmax.f32 %v3205, %v3206
    %v3208 = vrot.slane %v3207, 1
    %v3209 = vmax.f32 %v3207, %v3208
    %v3210 = vsel %vm578, %v2081, -inf
    %v3211 = vrot.slane %v3210, 4
    %v3212 = vmax.f32 %v3210, %v3211
    %v3213 = vrot.slane %v3212, 2
    %v3214 = vmax.f32 %v3212, %v3213
    %v3215 = vrot.slane %v3214, 1
    %v3216 = vmax.f32 %v3214, %v3215
    %v3217 = vsel %vm578, %v2083, -inf
    %v3218 = vrot.slane %v3217, 4
    %v3219 = vmax.f32 %v3217, %v3218
    %v3220 = vrot.slane %v3219, 2
    %v3221 = vmax.f32 %v3219, %v3220
    %v3222 = vrot.slane %v3221, 1
    %v3223 = vmax.f32 %v3221, %v3222
    %v3224 = vsel %vm578, %v2085, -inf
    %v3225 = vrot.slane %v3224, 4
    %v3226 = vmax.f32 %v3224, %v3225
    %v3227 = vrot.slane %v3226, 2
    %v3228 = vmax.f32 %v3226, %v3227
    %v3229 = vrot.slane %v3228, 1
    %v3230 = vmax.f32 %v3228, %v3229
    %v3231 = vsel %vm578, %v2087, -inf
    %v3232 = vrot.slane %v3231, 4
    %v3233 = vmax.f32 %v3231, %v3232
    %v3234 = vrot.slane %v3233, 2
    %v3235 = vmax.f32 %v3233, %v3234
    %v3236 = vrot.slane %v3235, 1
    %v3237 = vmax.f32 %v3235, %v3236
    %v3238 = vsel %vm578, %v2089, -inf
    %v3239 = vrot.slane %v3238, 4
    %v3240 = vmax.f32 %v3238, %v3239
    %v3241 = vrot.slane %v3240, 2
    %v3242 = vmax.f32 %v3240, %v3241
    %v3243 = vrot.slane %v3242, 1
    %v3244 = vmax.f32 %v3242, %v3243
    %v3293 = vrot.slane %v2938, 7
    %v3294 = vsel %vm169, %v3293, %v2931
    %v3295 = vrot.slane %v2945, 6
    %v3296 = vsel %vm171, %v3295, %v3294
    %v3297 = vrot.slane %v2952, 5
    %v3298 = vsel %vm173, %v3297, %v3296
    %v3299 = vrot.slane %v2959, 4
    %v3300 = vsel %vm175, %v3299, %v3298
    %v3301 = vrot.slane %v2966, 3
    %v3302 = vsel %vm177, %v3301, %v3300
    %v3303 = vrot.slane %v2973, 2
    %v3304 = vsel %vm179, %v3303, %v3302
    %v3305 = vrot.slane %v2980, 1
    %v3306 = vsel %vm181, %v3305, %v3304
    %v3307 = vrot.slane %v2994, 7
    %v3308 = vsel %vm169, %v3307, %v2987
    %v3309 = vrot.slane %v3001, 6
    %v3310 = vsel %vm171, %v3309, %v3308
    %v3311 = vrot.slane %v3008, 5
    %v3312 = vsel %vm173, %v3311, %v3310
    %v3313 = vrot.slane %v3015, 4
    %v3314 = vsel %vm175, %v3313, %v3312
    %v3315 = vrot.slane %v3022, 3
    %v3316 = vsel %vm177, %v3315, %v3314
    %v3317 = vrot.slane %v3029, 2
    %v3318 = vsel %vm179, %v3317, %v3316
    %v3319 = vrot.slane %v3036, 1
    %v3320 = vsel %vm181, %v3319, %v3318
    %v3321 = vrot.slane %v3048, 7
    %v3322 = vsel %vm169, %v3321, %v3042
    %v3323 = vrot.slane %v3054, 6
    %v3324 = vsel %vm171, %v3323, %v3322
    %v3325 = vrot.slane %v3060, 5
    %v3326 = vsel %vm173, %v3325, %v3324
    %v3327 = vrot.slane %v3066, 4
    %v3328 = vsel %vm175, %v3327, %v3326
    %v3329 = vrot.slane %v3072, 3
    %v3330 = vsel %vm177, %v3329, %v3328
    %v3331 = vrot.slane %v3078, 2
    %v3332 = vsel %vm179, %v3331, %v3330
    %v3333 = vrot.slane %v3084, 1
    %v3334 = vsel %vm181, %v3333, %v3332
    %v3335 = vrot.slane %v3096, 7
    %v3336 = vsel %vm169, %v3335, %v3090
    %v3337 = vrot.slane %v3102, 6
    %v3338 = vsel %vm171, %v3337, %v3336
    %v3339 = vrot.slane %v3108, 5
    %v3340 = vsel %vm173, %v3339, %v3338
    %v3341 = vrot.slane %v3114, 4
    %v3342 = vsel %vm175, %v3341, %v3340
    %v3343 = vrot.slane %v3120, 3
    %v3344 = vsel %vm177, %v3343, %v3342
    %v3345 = vrot.slane %v3126, 2
    %v3346 = vsel %vm179, %v3345, %v3344
    %v3347 = vrot.slane %v3132, 1
    %v3348 = vsel %vm181, %v3347, %v3346
    %v3349 = vrot.slane %v3146, 7
    %v3350 = vsel %vm169, %v3349, %v3139
    %v3351 = vrot.slane %v3153, 6
    %v3352 = vsel %vm171, %v3351, %v3350
    %v3353 = vrot.slane %v3160, 5
    %v3354 = vsel %vm173, %v3353, %v3352
    %v3355 = vrot.slane %v3167, 4
    %v3356 = vsel %vm175, %v3355, %v3354
    %v3357 = vrot.slane %v3174, 3
    %v3358 = vsel %vm177, %v3357, %v3356
    %v3359 = vrot.slane %v3181, 2
    %v3360 = vsel %vm179, %v3359, %v3358
    %v3361 = vrot.slane %v3188, 1
    %v3362 = vsel %vm181, %v3361, %v3360
    %v3363 = vrot.slane %v3202, 7
    %v3364 = vsel %vm169, %v3363, %v3195
    %v3365 = vrot.slane %v3209, 6
    %v3366 = vsel %vm171, %v3365, %v3364
    %v3367 = vrot.slane %v3216, 5
    %v3368 = vsel %vm173, %v3367, %v3366
    %v3369 = vrot.slane %v3223, 4
    %v3370 = vsel %vm175, %v3369, %v3368
    %v3371 = vrot.slane %v3230, 3
    %v3372 = vsel %vm177, %v3371, %v3370
    %v3373 = vrot.slane %v3237, 2
    %v3374 = vsel %vm179, %v3373, %v3372
    %v3375 = vrot.slane %v3244, 1
    %v3376 = vsel %vm181, %v3375, %v3374
    %v3383 = vsel %vm1404, %v3306, -inf
    %3384 = vmax.xlane.f32.xlu0 %v3383
    %v3385 = vpop.xlane.xlu0 %3384
    %v3386 = vsel %vm1404, %v3320, -inf
    %3387 = vmax.xlane.f32.xlu0 %v3386
    %v3388 = vpop.xlane.xlu0 %3387
    %v3389 = vsel %vm1404, %v3334, -inf
    %3390 = vmax.xlane.f32.xlu0 %v3389
    %v3391 = vpop.xlane.xlu0 %3390
    %v3392 = vsel %vm1404, %v3348, -inf
    %3393 = vmax.xlane.f32.xlu0 %v3392
    %v3394 = vpop.xlane.xlu0 %3393
    %v3395 = vsel %vm1404, %v3362, -inf
    %3396 = vmax.xlane.f32.xlu0 %v3395
    %v3397 = vpop.xlane.xlu0 %3396
    %v3398 = vsel %vm1404, %v3376, -inf
    %3399 = vmax.xlane.f32.xlu0 %v3398
    %v3400 = vpop.xlane.xlu0 %3399
    %v3401 = vsel %vm1423, %v3306, -inf
    %3402 = vmax.xlane.f32.xlu0 %v3401
    %v3403 = vpop.xlane.xlu0 %3402
    %v3404 = vsel %vm1423, %v3320, -inf
    %3405 = vmax.xlane.f32.xlu0 %v3404
    %v3406 = vpop.xlane.xlu0 %3405
    %v3407 = vsel %vm1423, %v3334, -inf
    %3408 = vmax.xlane.f32.xlu0 %v3407
    %v3409 = vpop.xlane.xlu0 %3408
    %v3410 = vsel %vm1423, %v3348, -inf
    %3411 = vmax.xlane.f32.xlu0 %v3410
    %v3412 = vpop.xlane.xlu0 %3411
    %v3413 = vsel %vm1423, %v3362, -inf
    %3414 = vmax.xlane.f32.xlu0 %v3413
    %v3415 = vpop.xlane.xlu0 %3414
    %v3416 = vsel %vm1423, %v3376, -inf
    %3417 = vmax.xlane.f32.xlu0 %v3416
    %v3418 = vpop.xlane.xlu0 %3417
    %v3419 = vsel %vm1442, %v3306, -inf
    %3420 = vmax.xlane.f32.xlu0 %v3419
    %v3421 = vpop.xlane.xlu0 %3420
    %v3422 = vsel %vm1442, %v3320, -inf
    %3423 = vmax.xlane.f32.xlu0 %v3422
    %v3424 = vpop.xlane.xlu0 %3423
    %v3425 = vsel %vm1442, %v3334, -inf
    %3426 = vmax.xlane.f32.xlu0 %v3425
    %v3427 = vpop.xlane.xlu0 %3426
    %v3428 = vsel %vm1442, %v3348, -inf
    %3429 = vmax.xlane.f32.xlu0 %v3428
    %v3430 = vpop.xlane.xlu0 %3429
    %v3431 = vsel %vm1442, %v3362, -inf
    %3432 = vmax.xlane.f32.xlu0 %v3431
    %v3433 = vpop.xlane.xlu0 %3432
    %v3434 = vsel %vm1442, %v3376, -inf
    %3435 = vmax.xlane.f32.xlu0 %v3434
    %v3436 = vpop.xlane.xlu0 %3435
    %v3437 = vsel %vm1461, %v3306, -inf
    %3438 = vmax.xlane.f32.xlu0 %v3437
    %v3439 = vpop.xlane.xlu0 %3438
    %v3440 = vsel %vm1461, %v3320, -inf
    %3441 = vmax.xlane.f32.xlu0 %v3440
    %v3442 = vpop.xlane.xlu0 %3441
    %v3443 = vsel %vm1461, %v3334, -inf
    %3444 = vmax.xlane.f32.xlu0 %v3443
    %v3445 = vpop.xlane.xlu0 %3444
    %v3446 = vsel %vm1461, %v3348, -inf
    %3447 = vmax.xlane.f32.xlu0 %v3446
    %v3448 = vpop.xlane.xlu0 %3447
    %v3449 = vsel %vm1461, %v3362, -inf
    %3450 = vmax.xlane.f32.xlu0 %v3449
    %v3451 = vpop.xlane.xlu0 %3450
    %v3452 = vsel %vm1461, %v3376, -inf
    %3453 = vmax.xlane.f32.xlu0 %v3452
    %v3454 = vpop.xlane.xlu0 %3453
    %v3455 = vsel %vm1480, %v3306, -inf
    %3456 = vmax.xlane.f32.xlu0 %v3455
    %v3457 = vpop.xlane.xlu0 %3456
    %v3458 = vsel %vm1480, %v3320, -inf
    %3459 = vmax.xlane.f32.xlu0 %v3458
    %v3460 = vpop.xlane.xlu0 %3459
    %v3461 = vsel %vm1480, %v3334, -inf
    %3462 = vmax.xlane.f32.xlu0 %v3461
    %v3463 = vpop.xlane.xlu0 %3462
    %v3464 = vsel %vm1480, %v3348, -inf
    %3465 = vmax.xlane.f32.xlu0 %v3464
    %v3466 = vpop.xlane.xlu0 %3465
    %v3467 = vsel %vm1480, %v3362, -inf
    %3468 = vmax.xlane.f32.xlu0 %v3467
    %v3469 = vpop.xlane.xlu0 %3468
    %v3470 = vsel %vm1480, %v3376, -inf
    %3471 = vmax.xlane.f32.xlu0 %v3470
    %v3472 = vpop.xlane.xlu0 %3471
    %v3473 = vsel %vm1499, %v3306, -inf
    %3474 = vmax.xlane.f32.xlu0 %v3473
    %v3475 = vpop.xlane.xlu0 %3474
    %v3476 = vsel %vm1499, %v3320, -inf
    %3477 = vmax.xlane.f32.xlu0 %v3476
    %v3478 = vpop.xlane.xlu0 %3477
    %v3479 = vsel %vm1499, %v3334, -inf
    %3480 = vmax.xlane.f32.xlu0 %v3479
    %v3481 = vpop.xlane.xlu0 %3480
    %v3482 = vsel %vm1499, %v3348, -inf
    %3483 = vmax.xlane.f32.xlu0 %v3482
    %v3484 = vpop.xlane.xlu0 %3483
    %v3485 = vsel %vm1499, %v3362, -inf
    %3486 = vmax.xlane.f32.xlu0 %v3485
    %v3487 = vpop.xlane.xlu0 %3486
    %v3488 = vsel %vm1499, %v3376, -inf
    %3489 = vmax.xlane.f32.xlu0 %v3488
    %v3490 = vpop.xlane.xlu0 %3489
    %v3497 = vlaneseq
    %v3498 = vshrl.u32 %v3497, 7
    %v3499 = vsub.s32 %v189, %v3498
    %v3500 = vrot.slane %v3385, %v3499
    %v3501 = vlaneseq
    %v3502 = vshrl.u32 %v3501, 7
    %v3503 = vsub.s32 %v189, %v3502
    %v3504 = vrot.slane %v3388, %v3503
    %v3505 = vlaneseq
    %v3506 = vshrl.u32 %v3505, 7
    %v3507 = vsub.s32 %v189, %v3506
    %v3508 = vrot.slane %v3391, %v3507
    %v3509 = vlaneseq
    %v3510 = vshrl.u32 %v3509, 7
    %v3511 = vsub.s32 %v189, %v3510
    %v3512 = vrot.slane %v3394, %v3511
    %v3513 = vlaneseq
    %v3514 = vshrl.u32 %v3513, 7
    %v3515 = vsub.s32 %v189, %v3514
    %v3516 = vrot.slane %v3397, %v3515
    %v3517 = vlaneseq
    %v3518 = vshrl.u32 %v3517, 7
    %v3519 = vsub.s32 %v189, %v3518
    %v3520 = vrot.slane %v3400, %v3519
    %v3521 = vsel %vm169, %v3504, %v3500
    %v3522 = vsel %vm171, %v3508, %v3521
    %v3523 = vsel %vm173, %v3512, %v3522
    %v3524 = vsel %vm175, %v3516, %v3523
    %v3525 = vsel %vm177, %v3520, %v3524
    %v3533 = vlaneseq
    %v3534 = vshrl.u32 %v3533, 7
    %v3535 = vsub.s32 %v189, %v3534
    %v3536 = vrot.slane %v3403, %v3535
    %v3537 = vlaneseq
    %v3538 = vshrl.u32 %v3537, 7
    %v3539 = vsub.s32 %v189, %v3538
    %v3540 = vrot.slane %v3406, %v3539
    %v3541 = vlaneseq
    %v3542 = vshrl.u32 %v3541, 7
    %v3543 = vsub.s32 %v189, %v3542
    %v3544 = vrot.slane %v3409, %v3543
    %v3545 = vlaneseq
    %v3546 = vshrl.u32 %v3545, 7
    %v3547 = vsub.s32 %v189, %v3546
    %v3548 = vrot.slane %v3412, %v3547
    %v3549 = vlaneseq
    %v3550 = vshrl.u32 %v3549, 7
    %v3551 = vsub.s32 %v189, %v3550
    %v3552 = vrot.slane %v3415, %v3551
    %v3553 = vlaneseq
    %v3554 = vshrl.u32 %v3553, 7
    %v3555 = vsub.s32 %v189, %v3554
    %v3556 = vrot.slane %v3418, %v3555
    %v3557 = vsel %vm181, %v3540, %v3536
    %v3558 = vsel %vm169, %v3548, %v3544
    %v3559 = vsel %vm171, %v3552, %v3558
    %v3560 = vsel %vm173, %v3556, %v3559
    %v3569 = vlaneseq
    %v3570 = vshrl.u32 %v3569, 7
    %v3571 = vsub.s32 %v189, %v3570
    %v3572 = vrot.slane %v3421, %v3571
    %v3573 = vlaneseq
    %v3574 = vshrl.u32 %v3573, 7
    %v3575 = vsub.s32 %v189, %v3574
    %v3576 = vrot.slane %v3424, %v3575
    %v3577 = vlaneseq
    %v3578 = vshrl.u32 %v3577, 7
    %v3579 = vsub.s32 %v189, %v3578
    %v3580 = vrot.slane %v3427, %v3579
    %v3581 = vlaneseq
    %v3582 = vshrl.u32 %v3581, 7
    %v3583 = vsub.s32 %v189, %v3582
    %v3584 = vrot.slane %v3430, %v3583
    %v3585 = vlaneseq
    %v3586 = vshrl.u32 %v3585, 7
    %v3587 = vsub.s32 %v189, %v3586
    %v3588 = vrot.slane %v3433, %v3587
    %v3589 = vlaneseq
    %v3590 = vshrl.u32 %v3589, 7
    %v3591 = vsub.s32 %v189, %v3590
    %v3592 = vrot.slane %v3436, %v3591
    %v3593 = vsel %vm177, %v3576, %v3572
    %v3594 = vsel %vm179, %v3580, %v3593
    %v3595 = vsel %vm181, %v3584, %v3594
    %v3596 = vsel %vm169, %v3592, %v3588
    %v3605 = vlaneseq
    %v3606 = vshrl.u32 %v3605, 7
    %v3607 = vsub.s32 %v189, %v3606
    %v3608 = vrot.slane %v3439, %v3607
    %v3609 = vlaneseq
    %v3610 = vshrl.u32 %v3609, 7
    %v3611 = vsub.s32 %v189, %v3610
    %v3612 = vrot.slane %v3442, %v3611
    %v3613 = vlaneseq
    %v3614 = vshrl.u32 %v3613, 7
    %v3615 = vsub.s32 %v189, %v3614
    %v3616 = vrot.slane %v3445, %v3615
    %v3617 = vlaneseq
    %v3618 = vshrl.u32 %v3617, 7
    %v3619 = vsub.s32 %v189, %v3618
    %v3620 = vrot.slane %v3448, %v3619
    %v3621 = vlaneseq
    %v3622 = vshrl.u32 %v3621, 7
    %v3623 = vsub.s32 %v189, %v3622
    %v3624 = vrot.slane %v3451, %v3623
    %v3625 = vlaneseq
    %v3626 = vshrl.u32 %v3625, 7
    %v3627 = vsub.s32 %v189, %v3626
    %v3628 = vrot.slane %v3454, %v3627
    %v3629 = vsel %vm173, %v3612, %v3608
    %v3630 = vsel %vm175, %v3616, %v3629
    %v3631 = vsel %vm177, %v3620, %v3630
    %v3632 = vsel %vm179, %v3624, %v3631
    %v3633 = vsel %vm181, %v3628, %v3632
    %v3641 = vlaneseq
    %v3642 = vshrl.u32 %v3641, 7
    %v3643 = vsub.s32 %v189, %v3642
    %v3644 = vrot.slane %v3457, %v3643
    %v3645 = vlaneseq
    %v3646 = vshrl.u32 %v3645, 7
    %v3647 = vsub.s32 %v189, %v3646
    %v3648 = vrot.slane %v3460, %v3647
    %v3649 = vlaneseq
    %v3650 = vshrl.u32 %v3649, 7
    %v3651 = vsub.s32 %v189, %v3650
    %v3652 = vrot.slane %v3463, %v3651
    %v3653 = vlaneseq
    %v3654 = vshrl.u32 %v3653, 7
    %v3655 = vsub.s32 %v189, %v3654
    %v3656 = vrot.slane %v3466, %v3655
    %v3657 = vlaneseq
    %v3658 = vshrl.u32 %v3657, 7
    %v3659 = vsub.s32 %v189, %v3658
    %v3660 = vrot.slane %v3469, %v3659
    %v3661 = vlaneseq
    %v3662 = vshrl.u32 %v3661, 7
    %v3663 = vsub.s32 %v189, %v3662
    %v3664 = vrot.slane %v3472, %v3663
    %v3665 = vsel %vm169, %v3648, %v3644
    %v3666 = vsel %vm171, %v3652, %v3665
    %v3667 = vsel %vm173, %v3656, %v3666
    %v3668 = vsel %vm175, %v3660, %v3667
    %v3669 = vsel %vm177, %v3664, %v3668
    %v3677 = vlaneseq
    %v3678 = vshrl.u32 %v3677, 7
    %v3679 = vsub.s32 %v189, %v3678
    %v3680 = vrot.slane %v3475, %v3679
    %v3681 = vlaneseq
    %v3682 = vshrl.u32 %v3681, 7
    %v3683 = vsub.s32 %v189, %v3682
    %v3684 = vrot.slane %v3478, %v3683
    %v3685 = vlaneseq
    %v3686 = vshrl.u32 %v3685, 7
    %v3687 = vsub.s32 %v189, %v3686
    %v3688 = vrot.slane %v3481, %v3687
    %v3689 = vlaneseq
    %v3690 = vshrl.u32 %v3689, 7
    %v3691 = vsub.s32 %v189, %v3690
    %v3692 = vrot.slane %v3484, %v3691
    %v3693 = vlaneseq
    %v3694 = vshrl.u32 %v3693, 7
    %v3695 = vsub.s32 %v189, %v3694
    %v3696 = vrot.slane %v3487, %v3695
    %v3697 = vlaneseq
    %v3698 = vshrl.u32 %v3697, 7
    %v3699 = vsub.s32 %v189, %v3698
    %v3700 = vrot.slane %v3490, %v3699
    %v3701 = vsel %vm181, %v3684, %v3680
    %v3702 = vsel %vm169, %v3692, %v3688
    %v3703 = vsel %vm171, %v3696, %v3702
    %v3704 = vsel %vm173, %v3700, %v3703
    %v3706 = vsel %vm863, %v3525, %v3557
    %v3707 = vsel %vm1734, %v3560, %v3595
    %v3708 = vsel %vm446, %v3596, %v3633
    %v3709 = vsel %vm863, %v3669, %v3701
    %v3711 = vsel %vm194, %v3706, 0
    %v3714 = vsel %vm194, %v3707, 0
    %v3717 = vsel %vm194, %v3708, 0
    %v3720 = vsel %vm194, %v3709, 0
    %v3722 = vsel %vm194, %v3704, 0
    %3724 = vmatprep.subr.mxu0 0.0
    %3725 = vmatpush1.msra.mxu0 %v70
    %3726 = vmatprep.subr.mxu0 0.0
    %3727 = vmatpush1.msra.mxu0 0.0
    %3728 = vmatprep.subr.mxu0 0.0
    %3729 = vmatpush1.msra.mxu0 0.0
    %3730 = vmatprep.subr.mxu0 0.0
    %3731 = vmatpush1.msra.mxu0 0.0
    %3732 = vmatprep.subr.mxu0 0.0
    %3733 = vmatpush1.msra.mxu0 0.0
    %3734 = vmatprep.subr.mxu0 0.0
    %3735 = vmatpush1.msra.mxu0 0.0
    %3736 = vmatprep.subr.mxu0 0.0
    %3737 = vmatpush1.msra.mxu0 0.0
    %3738 = vmatprep.subr.mxu0 0.0
    %3739 = vmatpush1.msra.mxu0 0.0
    %3740 = vmatprep.subr.mxu0 0.0
    %3741 = vmatpush1.msra.mxu0 0.0
    %3742 = vmatprep.subr.mxu0 0.0
    %3743 = vmatpush1.msra.mxu0 0.0
    %3744 = vmatprep.subr.mxu0 0.0
    %3745 = vmatpush1.msra.mxu0 0.0
    %3746 = vmatprep.subr.mxu0 0.0
    %3747 = vmatpush1.msra.mxu0 0.0
    %3748 = vmatprep.subr.mxu0 0.0
    %3749 = vmatpush1.msra.mxu0 0.0
    %3750 = vmatprep.subr.mxu0 0.0
    %3751 = vmatpush1.msra.mxu0 0.0
    %3752 = vmatprep.subr.mxu0 0.0
    %3753 = vmatpush1.msra.mxu0 0.0
    %3754 = vmatprep.subr.mxu0 0.0
    %3755 = vmatpush1.msra.mxu0 0.0
    %3756 = vmatprep.subr.mxu0 0.0
    %3757 = vmatpush1.msra.mxu0 0.0
    %3758 = vmatprep.subr.mxu0 0.0
    %3759 = vmatpush1.msra.mxu0 0.0
    %3760 = vmatprep.subr.mxu0 0.0
    %3761 = vmatpush1.msra.mxu0 0.0
    %3762 = vmatprep.subr.mxu0 0.0
    %3763 = vmatpush1.msra.mxu0 0.0
    %3764 = vmatprep.subr.mxu0 0.0
    %3765 = vmatpush1.msra.mxu0 0.0
    %3766 = vmatprep.subr.mxu0 0.0
    %3767 = vmatpush1.msra.mxu0 0.0
    %3768 = vmatprep.subr.mxu0 0.0
    %3769 = vmatpush1.msra.mxu0 0.0
    %3770 = vmatprep.subr.mxu0 0.0
    %3771 = vmatpush1.msra.mxu0 0.0
    %3772 = vmatprep.subr.mxu0 0.0
    %3773 = vmatpush1.msra.mxu0 0.0
    %3774 = vmatprep.subr.mxu0 0.0
    %3775 = vmatpush1.msra.mxu0 0.0
    %3776 = vmatprep.subr.mxu0 0.0
    %3777 = vmatpush1.msra.mxu0 0.0
    %3778 = vmatprep.subr.mxu0 0.0
    %3779 = vmatpush1.msra.mxu0 0.0
    %3780 = vmatprep.subr.mxu0 0.0
    %3781 = vmatpush1.msra.mxu0 0.0
    %3782 = vmatprep.subr.mxu0 0.0
    %3783 = vmatpush1.msra.mxu0 0.0
    %3784 = vmatprep.subr.mxu0 0.0
    %3785 = vmatpush1.msra.mxu0 0.0
    %3786 = vmatprep.subr.mxu0 0.0
    %3787 = vmatpush1.msra.mxu0 0.0
    %3788 = vmatprep.mubr.f32.mxu0 0.0
    %3789 = vmatmul.mubr.f32.gmra.mrb[0].mxu0 %v3711
    %v3790 = vpop.f32.mrb[0].mxu0
    %v3791 = vadd.f32 0.0, %v3790
    %v3792 = vpop.f32.mrb[0].mxu0
    %3793 = vmatprep.mubr.f32.mxu0 0.0
    %3794 = vmatmul.mubr.f32.gmra.mrb[0].mxu0 %v3714
    %v3795 = vpop.f32.mrb[0].mxu0
    %v3796 = vadd.f32 0.0, %v3795
    %v3797 = vpop.f32.mrb[0].mxu0
    %3798 = vmatprep.mubr.f32.mxu0 0.0
    %3799 = vmatmul.mubr.f32.gmra.mrb[0].mxu0 %v3717
    %v3800 = vpop.f32.mrb[0].mxu0
    %v3801 = vadd.f32 0.0, %v3800
    %v3802 = vpop.f32.mrb[0].mxu0
    %3803 = vmatprep.mubr.f32.mxu0 0.0
    %3804 = vmatmul.mubr.f32.gmra.mrb[0].mxu0 %v3720
    %v3805 = vpop.f32.mrb[0].mxu0
    %v3806 = vadd.f32 0.0, %v3805
    %v3807 = vpop.f32.mrb[0].mxu0
    %3808 = vmatprep.mubr.f32.mxu0 0.0
    %3809 = vmatmul.mubr.f32.gmra.mrb[0].mxu0 %v3722
    %v3810 = vpop.f32.mrb[0].mxu0
    %v3811 = vadd.f32 0.0, %v3810
    %v3812 = vpop.f32.mrb[0].mxu0
    %3813 = vdwg.mxu0
    %v3815 = vrot.slane %v2507, 7
    %v3819 = vrot.slane %v2917, 3
    %v3820 = vrot.slane %v2922, 3
    %v3821 = vsel %vm1847, %v3819, %v3820
    %v3829 = vrot.slane %v3791, 2
    %v3830 = vrot.slane %v3796, 2
    %v3831 = vsel %vm863, %v3829, %v3830
    %v3832 = vrot.slane %v3801, 2
    %v3833 = vsel %vm863, %v3830, %v3832
    %v3834 = vrot.slane %v3806, 2
    %v3835 = vsel %vm863, %v3832, %v3834
    %v3836 = vrot.slane %v3811, 2
    %v3837 = vsel %vm863, %v3834, %v3836
    %v3844 = vsel %vm1873, %v2255, %v3815
    %v3845 = vsel %vm1847, %v3844, %v3819
    %v3846 = vsel %vm863, %v3821, %v3829
    %3847 = vxpose.xlu0.b32.start [1/16] %v3845, 128
    %3848 = vxpose.xlu0.b32.cont [2/16] %v3846, 128
    %3849 = vxpose.xlu0.b32.cont [3/16] %v3831, 128
    %3850 = vxpose.xlu0.b32.cont [4/16] %v3833, 128
    %3851 = vxpose.xlu0.b32.cont [5/16] %v3835, 128
    %3852 = vxpose.xlu0.b32.cont [6/16] %v3837, 128
    %3853 = vxpose.xlu0.b32.cont [7/16] %v3836, 128
    %3854 = vxpose.xlu0.b32.cont [8/16] 0.0, 128
    %3855 = vxpose.xlu0.b32.cont [9/16] 0.0, 128
    %3856 = vxpose.xlu0.b32.cont [10/16] 0.0, 128
    %3857 = vxpose.xlu0.b32.cont [11/16] 0.0, 128
    %3858 = vxpose.xlu0.b32.cont [12/16] 0.0, 128
    %3859 = vxpose.xlu0.b32.cont [13/16] 0.0, 128
    %3860 = vxpose.xlu0.b32.cont [14/16] 0.0, 128
    %3861 = vxpose.xlu0.b32.cont [15/16] 0.0, 128
    %3862 = vxpose.xlu0.b32.end [16/16] 0.0, 128
    %v3863 = vpop.trf.xlu0
    %v3864 = vpop.trf.xlu0
    %v3865 = vpop.trf.xlu0
    %v3866 = vpop.trf.xlu0
    %v3867 = vpop.trf.xlu0
    %v3868 = vpop.trf.xlu0
    %v3869 = vpop.trf.xlu0
    %v3870 = vpop.trf.xlu0
    %v3871 = vpop.trf.xlu0
    %v3872 = vpop.trf.xlu0
    %v3873 = vpop.trf.xlu0
    %v3874 = vpop.trf.xlu0
    %v3875 = vpop.trf.xlu0
    %v3876 = vpop.trf.xlu0
    %v3877 = vpop.trf.xlu0
    %v3878 = vpop.trf.xlu0
    %s3879 = scalar_lea.vmem %s1, 16
    %v3880 = vld [vmem:[%s3879] sm:$0xff]
    %v3881 = vld [vmem:[%s3879 + $0x8] sm:$0xff]
    %3882 = vmatprep.subr.mxu0 %v3881
    %3883 = vmatpush1.msra.mxu0 %v3880
    %3884 = vmatprep.subr.mxu0 0.0
    %3885 = vmatpush1.msra.mxu0 0.0
    %3886 = vmatprep.subr.mxu0 0.0
    %3887 = vmatpush1.msra.mxu0 0.0
    %3888 = vmatprep.subr.mxu0 0.0
    %3889 = vmatpush1.msra.mxu0 0.0
    %3890 = vmatprep.subr.mxu0 0.0
    %3891 = vmatpush1.msra.mxu0 0.0
    %3892 = vmatprep.subr.mxu0 0.0
    %3893 = vmatpush1.msra.mxu0 0.0
    %3894 = vmatprep.subr.mxu0 0.0
    %3895 = vmatpush1.msra.mxu0 0.0
    %3896 = vmatprep.subr.mxu0 0.0
    %3897 = vmatpush1.msra.mxu0 0.0
    %3898 = vmatprep.subr.mxu0 0.0
    %3899 = vmatpush1.msra.mxu0 0.0
    %3900 = vmatprep.subr.mxu0 0.0
    %3901 = vmatpush1.msra.mxu0 0.0
    %3902 = vmatprep.subr.mxu0 0.0
    %3903 = vmatpush1.msra.mxu0 0.0
    %3904 = vmatprep.subr.mxu0 0.0
    %3905 = vmatpush1.msra.mxu0 0.0
    %3906 = vmatprep.subr.mxu0 0.0
    %3907 = vmatpush1.msra.mxu0 0.0
    %3908 = vmatprep.subr.mxu0 0.0
    %3909 = vmatpush1.msra.mxu0 0.0
    %3910 = vmatprep.subr.mxu0 0.0
    %3911 = vmatpush1.msra.mxu0 0.0
    %3912 = vmatprep.subr.mxu0 0.0
    %3913 = vmatpush1.msra.mxu0 0.0
    %3914 = vmatprep.subr.mxu0 0.0
    %3915 = vmatpush1.msra.mxu0 0.0
    %3916 = vmatprep.subr.mxu0 0.0
    %3917 = vmatpush1.msra.mxu0 0.0
    %3918 = vmatprep.subr.mxu0 0.0
    %3919 = vmatpush1.msra.mxu0 0.0
    %3920 = vmatprep.subr.mxu0 0.0
    %3921 = vmatpush1.msra.mxu0 0.0
    %3922 = vmatprep.subr.mxu0 0.0
    %3923 = vmatpush1.msra.mxu0 0.0
    %3924 = vmatprep.subr.mxu0 0.0
    %3925 = vmatpush1.msra.mxu0 0.0
    %3926 = vmatprep.subr.mxu0 0.0
    %3927 = vmatpush1.msra.mxu0 0.0
    %3928 = vmatprep.subr.mxu0 0.0
    %3929 = vmatpush1.msra.mxu0 0.0
    %3930 = vmatprep.subr.mxu0 0.0
    %3931 = vmatpush1.msra.mxu0 0.0
    %3932 = vmatprep.subr.mxu0 0.0
    %3933 = vmatpush1.msra.mxu0 0.0
    %3934 = vmatprep.subr.mxu0 0.0
    %3935 = vmatpush1.msra.mxu0 0.0
    %3936 = vmatprep.subr.mxu0 0.0
    %3937 = vmatpush1.msra.mxu0 0.0
    %3938 = vmatprep.subr.mxu0 0.0
    %3939 = vmatpush1.msra.mxu0 0.0
    %3940 = vmatprep.subr.mxu0 0.0
    %3941 = vmatpush1.msra.mxu0 0.0
    %3942 = vmatprep.subr.mxu0 0.0
    %3943 = vmatpush1.msra.mxu0 0.0
    %3944 = vmatprep.subr.mxu0 0.0
    %3945 = vmatpush1.msra.mxu0 0.0
    %3946 = vmatprep.mubr.f32.mxu0 0.0
    %3947 = vmatmul.mubr.f32.gmra.mrb[0].mxu0 %v1912
    %v3948 = vpop.f32.mrb[0].mxu0
    %v3949 = vadd.f32 0.0, %v3948
    %v3950 = vpop.f32.mrb[0].mxu0
    %v3951 = vadd.f32 0.0, %v3950
    %3952 = vdwg.mxu0
    %v3954 = vsel %vm1985, %v3863, 0
    %3956 = vmatprep.subr.mxu0 %v54
    %3957 = vmatpush1.msra.mxu0 %v53
    %3958 = vmatprep.subr.mxu0 %v56
    %3959 = vmatpush1.msra.mxu0 %v55
    %3960 = vmatprep.subr.mxu0 %v58
    %3961 = vmatpush1.msra.mxu0 %v57
    %3962 = vmatprep.subr.mxu0 %v60
    %3963 = vmatpush1.msra.mxu0 %v59
    %3964 = vmatprep.subr.mxu0 %v62
    %3965 = vmatpush1.msra.mxu0 %v61
    %3966 = vmatprep.subr.mxu0 %v64
    %3967 = vmatpush1.msra.mxu0 %v63
    %3968 = vmatprep.subr.mxu0 %v1993
    %3969 = vmatpush1.msra.mxu0 %v1990
    %3970 = vmatprep.subr.mxu0 0.0
    %3971 = vmatpush1.msra.mxu0 0.0
    %3972 = vmatprep.subr.mxu0 0.0
    %3973 = vmatpush1.msra.mxu0 0.0
    %3974 = vmatprep.subr.mxu0 0.0
    %3975 = vmatpush1.msra.mxu0 0.0
    %3976 = vmatprep.subr.mxu0 0.0
    %3977 = vmatpush1.msra.mxu0 0.0
    %3978 = vmatprep.subr.mxu0 0.0
    %3979 = vmatpush1.msra.mxu0 0.0
    %3980 = vmatprep.subr.mxu0 0.0
    %3981 = vmatpush1.msra.mxu0 0.0
    %3982 = vmatprep.subr.mxu0 0.0
    %3983 = vmatpush1.msra.mxu0 0.0
    %3984 = vmatprep.subr.mxu0 0.0
    %3985 = vmatpush1.msra.mxu0 0.0
    %3986 = vmatprep.subr.mxu0 0.0
    %3987 = vmatpush1.msra.mxu0 0.0
    %3988 = vmatprep.subr.mxu0 0.0
    %3989 = vmatpush1.msra.mxu0 0.0
    %3990 = vmatprep.subr.mxu0 0.0
    %3991 = vmatpush1.msra.mxu0 0.0
    %3992 = vmatprep.subr.mxu0 0.0
    %3993 = vmatpush1.msra.mxu0 0.0
    %3994 = vmatprep.subr.mxu0 0.0
    %3995 = vmatpush1.msra.mxu0 0.0
    %3996 = vmatprep.subr.mxu0 0.0
    %3997 = vmatpush1.msra.mxu0 0.0
    %3998 = vmatprep.subr.mxu0 0.0
    %3999 = vmatpush1.msra.mxu0 0.0
    %4000 = vmatprep.subr.mxu0 0.0
    %4001 = vmatpush1.msra.mxu0 0.0
    %4002 = vmatprep.subr.mxu0 0.0
    %4003 = vmatpush1.msra.mxu0 0.0
    %4004 = vmatprep.subr.mxu0 0.0
    %4005 = vmatpush1.msra.mxu0 0.0
    %4006 = vmatprep.subr.mxu0 0.0
    %4007 = vmatpush1.msra.mxu0 0.0
    %4008 = vmatprep.subr.mxu0 0.0
    %4009 = vmatpush1.msra.mxu0 0.0
    %4010 = vmatprep.subr.mxu0 0.0
    %4011 = vmatpush1.msra.mxu0 0.0
    %4012 = vmatprep.subr.mxu0 0.0
    %4013 = vmatpush1.msra.mxu0 0.0
    %4014 = vmatprep.subr.mxu0 0.0
    %4015 = vmatpush1.msra.mxu0 0.0
    %4016 = vmatprep.subr.mxu0 0.0
    %4017 = vmatpush1.msra.mxu0 0.0
    %4018 = vmatprep.subr.mxu0 0.0
    %4019 = vmatpush1.msra.mxu0 0.0
    %4020 = vmatprep.mubr.f32.mxu0 0.0
    %4021 = vmatmul.mubr.f32.gmra.mrb[0].mxu0 %v3954
    %v4022 = vpop.f32.mrb[0].mxu0
    %v4023 = vadd.f32 %v3949, %v4022
    %v4024 = vpop.f32.mrb[0].mxu0
    %v4025 = vadd.f32 %v3951, %v4024
    %4026 = vdwg.mxu0
    %v4027 = vadd.f32 %v4023, %v2069
    %v4028 = vadd.f32 %v4025, %v2069
    %v4029 = vadd.f32 %v2071, %v2072
    %v4030 = vadd.f32 %v4029, %v4027
    %v4031 = vadd.f32 %v4030, %v4028
    %4032 = vadd.xlane.f32.xlu0 %v4031
    %v4033 = vpop.xlane.xlu0 %4032
    %v4034 = vrcp.pop 512.0
    %v4035 = vmul.f32 %v4033, %v4034
    %v4036 = vmul.f32 %v2071, %v2071
    %v4037 = vmul.f32 %v2072, %v2072
    %v4038 = vmul.f32 %v4027, %v4027
    %v4039 = vmul.f32 %v4028, %v4028
    %v4040 = vadd.f32 %v4036, %v4037
    %v4041 = vadd.f32 %v4040, %v4038
    %v4042 = vadd.f32 %v4041, %v4039
    %4043 = vadd.xlane.f32.xlu0 %v4042
    %v4044 = vpop.xlane.xlu0 %4043
    %v4045 = vmul.f32 %v4044, %v4034
    %v4046 = vmul.f32 %v4035, %v4035
    %v4047 = vsub.f32 %v4045, %v4046
    %v4048 = vsub.f32 %v2071, %v4035
    %v4049 = vsub.f32 %v2072, %v4035
    %v4050 = vsub.f32 %v4027, %v4035
    %v4051 = vsub.f32 %v4028, %v4035
    %v4052 = vadd.f32 %v4047, 1e-05
    %v4053 = vrsqrt.pop %v4052
    %v4054 = vmul.f32 %v4048, %v4053
    %v4055 = vmul.f32 %v4049, %v4053
    %v4056 = vmul.f32 %v4050, %v4053
    %v4057 = vmul.f32 %v4051, %v4053
    %4058 = vset.pattern.permute.xlu0 1
    %4059 = vperm.xlu0 %4058, %v52
    %v4060 = vpop.permute.xlu0 %4059
    %v4062 = vmul.f32 %v4054, %v4060
    %v4063 = vmul.f32 %v4055, %v4060
    %v4064 = vmul.f32 %v4056, %v4060
    %v4065 = vmul.f32 %v4057, %v4060
    %4066 = vset.pattern.permute.xlu0 2
    %4067 = vperm.xlu0 %4066, %v52
    %v4068 = vpop.permute.xlu0 %4067
    %v4070 = vadd.f32 %v4062, %v4068
    %v4071 = vadd.f32 %v4063, %v4068
    %v4072 = vadd.f32 %v4064, %v4068
    %v4073 = vadd.f32 %v4065, %v4068
    %v4074 = vmax.f32 %v4070, 0.0
    %v4075 = vmax.f32 %v4071, 0.0
    %v4076 = vmax.f32 %v4072, 0.0
    %v4077 = vmax.f32 %v4073, 0.0
    %4078 = vst [vmem:[#allocation7] sm:$0xff] %v4074
    %4079 = vst [vmem:[#allocation7 + $0x8] sm:$0xff] %v4075
    %4080 = vst [vmem:[#allocation7 + $0x10] sm:$0xff] %v4076
    %4081 = vst [vmem:[#allocation7 + $0x18] sm:$0xff] %v4077
    // Predicated region
    $region34: #{tpu_custom_call.1} parent=1 // pred_check
      _
    $region35: #{tpu_custom_call.1} parent=1 // pred_check_branch
      %4083 = sbr.rel (0) target = $region37
    $region36: #{tpu_custom_call.1} parent=1 // pred_region
      %s4085 = ssub.s32 512, 512
      %4086 = vsyncadd [#allocation4], %s4085
      %s4087 = sshll.u32 [#allocation7], 4
      %s4088 = int_to_ptr.vmem [resolvable:$true] %s4087
      %4093 = dma.vmem_to_hbm [thread:$0]  %s4088, 512, %s6, [#allocation4], 256, 256, 16
    $region37: #{tpu_custom_call.1} parent=1 // pred_fallthru
      _
    // Predicated region
    $region38: #{tpu_custom_call.1} parent=1 // pred_check
      _
    $region39: #{tpu_custom_call.1} parent=1 // pred_check_branch
      %4095 = sbr.rel (0) target = $region41
    $region40: #{tpu_custom_call.1} parent=1 // pred_region
      %4096 = dma.done [#allocation4], 512
    $region41: #{tpu_custom_call.1} parent=1 // pred_fallthru
      _
    %4097 = vsyncpa [#allocation3], 1
    %4098 = vsyncpa [#allocation6], 1
    %4099 = vsyncpa [#allocation4], 1

</llo_original>
